<compile_context>
chip_gen: v7x
topology: tpu7x:2x2x1
jax: 0.10.0
libtpu: 0.0.40
codegen_flags: <defaults>
</compile_context>

<pallas_src>
import functools

import jax
import jax.numpy as jnp
from jax import lax
from jax.experimental import pallas as pl
from jax.experimental.pallas import tpu as pltpu


def _sigmoid(z):
    # Single EUP op (tanh) instead of exp + reciprocal on the serial
    # x1 -> x2_pred -> x2_grad -> x1_grad dependency chain.
    return 0.5 * jnp.tanh(0.5 * z) + 0.5


def pcn_kernel(x_ref, w1_ref, b1_ref, w2l1_ref, neg_w2t_ref, b2_ref, l2_ref,
               x1_ref, x2_ref, out_ref, *, n_steps, lr_infer):
    x = x_ref[...]              # (B, In)
    w1 = w1_ref[...]            # (In, H)
    b1 = b1_ref[...]            # (1, H) -> broadcasts along batch
    w2l1 = w2l1_ref[...]        # (H, Np + H) = [W2p | L1], one fused MXU RHS
    neg_w2t = neg_w2t_ref[...]  # (Np, H) = -(W2p.T); padded rows are zero
    l2 = l2_ref[...]            # (Np, Np); padded rows/cols are zero

    batch = x.shape[0]
    pad_n = l2.shape[1]         # lane-padded output dim Np (multiple of 128)

    # --- loop-invariant hoists -------------------------------------------
    # x, W1, b1 never change inside the inference loop.
    x1_pred = _sigmoid(jnp.dot(x, w1, preferred_element_type=jnp.float32) + b1)
    # Pre-broadcast b2 once (JAX does not CSE broadcast_in_dim per iteration).
    b2b = jnp.broadcast_to(b2_ref[...], (batch, pad_n))

    def body(_, carry):
        x1, x2 = carry
        # One (B,H) x (H,Np+H) matmul covers both x1@W2 and x1@L1.
        fused = jnp.dot(x1, w2l1, preferred_element_type=jnp.float32)
        x2_pred = _sigmoid(fused[:, :pad_n] + b2b)
        x1_l1 = fused[:, pad_n:]                      # == x1 @ L1
        eps1 = x1 - x1_pred
        eps2 = x2 - x2_pred
        x2_grad = eps2 + jnp.dot(x2, l2, preferred_element_type=jnp.float32)
        # (eps1 - x2_grad @ W2.T + x1 @ L1), with the transpose pre-negated.
        x1_grad = (eps1
                   + jnp.dot(x2_grad, neg_w2t,
                             preferred_element_type=jnp.float32)
                   + x1_l1)
        return (x1 - lr_infer * x1_grad, x2 - lr_infer * x2_grad)

    # Fully unrolled: 20 tiny iterations, lets MXU/EUP/VPU work from adjacent
    # iterations interleave instead of paying per-trip loop latency.
    x1, x2 = lax.fori_loop(0, n_steps, body, (x1_ref[...], x2_ref[...]),
                           unroll=True)
    out_ref[...] = x2      # lane-dense (B, Np) store; wrapper slices real cols.


def prepare_pcn_params(W1, b1, W2, b2, L1, L2):
    """One-time weight prep (padding / transpose / concat), hoisted out of the
    per-call path.  Returns a tuple of arrays consumed by the jitted forward."""
    _, out_dim = W2.shape
    pad_n = max(128, ((out_dim + 127) // 128) * 128)
    pad = pad_n - out_dim
    W2p = jnp.pad(W2, ((0, 0), (0, pad))) if pad else W2
    b2p = (jnp.pad(b2, (0, pad)) if pad else b2).reshape(1, -1)
    L2p = jnp.pad(L2, ((0, pad), (0, pad))) if pad else L2
    # Padded columns of W2p / rows+cols of L2p are exactly zero -- required so
    # garbage in the padded x2 lanes never leaks into real outputs.
    W2L1 = jnp.concatenate([W2p, L1], axis=1)   # (H, Np + H): fused RHS
    negW2T = -W2p.T                              # (Np, H), pre-negated
    return (W1, b1.reshape(1, -1), W2L1, negW2T, b2p, L2p)


def make_pcn_forward(n_inference_steps=20, lr_infer=0.1):
    """Returns a jitted forward(x, x1_init, x2_init, *prepared_params)."""
    kernel = functools.partial(pcn_kernel, n_steps=n_inference_steps,
                               lr_infer=lr_infer)

    @jax.jit
    def forward(x, x1_init, x2_init, W1, b1_2d, W2L1, negW2T, b2_2d, L2p):
        batch, in_dim = x.shape
        hid = W1.shape[1]
        out_dim = x2_init.shape[1]
        pad_n = L2p.shape[1]
        pad = pad_n - out_dim
        x2p = jnp.pad(x2_init, ((0, 0), (0, pad))) if pad else x2_init

        n_iter = n_inference_steps
        matmul_flops = (2 * batch * in_dim * hid
                        + n_iter * (2 * batch * hid * (pad_n + hid)
                                    + 2 * batch * pad_n * pad_n
                                    + 2 * batch * pad_n * hid))
        transcendentals = batch * hid + n_iter * batch * pad_n
        bytes_accessed = 4 * (x.size + W1.size + b1_2d.size + W2L1.size
                              + negW2T.size + b2_2d.size + L2p.size
                              + x1_init.size + x2p.size + batch * pad_n)
        cost = pl.CostEstimate(flops=matmul_flops,
                               transcendentals=transcendentals,
                               bytes_accessed=bytes_accessed)

        vmem = pl.BlockSpec(memory_space=pltpu.MemorySpace.VMEM)
        out_padded = pl.pallas_call(
            kernel,
            out_shape=jax.ShapeDtypeStruct((batch, pad_n), jnp.float32),
            in_specs=[vmem] * 9,
            out_specs=vmem,
            cost_estimate=cost,
        )(x, W1, b1_2d, W2L1, negW2T, b2_2d, L2p, x1_init, x2p)
        return out_padded[:, :out_dim]

    return forward


def pcn_reference(x, W1, b1, W2, b2, L1, L2, x1_init, x2_init,
                  n_inference_steps=20, lr_infer=0.1):
    """Pure-JAX mirror of the PyTorch forward, for verification."""
    sigmoid = lambda z: 1.0 / (1.0 + jnp.exp(-z))
    x1, x2 = x1_init, x2_init
    for _ in range(n_inference_steps):
        x1_pred = sigmoid(x @ W1 + b1)
        x2_pred = sigmoid(x1 @ W2 + b2)
        eps1 = x1 - x1_pred
        eps2 = x2 - x2_pred
        x2_grad = eps2 + x2 @ L2
        x1_grad = eps1 - x2_grad @ W2.T + x1 @ L1
        x1 = x1 - lr_infer * x1_grad
        x2 = x2 - lr_infer * x2_grad
    return x2


if __name__ == "__main__":
    # Small, TPU-tile-friendly shapes consistent with the module's structure.
    batch = 8
    input_dim = 256
    hidden_dim = 128
    output_dim = 10

    key = jax.random.PRNGKey(0)
    k_w1, k_w2, k_l1, k_l2, k_x, k_x1, k_x2 = jax.random.split(key, 7)

    # Deterministic parameter init matching the PyTorch __init__ semantics
    # (randn * 0.1 for weights / lateral matrices, zeros for biases).
    W1 = jax.random.normal(k_w1, (input_dim, hidden_dim), jnp.float32) * 0.1
    W2 = jax.random.normal(k_w2, (hidden_dim, output_dim), jnp.float32) * 0.1
    L1 = jax.random.normal(k_l1, (hidden_dim, hidden_dim), jnp.float32) * 0.1
    L2 = jax.random.normal(k_l2, (output_dim, output_dim), jnp.float32) * 0.1
    b1 = jnp.zeros((hidden_dim,), jnp.float32)
    b2 = jnp.zeros((output_dim,), jnp.float32)

    # Example input and the (deterministic) latent-state init standing in for
    # the torch.randn(...) * 0.1 draw inside the PyTorch forward.
    # TODO(synk): the update_weights=True branch (in-place parameter update)
    # is a training-time side effect, not part of the returned value; only
    # the inference path is implemented.
    x = jax.random.normal(k_x, (batch, input_dim), jnp.float32)
    x1_init = jax.random.normal(k_x1, (batch, hidden_dim), jnp.float32) * 0.1
    x2_init = jax.random.normal(k_x2, (batch, output_dim), jnp.float32) * 0.1

    # One-time prep (padding / transpose / concat) outside the per-call path.
    prepped = prepare_pcn_params(W1, b1, W2, b2, L1, L2)
    pcn_forward = make_pcn_forward(n_inference_steps=20, lr_infer=0.1)

    out = pcn_forward(x, x1_init, x2_init, *prepped)
    out = jax.block_until_ready(out)

    ref = pcn_reference(x, W1, b1, W2, b2, L1, L2, x1_init, x2_init,
                        n_inference_steps=20, lr_infer=0.1)

    assert out.shape == (batch, output_dim)
    assert jnp.allclose(out, ref, atol=1e-4, rtol=1e-4), "mismatch vs reference"

    print("KERNEL_OK")
</pallas_src>

<mosaic_0001>
module attributes {stable_mosaic.version = 11 : i64} {
  func.func @pcn_kernel(%arg0: memref<8x256xf32, #tpu.memory_space<vmem>>, %arg1: memref<256x128xf32, #tpu.memory_space<vmem>>, %arg2: memref<1x128xf32, #tpu.memory_space<vmem>>, %arg3: memref<128x256xf32, #tpu.memory_space<vmem>>, %arg4: memref<128x128xf32, #tpu.memory_space<vmem>>, %arg5: memref<1x128xf32, #tpu.memory_space<vmem>>, %arg6: memref<128x128xf32, #tpu.memory_space<vmem>>, %arg7: memref<8x128xf32, #tpu.memory_space<vmem>>, %arg8: memref<8x128xf32, #tpu.memory_space<vmem>>, %arg9: memref<8x128xf32, #tpu.memory_space<vmem>>) attributes {dimension_semantics = [], scalar_prefetch = 0 : i64, scratch_operands = 0 : i64, tpu.core_type = #tpu.core_type<tc>} {
    %c0 = arith.constant 0 : index
    %c0_0 = arith.constant 0 : index
    %0 = vector.load %arg0[%c0, %c0_0] : memref<8x256xf32, #tpu.memory_space<vmem>>, vector<8x256xf32>
    %c0_1 = arith.constant 0 : index
    %c0_2 = arith.constant 0 : index
    %1 = vector.load %arg1[%c0_1, %c0_2] : memref<256x128xf32, #tpu.memory_space<vmem>>, vector<256x128xf32>
    %c0_3 = arith.constant 0 : index
    %c0_4 = arith.constant 0 : index
    %2 = vector.load %arg2[%c0_3, %c0_4] : memref<1x128xf32, #tpu.memory_space<vmem>>, vector<1x128xf32>
    %c0_5 = arith.constant 0 : index
    %c0_6 = arith.constant 0 : index
    %3 = vector.load %arg3[%c0_5, %c0_6] : memref<128x256xf32, #tpu.memory_space<vmem>>, vector<128x256xf32>
    %c0_7 = arith.constant 0 : index
    %c0_8 = arith.constant 0 : index
    %4 = vector.load %arg4[%c0_7, %c0_8] : memref<128x128xf32, #tpu.memory_space<vmem>>, vector<128x128xf32>
    %c0_9 = arith.constant 0 : index
    %c0_10 = arith.constant 0 : index
    %5 = vector.load %arg6[%c0_9, %c0_10] : memref<128x128xf32, #tpu.memory_space<vmem>>, vector<128x128xf32>
    %cst = arith.constant dense<0.000000e+00> : vector<8x128xf32>
    %6 = tpu.matmul %0, %1, %cst {dimension_numbers = #tpu.dot_dimension_numbers<[1], [0], [0], [1], [0, 0, 1, 1], [], []>} : vector<8x256xf32>, vector<256x128xf32>, vector<8x128xf32> -> vector<8x128xf32>
    %7 = vector.broadcast %2 : vector<1x128xf32> to vector<8x128xf32>
    %8 = arith.addf %6, %7 : vector<8x128xf32>
    %cst_11 = arith.constant 5.000000e-01 : f32
    %9 = vector.broadcast %cst_11 : f32 to vector<8x128xf32>
    %10 = arith.mulf %9, %8 : vector<8x128xf32>
    %11 = math.tanh %10 : vector<8x128xf32>
    %cst_12 = arith.constant 5.000000e-01 : f32
    %12 = vector.broadcast %cst_12 : f32 to vector<8x128xf32>
    %13 = arith.mulf %12, %11 : vector<8x128xf32>
    %cst_13 = arith.constant 5.000000e-01 : f32
    %14 = vector.broadcast %cst_13 : f32 to vector<8x128xf32>
    %15 = arith.addf %13, %14 : vector<8x128xf32>
    %c0_14 = arith.constant 0 : index
    %c0_15 = arith.constant 0 : index
    %16 = vector.load %arg5[%c0_14, %c0_15] : memref<1x128xf32, #tpu.memory_space<vmem>>, vector<1x128xf32>
    %17 = vector.shape_cast %16 : vector<1x128xf32> to vector<1x128xf32>
    %18 = vector.broadcast %17 : vector<1x128xf32> to vector<8x128xf32>
    %c0_16 = arith.constant 0 : index
    %c0_17 = arith.constant 0 : index
    %19 = vector.load %arg7[%c0_16, %c0_17] : memref<8x128xf32, #tpu.memory_space<vmem>>, vector<8x128xf32>
    %c0_18 = arith.constant 0 : index
    %c0_19 = arith.constant 0 : index
    %20 = vector.load %arg8[%c0_18, %c0_19] : memref<8x128xf32, #tpu.memory_space<vmem>>, vector<8x128xf32>
    %c0_i32 = arith.constant 0 : i32
    %cst_20 = arith.constant dense<0.000000e+00> : vector<8x256xf32>
    %21 = tpu.matmul %19, %3, %cst_20 {dimension_numbers = #tpu.dot_dimension_numbers<[1], [0], [0], [1], [0, 0, 1, 1], [], []>} : vector<8x128xf32>, vector<128x256xf32>, vector<8x256xf32> -> vector<8x256xf32>
    %22 = vector.extract_strided_slice %21 {offsets = [0, 0], sizes = [8, 128], strides = [1, 1]} : vector<8x256xf32> to vector<8x128xf32>
    %23 = arith.addf %22, %18 : vector<8x128xf32>
    %cst_21 = arith.constant 5.000000e-01 : f32
    %24 = vector.broadcast %cst_21 : f32 to vector<8x128xf32>
    %25 = arith.mulf %24, %23 : vector<8x128xf32>
    %26 = math.tanh %25 : vector<8x128xf32>
    %cst_22 = arith.constant 5.000000e-01 : f32
    %27 = vector.broadcast %cst_22 : f32 to vector<8x128xf32>
    %28 = arith.mulf %27, %26 : vector<8x128xf32>
    %cst_23 = arith.constant 5.000000e-01 : f32
    %29 = vector.broadcast %cst_23 : f32 to vector<8x128xf32>
    %30 = arith.addf %28, %29 : vector<8x128xf32>
    %31 = vector.extract_strided_slice %21 {offsets = [0, 128], sizes = [8, 128], strides = [1, 1]} : vector<8x256xf32> to vector<8x128xf32>
    %32 = arith.subf %19, %15 : vector<8x128xf32>
    %33 = arith.subf %20, %30 : vector<8x128xf32>
    %cst_24 = arith.constant dense<0.000000e+00> : vector<8x128xf32>
    %34 = tpu.matmul %20, %5, %cst_24 {dimension_numbers = #tpu.dot_dimension_numbers<[1], [0], [0], [1], [0, 0, 1, 1], [], []>} : vector<8x128xf32>, vector<128x128xf32>, vector<8x128xf32> -> vector<8x128xf32>
    %35 = arith.addf %33, %34 : vector<8x128xf32>
    %cst_25 = arith.constant dense<0.000000e+00> : vector<8x128xf32>
    %36 = tpu.matmul %35, %4, %cst_25 {dimension_numbers = #tpu.dot_dimension_numbers<[1], [0], [0], [1], [0, 0, 1, 1], [], []>} : vector<8x128xf32>, vector<128x128xf32>, vector<8x128xf32> -> vector<8x128xf32>
    %37 = arith.addf %32, %36 : vector<8x128xf32>
    %38 = arith.addf %37, %31 : vector<8x128xf32>
    %cst_26 = arith.constant 1.000000e-01 : f32
    %39 = vector.broadcast %cst_26 : f32 to vector<8x128xf32>
    %40 = arith.mulf %39, %38 : vector<8x128xf32>
    %41 = arith.subf %19, %40 : vector<8x128xf32>
    %cst_27 = arith.constant 1.000000e-01 : f32
    %42 = vector.broadcast %cst_27 : f32 to vector<8x128xf32>
    %43 = arith.mulf %42, %35 : vector<8x128xf32>
    %44 = arith.subf %20, %43 : vector<8x128xf32>
    %c1_i32 = arith.constant 1 : i32
    %cst_28 = arith.constant dense<0.000000e+00> : vector<8x256xf32>
    %45 = tpu.matmul %41, %3, %cst_28 {dimension_numbers = #tpu.dot_dimension_numbers<[1], [0], [0], [1], [0, 0, 1, 1], [], []>} : vector<8x128xf32>, vector<128x256xf32>, vector<8x256xf32> -> vector<8x256xf32>
    %46 = vector.extract_strided_slice %45 {offsets = [0, 0], sizes = [8, 128], strides = [1, 1]} : vector<8x256xf32> to vector<8x128xf32>
    %47 = arith.addf %46, %18 : vector<8x128xf32>
    %cst_29 = arith.constant 5.000000e-01 : f32
    %48 = vector.broadcast %cst_29 : f32 to vector<8x128xf32>
    %49 = arith.mulf %48, %47 : vector<8x128xf32>
    %50 = math.tanh %49 : vector<8x128xf32>
    %cst_30 = arith.constant 5.000000e-01 : f32
    %51 = vector.broadcast %cst_30 : f32 to vector<8x128xf32>
    %52 = arith.mulf %51, %50 : vector<8x128xf32>
    %cst_31 = arith.constant 5.000000e-01 : f32
    %53 = vector.broadcast %cst_31 : f32 to vector<8x128xf32>
    %54 = arith.addf %52, %53 : vector<8x128xf32>
    %55 = vector.extract_strided_slice %45 {offsets = [0, 128], sizes = [8, 128], strides = [1, 1]} : vector<8x256xf32> to vector<8x128xf32>
    %56 = arith.subf %41, %15 : vector<8x128xf32>
    %57 = arith.subf %44, %54 : vector<8x128xf32>
    %cst_32 = arith.constant dense<0.000000e+00> : vector<8x128xf32>
    %58 = tpu.matmul %44, %5, %cst_32 {dimension_numbers = #tpu.dot_dimension_numbers<[1], [0], [0], [1], [0, 0, 1, 1], [], []>} : vector<8x128xf32>, vector<128x128xf32>, vector<8x128xf32> -> vector<8x128xf32>
    %59 = arith.addf %57, %58 : vector<8x128xf32>
    %cst_33 = arith.constant dense<0.000000e+00> : vector<8x128xf32>
    %60 = tpu.matmul %59, %4, %cst_33 {dimension_numbers = #tpu.dot_dimension_numbers<[1], [0], [0], [1], [0, 0, 1, 1], [], []>} : vector<8x128xf32>, vector<128x128xf32>, vector<8x128xf32> -> vector<8x128xf32>
    %61 = arith.addf %56, %60 : vector<8x128xf32>
    %62 = arith.addf %61, %55 : vector<8x128xf32>
    %cst_34 = arith.constant 1.000000e-01 : f32
    %63 = vector.broadcast %cst_34 : f32 to vector<8x128xf32>
    %64 = arith.mulf %63, %62 : vector<8x128xf32>
    %65 = arith.subf %41, %64 : vector<8x128xf32>
    %cst_35 = arith.constant 1.000000e-01 : f32
    %66 = vector.broadcast %cst_35 : f32 to vector<8x128xf32>
    %67 = arith.mulf %66, %59 : vector<8x128xf32>
    %68 = arith.subf %44, %67 : vector<8x128xf32>
    %c2_i32 = arith.constant 2 : i32
    %cst_36 = arith.constant dense<0.000000e+00> : vector<8x256xf32>
    %69 = tpu.matmul %65, %3, %cst_36 {dimension_numbers = #tpu.dot_dimension_numbers<[1], [0], [0], [1], [0, 0, 1, 1], [], []>} : vector<8x128xf32>, vector<128x256xf32>, vector<8x256xf32> -> vector<8x256xf32>
    %70 = vector.extract_strided_slice %69 {offsets = [0, 0], sizes = [8, 128], strides = [1, 1]} : vector<8x256xf32> to vector<8x128xf32>
    %71 = arith.addf %70, %18 : vector<8x128xf32>
    %cst_37 = arith.constant 5.000000e-01 : f32
    %72 = vector.broadcast %cst_37 : f32 to vector<8x128xf32>
    %73 = arith.mulf %72, %71 : vector<8x128xf32>
    %74 = math.tanh %73 : vector<8x128xf32>
    %cst_38 = arith.constant 5.000000e-01 : f32
    %75 = vector.broadcast %cst_38 : f32 to vector<8x128xf32>
    %76 = arith.mulf %75, %74 : vector<8x128xf32>
    %cst_39 = arith.constant 5.000000e-01 : f32
    %77 = vector.broadcast %cst_39 : f32 to vector<8x128xf32>
    %78 = arith.addf %76, %77 : vector<8x128xf32>
    %79 = vector.extract_strided_slice %69 {offsets = [0, 128], sizes = [8, 128], strides = [1, 1]} : vector<8x256xf32> to vector<8x128xf32>
    %80 = arith.subf %65, %15 : vector<8x128xf32>
    %81 = arith.subf %68, %78 : vector<8x128xf32>
    %cst_40 = arith.constant dense<0.000000e+00> : vector<8x128xf32>
    %82 = tpu.matmul %68, %5, %cst_40 {dimension_numbers = #tpu.dot_dimension_numbers<[1], [0], [0], [1], [0, 0, 1, 1], [], []>} : vector<8x128xf32>, vector<128x128xf32>, vector<8x128xf32> -> vector<8x128xf32>
    %83 = arith.addf %81, %82 : vector<8x128xf32>
    %cst_41 = arith.constant dense<0.000000e+00> : vector<8x128xf32>
    %84 = tpu.matmul %83, %4, %cst_41 {dimension_numbers = #tpu.dot_dimension_numbers<[1], [0], [0], [1], [0, 0, 1, 1], [], []>} : vector<8x128xf32>, vector<128x128xf32>, vector<8x128xf32> -> vector<8x128xf32>
    %85 = arith.addf %80, %84 : vector<8x128xf32>
    %86 = arith.addf %85, %79 : vector<8x128xf32>
    %cst_42 = arith.constant 1.000000e-01 : f32
    %87 = vector.broadcast %cst_42 : f32 to vector<8x128xf32>
    %88 = arith.mulf %87, %86 : vector<8x128xf32>
    %89 = arith.subf %65, %88 : vector<8x128xf32>
    %cst_43 = arith.constant 1.000000e-01 : f32
    %90 = vector.broadcast %cst_43 : f32 to vector<8x128xf32>
    %91 = arith.mulf %90, %83 : vector<8x128xf32>
    %92 = arith.subf %68, %91 : vector<8x128xf32>
    %c3_i32 = arith.constant 3 : i32
    %cst_44 = arith.constant dense<0.000000e+00> : vector<8x256xf32>
    %93 = tpu.matmul %89, %3, %cst_44 {dimension_numbers = #tpu.dot_dimension_numbers<[1], [0], [0], [1], [0, 0, 1, 1], [], []>} : vector<8x128xf32>, vector<128x256xf32>, vector<8x256xf32> -> vector<8x256xf32>
    %94 = vector.extract_strided_slice %93 {offsets = [0, 0], sizes = [8, 128], strides = [1, 1]} : vector<8x256xf32> to vector<8x128xf32>
    %95 = arith.addf %94, %18 : vector<8x128xf32>
    %cst_45 = arith.constant 5.000000e-01 : f32
    %96 = vector.broadcast %cst_45 : f32 to vector<8x128xf32>
    %97 = arith.mulf %96, %95 : vector<8x128xf32>
    %98 = math.tanh %97 : vector<8x128xf32>
    %cst_46 = arith.constant 5.000000e-01 : f32
    %99 = vector.broadcast %cst_46 : f32 to vector<8x128xf32>
    %100 = arith.mulf %99, %98 : vector<8x128xf32>
    %cst_47 = arith.constant 5.000000e-01 : f32
    %101 = vector.broadcast %cst_47 : f32 to vector<8x128xf32>
    %102 = arith.addf %100, %101 : vector<8x128xf32>
    %103 = vector.extract_strided_slice %93 {offsets = [0, 128], sizes = [8, 128], strides = [1, 1]} : vector<8x256xf32> to vector<8x128xf32>
    %104 = arith.subf %89, %15 : vector<8x128xf32>
    %105 = arith.subf %92, %102 : vector<8x128xf32>
    %cst_48 = arith.constant dense<0.000000e+00> : vector<8x128xf32>
    %106 = tpu.matmul %92, %5, %cst_48 {dimension_numbers = #tpu.dot_dimension_numbers<[1], [0], [0], [1], [0, 0, 1, 1], [], []>} : vector<8x128xf32>, vector<128x128xf32>, vector<8x128xf32> -> vector<8x128xf32>
    %107 = arith.addf %105, %106 : vector<8x128xf32>
    %cst_49 = arith.constant dense<0.000000e+00> : vector<8x128xf32>
    %108 = tpu.matmul %107, %4, %cst_49 {dimension_numbers = #tpu.dot_dimension_numbers<[1], [0], [0], [1], [0, 0, 1, 1], [], []>} : vector<8x128xf32>, vector<128x128xf32>, vector<8x128xf32> -> vector<8x128xf32>
    %109 = arith.addf %104, %108 : vector<8x128xf32>
    %110 = arith.addf %109, %103 : vector<8x128xf32>
    %cst_50 = arith.constant 1.000000e-01 : f32
    %111 = vector.broadcast %cst_50 : f32 to vector<8x128xf32>
    %112 = arith.mulf %111, %110 : vector<8x128xf32>
    %113 = arith.subf %89, %112 : vector<8x128xf32>
    %cst_51 = arith.constant 1.000000e-01 : f32
    %114 = vector.broadcast %cst_51 : f32 to vector<8x128xf32>
    %115 = arith.mulf %114, %107 : vector<8x128xf32>
    %116 = arith.subf %92, %115 : vector<8x128xf32>
    %c4_i32 = arith.constant 4 : i32
    %cst_52 = arith.constant dense<0.000000e+00> : vector<8x256xf32>
    %117 = tpu.matmul %113, %3, %cst_52 {dimension_numbers = #tpu.dot_dimension_numbers<[1], [0], [0], [1], [0, 0, 1, 1], [], []>} : vector<8x128xf32>, vector<128x256xf32>, vector<8x256xf32> -> vector<8x256xf32>
    %118 = vector.extract_strided_slice %117 {offsets = [0, 0], sizes = [8, 128], strides = [1, 1]} : vector<8x256xf32> to vector<8x128xf32>
    %119 = arith.addf %118, %18 : vector<8x128xf32>
    %cst_53 = arith.constant 5.000000e-01 : f32
    %120 = vector.broadcast %cst_53 : f32 to vector<8x128xf32>
    %121 = arith.mulf %120, %119 : vector<8x128xf32>
    %122 = math.tanh %121 : vector<8x128xf32>
    %cst_54 = arith.constant 5.000000e-01 : f32
    %123 = vector.broadcast %cst_54 : f32 to vector<8x128xf32>
    %124 = arith.mulf %123, %122 : vector<8x128xf32>
    %cst_55 = arith.constant 5.000000e-01 : f32
    %125 = vector.broadcast %cst_55 : f32 to vector<8x128xf32>
    %126 = arith.addf %124, %125 : vector<8x128xf32>
    %127 = vector.extract_strided_slice %117 {offsets = [0, 128], sizes = [8, 128], strides = [1, 1]} : vector<8x256xf32> to vector<8x128xf32>
    %128 = arith.subf %113, %15 : vector<8x128xf32>
    %129 = arith.subf %116, %126 : vector<8x128xf32>
    %cst_56 = arith.constant dense<0.000000e+00> : vector<8x128xf32>
    %130 = tpu.matmul %116, %5, %cst_56 {dimension_numbers = #tpu.dot_dimension_numbers<[1], [0], [0], [1], [0, 0, 1, 1], [], []>} : vector<8x128xf32>, vector<128x128xf32>, vector<8x128xf32> -> vector<8x128xf32>
    %131 = arith.addf %129, %130 : vector<8x128xf32>
    %cst_57 = arith.constant dense<0.000000e+00> : vector<8x128xf32>
    %132 = tpu.matmul %131, %4, %cst_57 {dimension_numbers = #tpu.dot_dimension_numbers<[1], [0], [0], [1], [0, 0, 1, 1], [], []>} : vector<8x128xf32>, vector<128x128xf32>, vector<8x128xf32> -> vector<8x128xf32>
    %133 = arith.addf %128, %132 : vector<8x128xf32>
    %134 = arith.addf %133, %127 : vector<8x128xf32>
    %cst_58 = arith.constant 1.000000e-01 : f32
    %135 = vector.broadcast %cst_58 : f32 to vector<8x128xf32>
    %136 = arith.mulf %135, %134 : vector<8x128xf32>
    %137 = arith.subf %113, %136 : vector<8x128xf32>
    %cst_59 = arith.constant 1.000000e-01 : f32
    %138 = vector.broadcast %cst_59 : f32 to vector<8x128xf32>
    %139 = arith.mulf %138, %131 : vector<8x128xf32>
    %140 = arith.subf %116, %139 : vector<8x128xf32>
    %c5_i32 = arith.constant 5 : i32
    %cst_60 = arith.constant dense<0.000000e+00> : vector<8x256xf32>
    %141 = tpu.matmul %137, %3, %cst_60 {dimension_numbers = #tpu.dot_dimension_numbers<[1], [0], [0], [1], [0, 0, 1, 1], [], []>} : vector<8x128xf32>, vector<128x256xf32>, vector<8x256xf32> -> vector<8x256xf32>
    %142 = vector.extract_strided_slice %141 {offsets = [0, 0], sizes = [8, 128], strides = [1, 1]} : vector<8x256xf32> to vector<8x128xf32>
    %143 = arith.addf %142, %18 : vector<8x128xf32>
    %cst_61 = arith.constant 5.000000e-01 : f32
    %144 = vector.broadcast %cst_61 : f32 to vector<8x128xf32>
    %145 = arith.mulf %144, %143 : vector<8x128xf32>
    %146 = math.tanh %145 : vector<8x128xf32>
    %cst_62 = arith.constant 5.000000e-01 : f32
    %147 = vector.broadcast %cst_62 : f32 to vector<8x128xf32>
    %148 = arith.mulf %147, %146 : vector<8x128xf32>
    %cst_63 = arith.constant 5.000000e-01 : f32
    %149 = vector.broadcast %cst_63 : f32 to vector<8x128xf32>
    %150 = arith.addf %148, %149 : vector<8x128xf32>
    %151 = vector.extract_strided_slice %141 {offsets = [0, 128], sizes = [8, 128], strides = [1, 1]} : vector<8x256xf32> to vector<8x128xf32>
    %152 = arith.subf %137, %15 : vector<8x128xf32>
    %153 = arith.subf %140, %150 : vector<8x128xf32>
    %cst_64 = arith.constant dense<0.000000e+00> : vector<8x128xf32>
    %154 = tpu.matmul %140, %5, %cst_64 {dimension_numbers = #tpu.dot_dimension_numbers<[1], [0], [0], [1], [0, 0, 1, 1], [], []>} : vector<8x128xf32>, vector<128x128xf32>, vector<8x128xf32> -> vector<8x128xf32>
    %155 = arith.addf %153, %154 : vector<8x128xf32>
    %cst_65 = arith.constant dense<0.000000e+00> : vector<8x128xf32>
    %156 = tpu.matmul %155, %4, %cst_65 {dimension_numbers = #tpu.dot_dimension_numbers<[1], [0], [0], [1], [0, 0, 1, 1], [], []>} : vector<8x128xf32>, vector<128x128xf32>, vector<8x128xf32> -> vector<8x128xf32>
    %157 = arith.addf %152, %156 : vector<8x128xf32>
    %158 = arith.addf %157, %151 : vector<8x128xf32>
    %cst_66 = arith.constant 1.000000e-01 : f32
    %159 = vector.broadcast %cst_66 : f32 to vector<8x128xf32>
    %160 = arith.mulf %159, %158 : vector<8x128xf32>
    %161 = arith.subf %137, %160 : vector<8x128xf32>
    %cst_67 = arith.constant 1.000000e-01 : f32
    %162 = vector.broadcast %cst_67 : f32 to vector<8x128xf32>
    %163 = arith.mulf %162, %155 : vector<8x128xf32>
    %164 = arith.subf %140, %163 : vector<8x128xf32>
    %c6_i32 = arith.constant 6 : i32
    %cst_68 = arith.constant dense<0.000000e+00> : vector<8x256xf32>
    %165 = tpu.matmul %161, %3, %cst_68 {dimension_numbers = #tpu.dot_dimension_numbers<[1], [0], [0], [1], [0, 0, 1, 1], [], []>} : vector<8x128xf32>, vector<128x256xf32>, vector<8x256xf32> -> vector<8x256xf32>
    %166 = vector.extract_strided_slice %165 {offsets = [0, 0], sizes = [8, 128], strides = [1, 1]} : vector<8x256xf32> to vector<8x128xf32>
    %167 = arith.addf %166, %18 : vector<8x128xf32>
    %cst_69 = arith.constant 5.000000e-01 : f32
    %168 = vector.broadcast %cst_69 : f32 to vector<8x128xf32>
    %169 = arith.mulf %168, %167 : vector<8x128xf32>
    %170 = math.tanh %169 : vector<8x128xf32>
    %cst_70 = arith.constant 5.000000e-01 : f32
    %171 = vector.broadcast %cst_70 : f32 to vector<8x128xf32>
    %172 = arith.mulf %171, %170 : vector<8x128xf32>
    %cst_71 = arith.constant 5.000000e-01 : f32
    %173 = vector.broadcast %cst_71 : f32 to vector<8x128xf32>
    %174 = arith.addf %172, %173 : vector<8x128xf32>
    %175 = vector.extract_strided_slice %165 {offsets = [0, 128], sizes = [8, 128], strides = [1, 1]} : vector<8x256xf32> to vector<8x128xf32>
    %176 = arith.subf %161, %15 : vector<8x128xf32>
    %177 = arith.subf %164, %174 : vector<8x128xf32>
    %cst_72 = arith.constant dense<0.000000e+00> : vector<8x128xf32>
    %178 = tpu.matmul %164, %5, %cst_72 {dimension_numbers = #tpu.dot_dimension_numbers<[1], [0], [0], [1], [0, 0, 1, 1], [], []>} : vector<8x128xf32>, vector<128x128xf32>, vector<8x128xf32> -> vector<8x128xf32>
    %179 = arith.addf %177, %178 : vector<8x128xf32>
    %cst_73 = arith.constant dense<0.000000e+00> : vector<8x128xf32>
    %180 = tpu.matmul %179, %4, %cst_73 {dimension_numbers = #tpu.dot_dimension_numbers<[1], [0], [0], [1], [0, 0, 1, 1], [], []>} : vector<8x128xf32>, vector<128x128xf32>, vector<8x128xf32> -> vector<8x128xf32>
    %181 = arith.addf %176, %180 : vector<8x128xf32>
    %182 = arith.addf %181, %175 : vector<8x128xf32>
    %cst_74 = arith.constant 1.000000e-01 : f32
    %183 = vector.broadcast %cst_74 : f32 to vector<8x128xf32>
    %184 = arith.mulf %183, %182 : vector<8x128xf32>
    %185 = arith.subf %161, %184 : vector<8x128xf32>
    %cst_75 = arith.constant 1.000000e-01 : f32
    %186 = vector.broadcast %cst_75 : f32 to vector<8x128xf32>
    %187 = arith.mulf %186, %179 : vector<8x128xf32>
    %188 = arith.subf %164, %187 : vector<8x128xf32>
    %c7_i32 = arith.constant 7 : i32
    %cst_76 = arith.constant dense<0.000000e+00> : vector<8x256xf32>
    %189 = tpu.matmul %185, %3, %cst_76 {dimension_numbers = #tpu.dot_dimension_numbers<[1], [0], [0], [1], [0, 0, 1, 1], [], []>} : vector<8x128xf32>, vector<128x256xf32>, vector<8x256xf32> -> vector<8x256xf32>
    %190 = vector.extract_strided_slice %189 {offsets = [0, 0], sizes = [8, 128], strides = [1, 1]} : vector<8x256xf32> to vector<8x128xf32>
    %191 = arith.addf %190, %18 : vector<8x128xf32>
    %cst_77 = arith.constant 5.000000e-01 : f32
    %192 = vector.broadcast %cst_77 : f32 to vector<8x128xf32>
    %193 = arith.mulf %192, %191 : vector<8x128xf32>
    %194 = math.tanh %193 : vector<8x128xf32>
    %cst_78 = arith.constant 5.000000e-01 : f32
    %195 = vector.broadcast %cst_78 : f32 to vector<8x128xf32>
    %196 = arith.mulf %195, %194 : vector<8x128xf32>
    %cst_79 = arith.constant 5.000000e-01 : f32
    %197 = vector.broadcast %cst_79 : f32 to vector<8x128xf32>
    %198 = arith.addf %196, %197 : vector<8x128xf32>
    %199 = vector.extract_strided_slice %189 {offsets = [0, 128], sizes = [8, 128], strides = [1, 1]} : vector<8x256xf32> to vector<8x128xf32>
    %200 = arith.subf %185, %15 : vector<8x128xf32>
    %201 = arith.subf %188, %198 : vector<8x128xf32>
    %cst_80 = arith.constant dense<0.000000e+00> : vector<8x128xf32>
    %202 = tpu.matmul %188, %5, %cst_80 {dimension_numbers = #tpu.dot_dimension_numbers<[1], [0], [0], [1], [0, 0, 1, 1], [], []>} : vector<8x128xf32>, vector<128x128xf32>, vector<8x128xf32> -> vector<8x128xf32>
    %203 = arith.addf %201, %202 : vector<8x128xf32>
    %cst_81 = arith.constant dense<0.000000e+00> : vector<8x128xf32>
    %204 = tpu.matmul %203, %4, %cst_81 {dimension_numbers = #tpu.dot_dimension_numbers<[1], [0], [0], [1], [0, 0, 1, 1], [], []>} : vector<8x128xf32>, vector<128x128xf32>, vector<8x128xf32> -> vector<8x128xf32>
    %205 = arith.addf %200, %204 : vector<8x128xf32>
    %206 = arith.addf %205, %199 : vector<8x128xf32>
    %cst_82 = arith.constant 1.000000e-01 : f32
    %207 = vector.broadcast %cst_82 : f32 to vector<8x128xf32>
    %208 = arith.mulf %207, %206 : vector<8x128xf32>
    %209 = arith.subf %185, %208 : vector<8x128xf32>
    %cst_83 = arith.constant 1.000000e-01 : f32
    %210 = vector.broadcast %cst_83 : f32 to vector<8x128xf32>
    %211 = arith.mulf %210, %203 : vector<8x128xf32>
    %212 = arith.subf %188, %211 : vector<8x128xf32>
    %c8_i32 = arith.constant 8 : i32
    %cst_84 = arith.constant dense<0.000000e+00> : vector<8x256xf32>
    %213 = tpu.matmul %209, %3, %cst_84 {dimension_numbers = #tpu.dot_dimension_numbers<[1], [0], [0], [1], [0, 0, 1, 1], [], []>} : vector<8x128xf32>, vector<128x256xf32>, vector<8x256xf32> -> vector<8x256xf32>
    %214 = vector.extract_strided_slice %213 {offsets = [0, 0], sizes = [8, 128], strides = [1, 1]} : vector<8x256xf32> to vector<8x128xf32>
    %215 = arith.addf %214, %18 : vector<8x128xf32>
    %cst_85 = arith.constant 5.000000e-01 : f32
    %216 = vector.broadcast %cst_85 : f32 to vector<8x128xf32>
    %217 = arith.mulf %216, %215 : vector<8x128xf32>
    %218 = math.tanh %217 : vector<8x128xf32>
    %cst_86 = arith.constant 5.000000e-01 : f32
    %219 = vector.broadcast %cst_86 : f32 to vector<8x128xf32>
    %220 = arith.mulf %219, %218 : vector<8x128xf32>
    %cst_87 = arith.constant 5.000000e-01 : f32
    %221 = vector.broadcast %cst_87 : f32 to vector<8x128xf32>
    %222 = arith.addf %220, %221 : vector<8x128xf32>
    %223 = vector.extract_strided_slice %213 {offsets = [0, 128], sizes = [8, 128], strides = [1, 1]} : vector<8x256xf32> to vector<8x128xf32>
    %224 = arith.subf %209, %15 : vector<8x128xf32>
    %225 = arith.subf %212, %222 : vector<8x128xf32>
    %cst_88 = arith.constant dense<0.000000e+00> : vector<8x128xf32>
    %226 = tpu.matmul %212, %5, %cst_88 {dimension_numbers = #tpu.dot_dimension_numbers<[1], [0], [0], [1], [0, 0, 1, 1], [], []>} : vector<8x128xf32>, vector<128x128xf32>, vector<8x128xf32> -> vector<8x128xf32>
    %227 = arith.addf %225, %226 : vector<8x128xf32>
    %cst_89 = arith.constant dense<0.000000e+00> : vector<8x128xf32>
    %228 = tpu.matmul %227, %4, %cst_89 {dimension_numbers = #tpu.dot_dimension_numbers<[1], [0], [0], [1], [0, 0, 1, 1], [], []>} : vector<8x128xf32>, vector<128x128xf32>, vector<8x128xf32> -> vector<8x128xf32>
    %229 = arith.addf %224, %228 : vector<8x128xf32>
    %230 = arith.addf %229, %223 : vector<8x128xf32>
    %cst_90 = arith.constant 1.000000e-01 : f32
    %231 = vector.broadcast %cst_90 : f32 to vector<8x128xf32>
    %232 = arith.mulf %231, %230 : vector<8x128xf32>
    %233 = arith.subf %209, %232 : vector<8x128xf32>
    %cst_91 = arith.constant 1.000000e-01 : f32
    %234 = vector.broadcast %cst_91 : f32 to vector<8x128xf32>
    %235 = arith.mulf %234, %227 : vector<8x128xf32>
    %236 = arith.subf %212, %235 : vector<8x128xf32>
    %c9_i32 = arith.constant 9 : i32
    %cst_92 = arith.constant dense<0.000000e+00> : vector<8x256xf32>
    %237 = tpu.matmul %233, %3, %cst_92 {dimension_numbers = #tpu.dot_dimension_numbers<[1], [0], [0], [1], [0, 0, 1, 1], [], []>} : vector<8x128xf32>, vector<128x256xf32>, vector<8x256xf32> -> vector<8x256xf32>
    %238 = vector.extract_strided_slice %237 {offsets = [0, 0], sizes = [8, 128], strides = [1, 1]} : vector<8x256xf32> to vector<8x128xf32>
    %239 = arith.addf %238, %18 : vector<8x128xf32>
    %cst_93 = arith.constant 5.000000e-01 : f32
    %240 = vector.broadcast %cst_93 : f32 to vector<8x128xf32>
    %241 = arith.mulf %240, %239 : vector<8x128xf32>
    %242 = math.tanh %241 : vector<8x128xf32>
    %cst_94 = arith.constant 5.000000e-01 : f32
    %243 = vector.broadcast %cst_94 : f32 to vector<8x128xf32>
    %244 = arith.mulf %243, %242 : vector<8x128xf32>
    %cst_95 = arith.constant 5.000000e-01 : f32
    %245 = vector.broadcast %cst_95 : f32 to vector<8x128xf32>
    %246 = arith.addf %244, %245 : vector<8x128xf32>
    %247 = vector.extract_strided_slice %237 {offsets = [0, 128], sizes = [8, 128], strides = [1, 1]} : vector<8x256xf32> to vector<8x128xf32>
    %248 = arith.subf %233, %15 : vector<8x128xf32>
    %249 = arith.subf %236, %246 : vector<8x128xf32>
    %cst_96 = arith.constant dense<0.000000e+00> : vector<8x128xf32>
    %250 = tpu.matmul %236, %5, %cst_96 {dimension_numbers = #tpu.dot_dimension_numbers<[1], [0], [0], [1], [0, 0, 1, 1], [], []>} : vector<8x128xf32>, vector<128x128xf32>, vector<8x128xf32> -> vector<8x128xf32>
    %251 = arith.addf %249, %250 : vector<8x128xf32>
    %cst_97 = arith.constant dense<0.000000e+00> : vector<8x128xf32>
    %252 = tpu.matmul %251, %4, %cst_97 {dimension_numbers = #tpu.dot_dimension_numbers<[1], [0], [0], [1], [0, 0, 1, 1], [], []>} : vector<8x128xf32>, vector<128x128xf32>, vector<8x128xf32> -> vector<8x128xf32>
    %253 = arith.addf %248, %252 : vector<8x128xf32>
    %254 = arith.addf %253, %247 : vector<8x128xf32>
    %cst_98 = arith.constant 1.000000e-01 : f32
    %255 = vector.broadcast %cst_98 : f32 to vector<8x128xf32>
    %256 = arith.mulf %255, %254 : vector<8x128xf32>
    %257 = arith.subf %233, %256 : vector<8x128xf32>
    %cst_99 = arith.constant 1.000000e-01 : f32
    %258 = vector.broadcast %cst_99 : f32 to vector<8x128xf32>
    %259 = arith.mulf %258, %251 : vector<8x128xf32>
    %260 = arith.subf %236, %259 : vector<8x128xf32>
    %c10_i32 = arith.constant 10 : i32
    %cst_100 = arith.constant dense<0.000000e+00> : vector<8x256xf32>
    %261 = tpu.matmul %257, %3, %cst_100 {dimension_numbers = #tpu.dot_dimension_numbers<[1], [0], [0], [1], [0, 0, 1, 1], [], []>} : vector<8x128xf32>, vector<128x256xf32>, vector<8x256xf32> -> vector<8x256xf32>
    %262 = vector.extract_strided_slice %261 {offsets = [0, 0], sizes = [8, 128], strides = [1, 1]} : vector<8x256xf32> to vector<8x128xf32>
    %263 = arith.addf %262, %18 : vector<8x128xf32>
    %cst_101 = arith.constant 5.000000e-01 : f32
    %264 = vector.broadcast %cst_101 : f32 to vector<8x128xf32>
    %265 = arith.mulf %264, %263 : vector<8x128xf32>
    %266 = math.tanh %265 : vector<8x128xf32>
    %cst_102 = arith.constant 5.000000e-01 : f32
    %267 = vector.broadcast %cst_102 : f32 to vector<8x128xf32>
    %268 = arith.mulf %267, %266 : vector<8x128xf32>
    %cst_103 = arith.constant 5.000000e-01 : f32
    %269 = vector.broadcast %cst_103 : f32 to vector<8x128xf32>
    %270 = arith.addf %268, %269 : vector<8x128xf32>
    %271 = vector.extract_strided_slice %261 {offsets = [0, 128], sizes = [8, 128], strides = [1, 1]} : vector<8x256xf32> to vector<8x128xf32>
    %272 = arith.subf %257, %15 : vector<8x128xf32>
    %273 = arith.subf %260, %270 : vector<8x128xf32>
    %cst_104 = arith.constant dense<0.000000e+00> : vector<8x128xf32>
    %274 = tpu.matmul %260, %5, %cst_104 {dimension_numbers = #tpu.dot_dimension_numbers<[1], [0], [0], [1], [0, 0, 1, 1], [], []>} : vector<8x128xf32>, vector<128x128xf32>, vector<8x128xf32> -> vector<8x128xf32>
    %275 = arith.addf %273, %274 : vector<8x128xf32>
    %cst_105 = arith.constant dense<0.000000e+00> : vector<8x128xf32>
    %276 = tpu.matmul %275, %4, %cst_105 {dimension_numbers = #tpu.dot_dimension_numbers<[1], [0], [0], [1], [0, 0, 1, 1], [], []>} : vector<8x128xf32>, vector<128x128xf32>, vector<8x128xf32> -> vector<8x128xf32>
    %277 = arith.addf %272, %276 : vector<8x128xf32>
    %278 = arith.addf %277, %271 : vector<8x128xf32>
    %cst_106 = arith.constant 1.000000e-01 : f32
    %279 = vector.broadcast %cst_106 : f32 to vector<8x128xf32>
    %280 = arith.mulf %279, %278 : vector<8x128xf32>
    %281 = arith.subf %257, %280 : vector<8x128xf32>
    %cst_107 = arith.constant 1.000000e-01 : f32
    %282 = vector.broadcast %cst_107 : f32 to vector<8x128xf32>
    %283 = arith.mulf %282, %275 : vector<8x128xf32>
    %284 = arith.subf %260, %283 : vector<8x128xf32>
    %c11_i32 = arith.constant 11 : i32
    %cst_108 = arith.constant dense<0.000000e+00> : vector<8x256xf32>
    %285 = tpu.matmul %281, %3, %cst_108 {dimension_numbers = #tpu.dot_dimension_numbers<[1], [0], [0], [1], [0, 0, 1, 1], [], []>} : vector<8x128xf32>, vector<128x256xf32>, vector<8x256xf32> -> vector<8x256xf32>
    %286 = vector.extract_strided_slice %285 {offsets = [0, 0], sizes = [8, 128], strides = [1, 1]} : vector<8x256xf32> to vector<8x128xf32>
    %287 = arith.addf %286, %18 : vector<8x128xf32>
    %cst_109 = arith.constant 5.000000e-01 : f32
    %288 = vector.broadcast %cst_109 : f32 to vector<8x128xf32>
    %289 = arith.mulf %288, %287 : vector<8x128xf32>
    %290 = math.tanh %289 : vector<8x128xf32>
    %cst_110 = arith.constant 5.000000e-01 : f32
    %291 = vector.broadcast %cst_110 : f32 to vector<8x128xf32>
    %292 = arith.mulf %291, %290 : vector<8x128xf32>
    %cst_111 = arith.constant 5.000000e-01 : f32
    %293 = vector.broadcast %cst_111 : f32 to vector<8x128xf32>
    %294 = arith.addf %292, %293 : vector<8x128xf32>
    %295 = vector.extract_strided_slice %285 {offsets = [0, 128], sizes = [8, 128], strides = [1, 1]} : vector<8x256xf32> to vector<8x128xf32>
    %296 = arith.subf %281, %15 : vector<8x128xf32>
    %297 = arith.subf %284, %294 : vector<8x128xf32>
    %cst_112 = arith.constant dense<0.000000e+00> : vector<8x128xf32>
    %298 = tpu.matmul %284, %5, %cst_112 {dimension_numbers = #tpu.dot_dimension_numbers<[1], [0], [0], [1], [0, 0, 1, 1], [], []>} : vector<8x128xf32>, vector<128x128xf32>, vector<8x128xf32> -> vector<8x128xf32>
    %299 = arith.addf %297, %298 : vector<8x128xf32>
    %cst_113 = arith.constant dense<0.000000e+00> : vector<8x128xf32>
    %300 = tpu.matmul %299, %4, %cst_113 {dimension_numbers = #tpu.dot_dimension_numbers<[1], [0], [0], [1], [0, 0, 1, 1], [], []>} : vector<8x128xf32>, vector<128x128xf32>, vector<8x128xf32> -> vector<8x128xf32>
    %301 = arith.addf %296, %300 : vector<8x128xf32>
    %302 = arith.addf %301, %295 : vector<8x128xf32>
    %cst_114 = arith.constant 1.000000e-01 : f32
    %303 = vector.broadcast %cst_114 : f32 to vector<8x128xf32>
    %304 = arith.mulf %303, %302 : vector<8x128xf32>
    %305 = arith.subf %281, %304 : vector<8x128xf32>
    %cst_115 = arith.constant 1.000000e-01 : f32
    %306 = vector.broadcast %cst_115 : f32 to vector<8x128xf32>
    %307 = arith.mulf %306, %299 : vector<8x128xf32>
    %308 = arith.subf %284, %307 : vector<8x128xf32>
    %c12_i32 = arith.constant 12 : i32
    %cst_116 = arith.constant dense<0.000000e+00> : vector<8x256xf32>
    %309 = tpu.matmul %305, %3, %cst_116 {dimension_numbers = #tpu.dot_dimension_numbers<[1], [0], [0], [1], [0, 0, 1, 1], [], []>} : vector<8x128xf32>, vector<128x256xf32>, vector<8x256xf32> -> vector<8x256xf32>
    %310 = vector.extract_strided_slice %309 {offsets = [0, 0], sizes = [8, 128], strides = [1, 1]} : vector<8x256xf32> to vector<8x128xf32>
    %311 = arith.addf %310, %18 : vector<8x128xf32>
    %cst_117 = arith.constant 5.000000e-01 : f32
    %312 = vector.broadcast %cst_117 : f32 to vector<8x128xf32>
    %313 = arith.mulf %312, %311 : vector<8x128xf32>
    %314 = math.tanh %313 : vector<8x128xf32>
    %cst_118 = arith.constant 5.000000e-01 : f32
    %315 = vector.broadcast %cst_118 : f32 to vector<8x128xf32>
    %316 = arith.mulf %315, %314 : vector<8x128xf32>
    %cst_119 = arith.constant 5.000000e-01 : f32
    %317 = vector.broadcast %cst_119 : f32 to vector<8x128xf32>
    %318 = arith.addf %316, %317 : vector<8x128xf32>
    %319 = vector.extract_strided_slice %309 {offsets = [0, 128], sizes = [8, 128], strides = [1, 1]} : vector<8x256xf32> to vector<8x128xf32>
    %320 = arith.subf %305, %15 : vector<8x128xf32>
    %321 = arith.subf %308, %318 : vector<8x128xf32>
    %cst_120 = arith.constant dense<0.000000e+00> : vector<8x128xf32>
    %322 = tpu.matmul %308, %5, %cst_120 {dimension_numbers = #tpu.dot_dimension_numbers<[1], [0], [0], [1], [0, 0, 1, 1], [], []>} : vector<8x128xf32>, vector<128x128xf32>, vector<8x128xf32> -> vector<8x128xf32>
    %323 = arith.addf %321, %322 : vector<8x128xf32>
    %cst_121 = arith.constant dense<0.000000e+00> : vector<8x128xf32>
    %324 = tpu.matmul %323, %4, %cst_121 {dimension_numbers = #tpu.dot_dimension_numbers<[1], [0], [0], [1], [0, 0, 1, 1], [], []>} : vector<8x128xf32>, vector<128x128xf32>, vector<8x128xf32> -> vector<8x128xf32>
    %325 = arith.addf %320, %324 : vector<8x128xf32>
    %326 = arith.addf %325, %319 : vector<8x128xf32>
    %cst_122 = arith.constant 1.000000e-01 : f32
    %327 = vector.broadcast %cst_122 : f32 to vector<8x128xf32>
    %328 = arith.mulf %327, %326 : vector<8x128xf32>
    %329 = arith.subf %305, %328 : vector<8x128xf32>
    %cst_123 = arith.constant 1.000000e-01 : f32
    %330 = vector.broadcast %cst_123 : f32 to vector<8x128xf32>
    %331 = arith.mulf %330, %323 : vector<8x128xf32>
    %332 = arith.subf %308, %331 : vector<8x128xf32>
    %c13_i32 = arith.constant 13 : i32
    %cst_124 = arith.constant dense<0.000000e+00> : vector<8x256xf32>
    %333 = tpu.matmul %329, %3, %cst_124 {dimension_numbers = #tpu.dot_dimension_numbers<[1], [0], [0], [1], [0, 0, 1, 1], [], []>} : vector<8x128xf32>, vector<128x256xf32>, vector<8x256xf32> -> vector<8x256xf32>
    %334 = vector.extract_strided_slice %333 {offsets = [0, 0], sizes = [8, 128], strides = [1, 1]} : vector<8x256xf32> to vector<8x128xf32>
    %335 = arith.addf %334, %18 : vector<8x128xf32>
    %cst_125 = arith.constant 5.000000e-01 : f32
    %336 = vector.broadcast %cst_125 : f32 to vector<8x128xf32>
    %337 = arith.mulf %336, %335 : vector<8x128xf32>
    %338 = math.tanh %337 : vector<8x128xf32>
    %cst_126 = arith.constant 5.000000e-01 : f32
    %339 = vector.broadcast %cst_126 : f32 to vector<8x128xf32>
    %340 = arith.mulf %339, %338 : vector<8x128xf32>
    %cst_127 = arith.constant 5.000000e-01 : f32
    %341 = vector.broadcast %cst_127 : f32 to vector<8x128xf32>
    %342 = arith.addf %340, %341 : vector<8x128xf32>
    %343 = vector.extract_strided_slice %333 {offsets = [0, 128], sizes = [8, 128], strides = [1, 1]} : vector<8x256xf32> to vector<8x128xf32>
    %344 = arith.subf %329, %15 : vector<8x128xf32>
    %345 = arith.subf %332, %342 : vector<8x128xf32>
    %cst_128 = arith.constant dense<0.000000e+00> : vector<8x128xf32>
    %346 = tpu.matmul %332, %5, %cst_128 {dimension_numbers = #tpu.dot_dimension_numbers<[1], [0], [0], [1], [0, 0, 1, 1], [], []>} : vector<8x128xf32>, vector<128x128xf32>, vector<8x128xf32> -> vector<8x128xf32>
    %347 = arith.addf %345, %346 : vector<8x128xf32>
    %cst_129 = arith.constant dense<0.000000e+00> : vector<8x128xf32>
    %348 = tpu.matmul %347, %4, %cst_129 {dimension_numbers = #tpu.dot_dimension_numbers<[1], [0], [0], [1], [0, 0, 1, 1], [], []>} : vector<8x128xf32>, vector<128x128xf32>, vector<8x128xf32> -> vector<8x128xf32>
    %349 = arith.addf %344, %348 : vector<8x128xf32>
    %350 = arith.addf %349, %343 : vector<8x128xf32>
    %cst_130 = arith.constant 1.000000e-01 : f32
    %351 = vector.broadcast %cst_130 : f32 to vector<8x128xf32>
    %352 = arith.mulf %351, %350 : vector<8x128xf32>
    %353 = arith.subf %329, %352 : vector<8x128xf32>
    %cst_131 = arith.constant 1.000000e-01 : f32
    %354 = vector.broadcast %cst_131 : f32 to vector<8x128xf32>
    %355 = arith.mulf %354, %347 : vector<8x128xf32>
    %356 = arith.subf %332, %355 : vector<8x128xf32>
    %c14_i32 = arith.constant 14 : i32
    %cst_132 = arith.constant dense<0.000000e+00> : vector<8x256xf32>
    %357 = tpu.matmul %353, %3, %cst_132 {dimension_numbers = #tpu.dot_dimension_numbers<[1], [0], [0], [1], [0, 0, 1, 1], [], []>} : vector<8x128xf32>, vector<128x256xf32>, vector<8x256xf32> -> vector<8x256xf32>
    %358 = vector.extract_strided_slice %357 {offsets = [0, 0], sizes = [8, 128], strides = [1, 1]} : vector<8x256xf32> to vector<8x128xf32>
    %359 = arith.addf %358, %18 : vector<8x128xf32>
    %cst_133 = arith.constant 5.000000e-01 : f32
    %360 = vector.broadcast %cst_133 : f32 to vector<8x128xf32>
    %361 = arith.mulf %360, %359 : vector<8x128xf32>
    %362 = math.tanh %361 : vector<8x128xf32>
    %cst_134 = arith.constant 5.000000e-01 : f32
    %363 = vector.broadcast %cst_134 : f32 to vector<8x128xf32>
    %364 = arith.mulf %363, %362 : vector<8x128xf32>
    %cst_135 = arith.constant 5.000000e-01 : f32
    %365 = vector.broadcast %cst_135 : f32 to vector<8x128xf32>
    %366 = arith.addf %364, %365 : vector<8x128xf32>
    %367 = vector.extract_strided_slice %357 {offsets = [0, 128], sizes = [8, 128], strides = [1, 1]} : vector<8x256xf32> to vector<8x128xf32>
    %368 = arith.subf %353, %15 : vector<8x128xf32>
    %369 = arith.subf %356, %366 : vector<8x128xf32>
    %cst_136 = arith.constant dense<0.000000e+00> : vector<8x128xf32>
    %370 = tpu.matmul %356, %5, %cst_136 {dimension_numbers = #tpu.dot_dimension_numbers<[1], [0], [0], [1], [0, 0, 1, 1], [], []>} : vector<8x128xf32>, vector<128x128xf32>, vector<8x128xf32> -> vector<8x128xf32>
    %371 = arith.addf %369, %370 : vector<8x128xf32>
    %cst_137 = arith.constant dense<0.000000e+00> : vector<8x128xf32>
    %372 = tpu.matmul %371, %4, %cst_137 {dimension_numbers = #tpu.dot_dimension_numbers<[1], [0], [0], [1], [0, 0, 1, 1], [], []>} : vector<8x128xf32>, vector<128x128xf32>, vector<8x128xf32> -> vector<8x128xf32>
    %373 = arith.addf %368, %372 : vector<8x128xf32>
    %374 = arith.addf %373, %367 : vector<8x128xf32>
    %cst_138 = arith.constant 1.000000e-01 : f32
    %375 = vector.broadcast %cst_138 : f32 to vector<8x128xf32>
    %376 = arith.mulf %375, %374 : vector<8x128xf32>
    %377 = arith.subf %353, %376 : vector<8x128xf32>
    %cst_139 = arith.constant 1.000000e-01 : f32
    %378 = vector.broadcast %cst_139 : f32 to vector<8x128xf32>
    %379 = arith.mulf %378, %371 : vector<8x128xf32>
    %380 = arith.subf %356, %379 : vector<8x128xf32>
    %c15_i32 = arith.constant 15 : i32
    %cst_140 = arith.constant dense<0.000000e+00> : vector<8x256xf32>
    %381 = tpu.matmul %377, %3, %cst_140 {dimension_numbers = #tpu.dot_dimension_numbers<[1], [0], [0], [1], [0, 0, 1, 1], [], []>} : vector<8x128xf32>, vector<128x256xf32>, vector<8x256xf32> -> vector<8x256xf32>
    %382 = vector.extract_strided_slice %381 {offsets = [0, 0], sizes = [8, 128], strides = [1, 1]} : vector<8x256xf32> to vector<8x128xf32>
    %383 = arith.addf %382, %18 : vector<8x128xf32>
    %cst_141 = arith.constant 5.000000e-01 : f32
    %384 = vector.broadcast %cst_141 : f32 to vector<8x128xf32>
    %385 = arith.mulf %384, %383 : vector<8x128xf32>
    %386 = math.tanh %385 : vector<8x128xf32>
    %cst_142 = arith.constant 5.000000e-01 : f32
    %387 = vector.broadcast %cst_142 : f32 to vector<8x128xf32>
    %388 = arith.mulf %387, %386 : vector<8x128xf32>
    %cst_143 = arith.constant 5.000000e-01 : f32
    %389 = vector.broadcast %cst_143 : f32 to vector<8x128xf32>
    %390 = arith.addf %388, %389 : vector<8x128xf32>
    %391 = vector.extract_strided_slice %381 {offsets = [0, 128], sizes = [8, 128], strides = [1, 1]} : vector<8x256xf32> to vector<8x128xf32>
    %392 = arith.subf %377, %15 : vector<8x128xf32>
    %393 = arith.subf %380, %390 : vector<8x128xf32>
    %cst_144 = arith.constant dense<0.000000e+00> : vector<8x128xf32>
    %394 = tpu.matmul %380, %5, %cst_144 {dimension_numbers = #tpu.dot_dimension_numbers<[1], [0], [0], [1], [0, 0, 1, 1], [], []>} : vector<8x128xf32>, vector<128x128xf32>, vector<8x128xf32> -> vector<8x128xf32>
    %395 = arith.addf %393, %394 : vector<8x128xf32>
    %cst_145 = arith.constant dense<0.000000e+00> : vector<8x128xf32>
    %396 = tpu.matmul %395, %4, %cst_145 {dimension_numbers = #tpu.dot_dimension_numbers<[1], [0], [0], [1], [0, 0, 1, 1], [], []>} : vector<8x128xf32>, vector<128x128xf32>, vector<8x128xf32> -> vector<8x128xf32>
    %397 = arith.addf %392, %396 : vector<8x128xf32>
    %398 = arith.addf %397, %391 : vector<8x128xf32>
    %cst_146 = arith.constant 1.000000e-01 : f32
    %399 = vector.broadcast %cst_146 : f32 to vector<8x128xf32>
    %400 = arith.mulf %399, %398 : vector<8x128xf32>
    %401 = arith.subf %377, %400 : vector<8x128xf32>
    %cst_147 = arith.constant 1.000000e-01 : f32
    %402 = vector.broadcast %cst_147 : f32 to vector<8x128xf32>
    %403 = arith.mulf %402, %395 : vector<8x128xf32>
    %404 = arith.subf %380, %403 : vector<8x128xf32>
    %c16_i32 = arith.constant 16 : i32
    %cst_148 = arith.constant dense<0.000000e+00> : vector<8x256xf32>
    %405 = tpu.matmul %401, %3, %cst_148 {dimension_numbers = #tpu.dot_dimension_numbers<[1], [0], [0], [1], [0, 0, 1, 1], [], []>} : vector<8x128xf32>, vector<128x256xf32>, vector<8x256xf32> -> vector<8x256xf32>
    %406 = vector.extract_strided_slice %405 {offsets = [0, 0], sizes = [8, 128], strides = [1, 1]} : vector<8x256xf32> to vector<8x128xf32>
    %407 = arith.addf %406, %18 : vector<8x128xf32>
    %cst_149 = arith.constant 5.000000e-01 : f32
    %408 = vector.broadcast %cst_149 : f32 to vector<8x128xf32>
    %409 = arith.mulf %408, %407 : vector<8x128xf32>
    %410 = math.tanh %409 : vector<8x128xf32>
    %cst_150 = arith.constant 5.000000e-01 : f32
    %411 = vector.broadcast %cst_150 : f32 to vector<8x128xf32>
    %412 = arith.mulf %411, %410 : vector<8x128xf32>
    %cst_151 = arith.constant 5.000000e-01 : f32
    %413 = vector.broadcast %cst_151 : f32 to vector<8x128xf32>
    %414 = arith.addf %412, %413 : vector<8x128xf32>
    %415 = vector.extract_strided_slice %405 {offsets = [0, 128], sizes = [8, 128], strides = [1, 1]} : vector<8x256xf32> to vector<8x128xf32>
    %416 = arith.subf %401, %15 : vector<8x128xf32>
    %417 = arith.subf %404, %414 : vector<8x128xf32>
    %cst_152 = arith.constant dense<0.000000e+00> : vector<8x128xf32>
    %418 = tpu.matmul %404, %5, %cst_152 {dimension_numbers = #tpu.dot_dimension_numbers<[1], [0], [0], [1], [0, 0, 1, 1], [], []>} : vector<8x128xf32>, vector<128x128xf32>, vector<8x128xf32> -> vector<8x128xf32>
    %419 = arith.addf %417, %418 : vector<8x128xf32>
    %cst_153 = arith.constant dense<0.000000e+00> : vector<8x128xf32>
    %420 = tpu.matmul %419, %4, %cst_153 {dimension_numbers = #tpu.dot_dimension_numbers<[1], [0], [0], [1], [0, 0, 1, 1], [], []>} : vector<8x128xf32>, vector<128x128xf32>, vector<8x128xf32> -> vector<8x128xf32>
    %421 = arith.addf %416, %420 : vector<8x128xf32>
    %422 = arith.addf %421, %415 : vector<8x128xf32>
    %cst_154 = arith.constant 1.000000e-01 : f32
    %423 = vector.broadcast %cst_154 : f32 to vector<8x128xf32>
    %424 = arith.mulf %423, %422 : vector<8x128xf32>
    %425 = arith.subf %401, %424 : vector<8x128xf32>
    %cst_155 = arith.constant 1.000000e-01 : f32
    %426 = vector.broadcast %cst_155 : f32 to vector<8x128xf32>
    %427 = arith.mulf %426, %419 : vector<8x128xf32>
    %428 = arith.subf %404, %427 : vector<8x128xf32>
    %c17_i32 = arith.constant 17 : i32
    %cst_156 = arith.constant dense<0.000000e+00> : vector<8x256xf32>
    %429 = tpu.matmul %425, %3, %cst_156 {dimension_numbers = #tpu.dot_dimension_numbers<[1], [0], [0], [1], [0, 0, 1, 1], [], []>} : vector<8x128xf32>, vector<128x256xf32>, vector<8x256xf32> -> vector<8x256xf32>
    %430 = vector.extract_strided_slice %429 {offsets = [0, 0], sizes = [8, 128], strides = [1, 1]} : vector<8x256xf32> to vector<8x128xf32>
    %431 = arith.addf %430, %18 : vector<8x128xf32>
    %cst_157 = arith.constant 5.000000e-01 : f32
    %432 = vector.broadcast %cst_157 : f32 to vector<8x128xf32>
    %433 = arith.mulf %432, %431 : vector<8x128xf32>
    %434 = math.tanh %433 : vector<8x128xf32>
    %cst_158 = arith.constant 5.000000e-01 : f32
    %435 = vector.broadcast %cst_158 : f32 to vector<8x128xf32>
    %436 = arith.mulf %435, %434 : vector<8x128xf32>
    %cst_159 = arith.constant 5.000000e-01 : f32
    %437 = vector.broadcast %cst_159 : f32 to vector<8x128xf32>
    %438 = arith.addf %436, %437 : vector<8x128xf32>
    %439 = vector.extract_strided_slice %429 {offsets = [0, 128], sizes = [8, 128], strides = [1, 1]} : vector<8x256xf32> to vector<8x128xf32>
    %440 = arith.subf %425, %15 : vector<8x128xf32>
    %441 = arith.subf %428, %438 : vector<8x128xf32>
    %cst_160 = arith.constant dense<0.000000e+00> : vector<8x128xf32>
    %442 = tpu.matmul %428, %5, %cst_160 {dimension_numbers = #tpu.dot_dimension_numbers<[1], [0], [0], [1], [0, 0, 1, 1], [], []>} : vector<8x128xf32>, vector<128x128xf32>, vector<8x128xf32> -> vector<8x128xf32>
    %443 = arith.addf %441, %442 : vector<8x128xf32>
    %cst_161 = arith.constant dense<0.000000e+00> : vector<8x128xf32>
    %444 = tpu.matmul %443, %4, %cst_161 {dimension_numbers = #tpu.dot_dimension_numbers<[1], [0], [0], [1], [0, 0, 1, 1], [], []>} : vector<8x128xf32>, vector<128x128xf32>, vector<8x128xf32> -> vector<8x128xf32>
    %445 = arith.addf %440, %444 : vector<8x128xf32>
    %446 = arith.addf %445, %439 : vector<8x128xf32>
    %cst_162 = arith.constant 1.000000e-01 : f32
    %447 = vector.broadcast %cst_162 : f32 to vector<8x128xf32>
    %448 = arith.mulf %447, %446 : vector<8x128xf32>
    %449 = arith.subf %425, %448 : vector<8x128xf32>
    %cst_163 = arith.constant 1.000000e-01 : f32
    %450 = vector.broadcast %cst_163 : f32 to vector<8x128xf32>
    %451 = arith.mulf %450, %443 : vector<8x128xf32>
    %452 = arith.subf %428, %451 : vector<8x128xf32>
    %c18_i32 = arith.constant 18 : i32
    %cst_164 = arith.constant dense<0.000000e+00> : vector<8x256xf32>
    %453 = tpu.matmul %449, %3, %cst_164 {dimension_numbers = #tpu.dot_dimension_numbers<[1], [0], [0], [1], [0, 0, 1, 1], [], []>} : vector<8x128xf32>, vector<128x256xf32>, vector<8x256xf32> -> vector<8x256xf32>
    %454 = vector.extract_strided_slice %453 {offsets = [0, 0], sizes = [8, 128], strides = [1, 1]} : vector<8x256xf32> to vector<8x128xf32>
    %455 = arith.addf %454, %18 : vector<8x128xf32>
    %cst_165 = arith.constant 5.000000e-01 : f32
    %456 = vector.broadcast %cst_165 : f32 to vector<8x128xf32>
    %457 = arith.mulf %456, %455 : vector<8x128xf32>
    %458 = math.tanh %457 : vector<8x128xf32>
    %cst_166 = arith.constant 5.000000e-01 : f32
    %459 = vector.broadcast %cst_166 : f32 to vector<8x128xf32>
    %460 = arith.mulf %459, %458 : vector<8x128xf32>
    %cst_167 = arith.constant 5.000000e-01 : f32
    %461 = vector.broadcast %cst_167 : f32 to vector<8x128xf32>
    %462 = arith.addf %460, %461 : vector<8x128xf32>
    %463 = vector.extract_strided_slice %453 {offsets = [0, 128], sizes = [8, 128], strides = [1, 1]} : vector<8x256xf32> to vector<8x128xf32>
    %464 = arith.subf %449, %15 : vector<8x128xf32>
    %465 = arith.subf %452, %462 : vector<8x128xf32>
    %cst_168 = arith.constant dense<0.000000e+00> : vector<8x128xf32>
    %466 = tpu.matmul %452, %5, %cst_168 {dimension_numbers = #tpu.dot_dimension_numbers<[1], [0], [0], [1], [0, 0, 1, 1], [], []>} : vector<8x128xf32>, vector<128x128xf32>, vector<8x128xf32> -> vector<8x128xf32>
    %467 = arith.addf %465, %466 : vector<8x128xf32>
    %cst_169 = arith.constant dense<0.000000e+00> : vector<8x128xf32>
    %468 = tpu.matmul %467, %4, %cst_169 {dimension_numbers = #tpu.dot_dimension_numbers<[1], [0], [0], [1], [0, 0, 1, 1], [], []>} : vector<8x128xf32>, vector<128x128xf32>, vector<8x128xf32> -> vector<8x128xf32>
    %469 = arith.addf %464, %468 : vector<8x128xf32>
    %470 = arith.addf %469, %463 : vector<8x128xf32>
    %cst_170 = arith.constant 1.000000e-01 : f32
    %471 = vector.broadcast %cst_170 : f32 to vector<8x128xf32>
    %472 = arith.mulf %471, %470 : vector<8x128xf32>
    %473 = arith.subf %449, %472 : vector<8x128xf32>
    %cst_171 = arith.constant 1.000000e-01 : f32
    %474 = vector.broadcast %cst_171 : f32 to vector<8x128xf32>
    %475 = arith.mulf %474, %467 : vector<8x128xf32>
    %476 = arith.subf %452, %475 : vector<8x128xf32>
    %c19_i32 = arith.constant 19 : i32
    %cst_172 = arith.constant dense<0.000000e+00> : vector<8x256xf32>
    %477 = tpu.matmul %473, %3, %cst_172 {dimension_numbers = #tpu.dot_dimension_numbers<[1], [0], [0], [1], [0, 0, 1, 1], [], []>} : vector<8x128xf32>, vector<128x256xf32>, vector<8x256xf32> -> vector<8x256xf32>
    %478 = vector.extract_strided_slice %477 {offsets = [0, 0], sizes = [8, 128], strides = [1, 1]} : vector<8x256xf32> to vector<8x128xf32>
    %479 = arith.addf %478, %18 : vector<8x128xf32>
    %cst_173 = arith.constant 5.000000e-01 : f32
    %480 = vector.broadcast %cst_173 : f32 to vector<8x128xf32>
    %481 = arith.mulf %480, %479 : vector<8x128xf32>
    %482 = math.tanh %481 : vector<8x128xf32>
    %cst_174 = arith.constant 5.000000e-01 : f32
    %483 = vector.broadcast %cst_174 : f32 to vector<8x128xf32>
    %484 = arith.mulf %483, %482 : vector<8x128xf32>
    %cst_175 = arith.constant 5.000000e-01 : f32
    %485 = vector.broadcast %cst_175 : f32 to vector<8x128xf32>
    %486 = arith.addf %484, %485 : vector<8x128xf32>
    %487 = vector.extract_strided_slice %477 {offsets = [0, 128], sizes = [8, 128], strides = [1, 1]} : vector<8x256xf32> to vector<8x128xf32>
    %488 = arith.subf %473, %15 : vector<8x128xf32>
    %489 = arith.subf %476, %486 : vector<8x128xf32>
    %cst_176 = arith.constant dense<0.000000e+00> : vector<8x128xf32>
    %490 = tpu.matmul %476, %5, %cst_176 {dimension_numbers = #tpu.dot_dimension_numbers<[1], [0], [0], [1], [0, 0, 1, 1], [], []>} : vector<8x128xf32>, vector<128x128xf32>, vector<8x128xf32> -> vector<8x128xf32>
    %491 = arith.addf %489, %490 : vector<8x128xf32>
    %cst_177 = arith.constant dense<0.000000e+00> : vector<8x128xf32>
    %492 = tpu.matmul %491, %4, %cst_177 {dimension_numbers = #tpu.dot_dimension_numbers<[1], [0], [0], [1], [0, 0, 1, 1], [], []>} : vector<8x128xf32>, vector<128x128xf32>, vector<8x128xf32> -> vector<8x128xf32>
    %493 = arith.addf %488, %492 : vector<8x128xf32>
    %494 = arith.addf %493, %487 : vector<8x128xf32>
    %cst_178 = arith.constant 1.000000e-01 : f32
    %495 = vector.broadcast %cst_178 : f32 to vector<8x128xf32>
    %496 = arith.mulf %495, %494 : vector<8x128xf32>
    %497 = arith.subf %473, %496 : vector<8x128xf32>
    %cst_179 = arith.constant 1.000000e-01 : f32
    %498 = vector.broadcast %cst_179 : f32 to vector<8x128xf32>
    %499 = arith.mulf %498, %491 : vector<8x128xf32>
    %500 = arith.subf %476, %499 : vector<8x128xf32>
    %c0_180 = arith.constant 0 : index
    %c0_181 = arith.constant 0 : index
    %501 = vector.load %arg9[%c0_180, %c0_181] : memref<8x128xf32, #tpu.memory_space<vmem>>, vector<8x128xf32>
    tpu.vector_store %arg9[%c0_180, %c0_181], %500 {strides = array<i32>} : memref<8x128xf32, #tpu.memory_space<vmem>>, vector<8x128xf32>,
    return
  }
}

</mosaic_0001>

<llo_original>
// kernel: forward.1
$region0: #{forward.1}
  #allocation0 [shape = 'u32[]', space=smem, size = 0x4, offset = 0x4, fixed_abs, tag = 'smem constant byte address 0x4 - core index']
  #allocation1 [shape = 'u32[144,128]{1,0:T(1,128)}', space=vmem, size = 0x12000, scoped, tag = 'internal scratch']
  %s0 = inlined_call_operand.vmem [shape: f32[8,256], index: 0, kind: input, shape index: {}]
  %s1 = inlined_call_operand.hbm [shape: f32[256,128], index: 1, kind: input, shape index: {}]
  %s2 = inlined_call_operand.vmem [shape: f32[1,128], index: 2, kind: input, shape index: {}]
  %s3 = inlined_call_operand.hbm [shape: f32[128,256], index: 3, kind: input, shape index: {}]
  %s4 = inlined_call_operand.hbm [shape: f32[128,128], index: 4, kind: input, shape index: {}]
  %s5 = inlined_call_operand.vmem [shape: f32[1,128], index: 5, kind: input, shape index: {}]
  %s6 = inlined_call_operand.hbm [shape: f32[128,128], index: 6, kind: input, shape index: {}]
  %s7 = inlined_call_operand.hbm [shape: f32[8,128], index: 7, kind: input, shape index: {}]
  %s8 = inlined_call_operand.vmem [shape: f32[8,128], index: 8, kind: input, shape index: {}]
  %s9 = inlined_call_operand.hbm [shape: f32[8,128], index: 9, kind: output, shape index: {}]
  %s10 = sld [smem:[#allocation0]]
  $region66: #{forward.1} parent=0
    _
  %s12 = ssub.s32 1, %s10
  %s13 = scalar_select 0, %s12, %s10
  $region1: #{forward.1} parent=0
    #allocation2 [shape = 'u8[131072]{0}', space=vmem, size = 0x20000, scoped, tag = 'input window, operand 1, single buffered']
    #allocation3 [shape = 's32[1]{0}', space=sflag, size = 0x4, scoped, tag = 'scoped memory for forward.1']
    #allocation4 [shape = 's32[1]{0}', space=sflag, size = 0x4, scoped, tag = 'scoped memory for forward.1']
    #allocation5 [shape = 'u8[131072]{0}', space=vmem, size = 0x20000, scoped, tag = 'input window, operand 3, single buffered']
    #allocation6 [shape = 's32[1]{0}', space=sflag, size = 0x4, scoped, tag = 'scoped memory for forward.1']
    #allocation7 [shape = 'u8[65536]{0}', space=vmem, size = 0x10000, scoped, tag = 'input window, operand 4, single buffered']
    #allocation8 [shape = 'u8[65536]{0}', space=vmem, size = 0x10000, scoped, tag = 'input window, operand 6, single buffered']
    #allocation9 [shape = 's32[1]{0}', space=sflag, size = 0x4, scoped, tag = 'scoped memory for forward.1']
    #allocation10 [shape = 'u8[4096]{0}', space=vmem, size = 0x1000, scoped, tag = 'input window, operand 7, single buffered']
    #allocation11 [shape = 'u8[4096]{0}', space=vmem, size = 0x1000, scoped, tag = 'output window, operand 0, single buffered']
    %14 = vsyncpa [#allocation3], 0
    %15 = vsyncpa [#allocation6], 0
    %16 = vsyncpa [#allocation9], 0
    %17 = vsyncpa [#allocation4], 0
    // Predicated region
    $region2: #{forward.1} parent=1 // pred_check
      _
    $region3: #{forward.1} parent=1 // pred_check_branch
      %19 = sbr.rel (0) target = $region5
    $region4: #{forward.1} parent=1 // pred_region
      _
    $region5: #{forward.1} parent=1 // pred_fallthru
      _
    // Predicated region
    $region6: #{forward.1} parent=1 // pred_check
      _
    $region7: #{forward.1} parent=1 // pred_check_branch
      %21 = sbr.rel (0) target = $region9
    $region8: #{forward.1} parent=1 // pred_region
      %s23 = ssub.s32 4096, 4096
      %24 = vsyncadd [#allocation3], %s23
      %s25 = sshll.u32 [#allocation2], 4
      %s26 = int_to_ptr.vmem [resolvable:$true] %s25
      %31 = dma.hbm_to_vmem [thread:$0]  %s1, 4096, %s26, [#allocation3], 128, 128, 8
    $region9: #{forward.1} parent=1 // pred_fallthru
      _
    // Predicated region
    $region10: #{forward.1} parent=1 // pred_check
      _
    $region11: #{forward.1} parent=1 // pred_check_branch
      %33 = sbr.rel (0) target = $region13
    $region12: #{forward.1} parent=1 // pred_region
      _
    $region13: #{forward.1} parent=1 // pred_fallthru
      _
    // Predicated region
    $region14: #{forward.1} parent=1 // pred_check
      _
    $region15: #{forward.1} parent=1 // pred_check_branch
      %35 = sbr.rel (0) target = $region17
    $region16: #{forward.1} parent=1 // pred_region
      %s37 = ssub.s32 4096, 4096
      %38 = vsyncadd [#allocation6], %s37
      %s39 = sshll.u32 [#allocation5], 4
      %s40 = int_to_ptr.vmem [resolvable:$true] %s39
      %45 = dma.hbm_to_vmem [thread:$0]  %s3, 4096, %s40, [#allocation6], 256, 256, 16
    $region17: #{forward.1} parent=1 // pred_fallthru
      _
    // Predicated region
    $region18: #{forward.1} parent=1 // pred_check
      _
    $region19: #{forward.1} parent=1 // pred_check_branch
      %47 = sbr.rel (0) target = $region21
    $region20: #{forward.1} parent=1 // pred_region
      %s49 = ssub.s32 2048, 2048
      %50 = vsyncadd [#allocation6], %s49
      %s51 = sshll.u32 [#allocation7], 4
      %s52 = int_to_ptr.vmem [resolvable:$true] %s51
      %57 = dma.hbm_to_vmem [thread:$0]  %s4, 2048, %s52, [#allocation6], 128, 128, 8
    $region21: #{forward.1} parent=1 // pred_fallthru
      _
    // Predicated region
    $region22: #{forward.1} parent=1 // pred_check
      _
    $region23: #{forward.1} parent=1 // pred_check_branch
      %59 = sbr.rel (0) target = $region25
    $region24: #{forward.1} parent=1 // pred_region
      _
    $region25: #{forward.1} parent=1 // pred_fallthru
      _
    // Predicated region
    $region26: #{forward.1} parent=1 // pred_check
      _
    $region27: #{forward.1} parent=1 // pred_check_branch
      %61 = sbr.rel (0) target = $region29
    $region28: #{forward.1} parent=1 // pred_region
      %s63 = ssub.s32 2048, 2048
      %64 = vsyncadd [#allocation9], %s63
      %s65 = sshll.u32 [#allocation8], 4
      %s66 = int_to_ptr.vmem [resolvable:$true] %s65
      %71 = dma.hbm_to_vmem [thread:$0]  %s6, 2048, %s66, [#allocation9], 128, 128, 8
    $region29: #{forward.1} parent=1 // pred_fallthru
      _
    // Predicated region
    $region30: #{forward.1} parent=1 // pred_check
      _
    $region31: #{forward.1} parent=1 // pred_check_branch
      %73 = sbr.rel (0) target = $region33
    $region32: #{forward.1} parent=1 // pred_region
      %s75 = ssub.s32 128, 128
      %76 = vsyncadd [#allocation9], %s75
      %s78 = sshll.u32 [#allocation10], 4
      %s79 = int_to_ptr.vmem [resolvable:$true] %s78
      %81 = dma.hbm_to_vmem [thread:$0]  %s7, 128, %s79, [#allocation9]
    $region33: #{forward.1} parent=1 // pred_fallthru
      _
    // Predicated region
    $region34: #{forward.1} parent=1 // pred_check
      _
    $region35: #{forward.1} parent=1 // pred_check_branch
      %83 = sbr.rel (0) target = $region37
    $region36: #{forward.1} parent=1 // pred_region
      _
    $region37: #{forward.1} parent=1 // pred_fallthru
      _
    // Predicated region
    $region38: #{forward.1} parent=1 // pred_check
      _
    $region39: #{forward.1} parent=1 // pred_check_branch
      %85 = sbr.rel (0) target = $region41
    $region40: #{forward.1} parent=1 // pred_region
      %86 = dma.done [#allocation3], 4096
    $region41: #{forward.1} parent=1 // pred_fallthru
      _
    // Predicated region
    $region42: #{forward.1} parent=1 // pred_check
      _
    $region43: #{forward.1} parent=1 // pred_check_branch
      %88 = sbr.rel (0) target = $region45
    $region44: #{forward.1} parent=1 // pred_region
      %89 = dma.done [#allocation6], 4096
    $region45: #{forward.1} parent=1 // pred_fallthru
      _
    // Predicated region
    $region46: #{forward.1} parent=1 // pred_check
      _
    $region47: #{forward.1} parent=1 // pred_check_branch
      %91 = sbr.rel (0) target = $region49
    $region48: #{forward.1} parent=1 // pred_region
      %92 = dma.done [#allocation6], 2048
    $region49: #{forward.1} parent=1 // pred_fallthru
      _
    // Predicated region
    $region50: #{forward.1} parent=1 // pred_check
      _
    $region51: #{forward.1} parent=1 // pred_check_branch
      %94 = sbr.rel (0) target = $region53
    $region52: #{forward.1} parent=1 // pred_region
      %95 = dma.done [#allocation9], 2048
    $region53: #{forward.1} parent=1 // pred_fallthru
      _
    // Predicated region
    $region54: #{forward.1} parent=1 // pred_check
      _
    $region55: #{forward.1} parent=1 // pred_check_branch
      %97 = sbr.rel (0) target = $region57
    $region56: #{forward.1} parent=1 // pred_region
      %98 = dma.done [#allocation9], 128
    $region57: #{forward.1} parent=1 // pred_fallthru
      _
    %v99 = vld [vmem:[%s0] sm:$0xff]
    %v100 = vld [vmem:[%s0 + $0x8] sm:$0xff]
    %v101 = vld [vmem:[#allocation2] sm:$0xff]
    %v102 = vld [vmem:[#allocation2 + $0x8] sm:$0xff]
    %v103 = vld [vmem:[#allocation2 + $0x10] sm:$0xff]
    %v104 = vld [vmem:[#allocation2 + $0x18] sm:$0xff]
    %v105 = vld [vmem:[#allocation2 + $0x20] sm:$0xff]
    %v106 = vld [vmem:[#allocation2 + $0x28] sm:$0xff]
    %v107 = vld [vmem:[#allocation2 + $0x30] sm:$0xff]
    %v108 = vld [vmem:[#allocation2 + $0x38] sm:$0xff]
    %v109 = vld [vmem:[#allocation2 + $0x40] sm:$0xff]
    %v110 = vld [vmem:[#allocation2 + $0x48] sm:$0xff]
    %v111 = vld [vmem:[#allocation2 + $0x50] sm:$0xff]
    %v112 = vld [vmem:[#allocation2 + $0x58] sm:$0xff]
    %v113 = vld [vmem:[#allocation2 + $0x60] sm:$0xff]
    %v114 = vld [vmem:[#allocation2 + $0x68] sm:$0xff]
    %v115 = vld [vmem:[#allocation2 + $0x70] sm:$0xff]
    %v116 = vld [vmem:[#allocation2 + $0x78] sm:$0xff]
    %v117 = vld [vmem:[#allocation2 + $0x80] sm:$0xff]
    %v118 = vld [vmem:[#allocation2 + $0x88] sm:$0xff]
    %v119 = vld [vmem:[#allocation2 + $0x90] sm:$0xff]
    %v120 = vld [vmem:[#allocation2 + $0x98] sm:$0xff]
    %v121 = vld [vmem:[#allocation2 + $0xa0] sm:$0xff]
    %v122 = vld [vmem:[#allocation2 + $0xa8] sm:$0xff]
    %v123 = vld [vmem:[#allocation2 + $0xb0] sm:$0xff]
    %v124 = vld [vmem:[#allocation2 + $0xb8] sm:$0xff]
    %v125 = vld [vmem:[#allocation2 + $0xc0] sm:$0xff]
    %v126 = vld [vmem:[#allocation2 + $0xc8] sm:$0xff]
    %v127 = vld [vmem:[#allocation2 + $0xd0] sm:$0xff]
    %v128 = vld [vmem:[#allocation2 + $0xd8] sm:$0xff]
    %v129 = vld [vmem:[#allocation2 + $0xe0] sm:$0xff]
    %v130 = vld [vmem:[#allocation2 + $0xe8] sm:$0xff]
    %v131 = vld [vmem:[#allocation2 + $0xf0] sm:$0xff]
    %v132 = vld [vmem:[#allocation2 + $0xf8] sm:$0xff]
    %v133 = vld [vmem:[%s2] sm:$0x1]
    %v134 = vld [vmem:[#allocation5] sm:$0xff]
    %v135 = vld [vmem:[#allocation5 + $0x8] sm:$0xff]
    %v136 = vld [vmem:[#allocation5 + $0x10] sm:$0xff]
    %v137 = vld [vmem:[#allocation5 + $0x18] sm:$0xff]
    %v138 = vld [vmem:[#allocation5 + $0x20] sm:$0xff]
    %v139 = vld [vmem:[#allocation5 + $0x28] sm:$0xff]
    %v140 = vld [vmem:[#allocation5 + $0x30] sm:$0xff]
    %v141 = vld [vmem:[#allocation5 + $0x38] sm:$0xff]
    %v142 = vld [vmem:[#allocation5 + $0x40] sm:$0xff]
    %v143 = vld [vmem:[#allocation5 + $0x48] sm:$0xff]
    %v144 = vld [vmem:[#allocation5 + $0x50] sm:$0xff]
    %v145 = vld [vmem:[#allocation5 + $0x58] sm:$0xff]
    %v146 = vld [vmem:[#allocation5 + $0x60] sm:$0xff]
    %v147 = vld [vmem:[#allocation5 + $0x68] sm:$0xff]
    %v148 = vld [vmem:[#allocation5 + $0x70] sm:$0xff]
    %v149 = vld [vmem:[#allocation5 + $0x78] sm:$0xff]
    %v150 = vld [vmem:[#allocation5 + $0x80] sm:$0xff]
    %v151 = vld [vmem:[#allocation5 + $0x88] sm:$0xff]
    %v152 = vld [vmem:[#allocation5 + $0x90] sm:$0xff]
    %v153 = vld [vmem:[#allocation5 + $0x98] sm:$0xff]
    %v154 = vld [vmem:[#allocation5 + $0xa0] sm:$0xff]
    %v155 = vld [vmem:[#allocation5 + $0xa8] sm:$0xff]
    %v156 = vld [vmem:[#allocation5 + $0xb0] sm:$0xff]
    %v157 = vld [vmem:[#allocation5 + $0xb8] sm:$0xff]
    %v158 = vld [vmem:[#allocation5 + $0xc0] sm:$0xff]
    %v159 = vld [vmem:[#allocation5 + $0xc8] sm:$0xff]
    %v160 = vld [vmem:[#allocation5 + $0xd0] sm:$0xff]
    %v161 = vld [vmem:[#allocation5 + $0xd8] sm:$0xff]
    %v162 = vld [vmem:[#allocation5 + $0xe0] sm:$0xff]
    %v163 = vld [vmem:[#allocation5 + $0xe8] sm:$0xff]
    %v164 = vld [vmem:[#allocation5 + $0xf0] sm:$0xff]
    %v165 = vld [vmem:[#allocation5 + $0xf8] sm:$0xff]
    %v166 = vld [vmem:[#allocation7] sm:$0xff]
    %v167 = vld [vmem:[#allocation7 + $0x8] sm:$0xff]
    %v168 = vld [vmem:[#allocation7 + $0x10] sm:$0xff]
    %v169 = vld [vmem:[#allocation7 + $0x18] sm:$0xff]
    %v170 = vld [vmem:[#allocation7 + $0x20] sm:$0xff]
    %v171 = vld [vmem:[#allocation7 + $0x28] sm:$0xff]
    %v172 = vld [vmem:[#allocation7 + $0x30] sm:$0xff]
    %v173 = vld [vmem:[#allocation7 + $0x38] sm:$0xff]
    %v174 = vld [vmem:[#allocation7 + $0x40] sm:$0xff]
    %v175 = vld [vmem:[#allocation7 + $0x48] sm:$0xff]
    %v176 = vld [vmem:[#allocation7 + $0x50] sm:$0xff]
    %v177 = vld [vmem:[#allocation7 + $0x58] sm:$0xff]
    %v178 = vld [vmem:[#allocation7 + $0x60] sm:$0xff]
    %v179 = vld [vmem:[#allocation7 + $0x68] sm:$0xff]
    %v180 = vld [vmem:[#allocation7 + $0x70] sm:$0xff]
    %v181 = vld [vmem:[#allocation7 + $0x78] sm:$0xff]
    %v182 = vld [vmem:[#allocation8] sm:$0xff]
    %v183 = vld [vmem:[#allocation8 + $0x8] sm:$0xff]
    %v184 = vld [vmem:[#allocation8 + $0x10] sm:$0xff]
    %v185 = vld [vmem:[#allocation8 + $0x18] sm:$0xff]
    %v186 = vld [vmem:[#allocation8 + $0x20] sm:$0xff]
    %v187 = vld [vmem:[#allocation8 + $0x28] sm:$0xff]
    %v188 = vld [vmem:[#allocation8 + $0x30] sm:$0xff]
    %v189 = vld [vmem:[#allocation8 + $0x38] sm:$0xff]
    %v190 = vld [vmem:[#allocation8 + $0x40] sm:$0xff]
    %v191 = vld [vmem:[#allocation8 + $0x48] sm:$0xff]
    %v192 = vld [vmem:[#allocation8 + $0x50] sm:$0xff]
    %v193 = vld [vmem:[#allocation8 + $0x58] sm:$0xff]
    %v194 = vld [vmem:[#allocation8 + $0x60] sm:$0xff]
    %v195 = vld [vmem:[#allocation8 + $0x68] sm:$0xff]
    %v196 = vld [vmem:[#allocation8 + $0x70] sm:$0xff]
    %v197 = vld [vmem:[#allocation8 + $0x78] sm:$0xff]
    %v199 = vlaneseq
    %v200 = vshrl.u32 %v199, 7
    %v201 = vsub.s32 0, %v200
    %v202 = vrot.slane %v133, %v201
    %204 = vmatprep.subr.mxu0 0.0
    %205 = vmatpush1.msra.mxu0 %v101
    %206 = vmatprep.subr.mxu0 0.0
    %207 = vmatpush1.msra.mxu0 %v102
    %208 = vmatprep.subr.mxu0 0.0
    %209 = vmatpush1.msra.mxu0 %v103
    %210 = vmatprep.subr.mxu0 0.0
    %211 = vmatpush1.msra.mxu0 %v104
    %212 = vmatprep.subr.mxu0 0.0
    %213 = vmatpush1.msra.mxu0 %v105
    %214 = vmatprep.subr.mxu0 0.0
    %215 = vmatpush1.msra.mxu0 %v106
    %216 = vmatprep.subr.mxu0 0.0
    %217 = vmatpush1.msra.mxu0 %v107
    %218 = vmatprep.subr.mxu0 0.0
    %219 = vmatpush1.msra.mxu0 %v108
    %220 = vmatprep.subr.mxu0 0.0
    %221 = vmatpush1.msra.mxu0 %v109
    %222 = vmatprep.subr.mxu0 0.0
    %223 = vmatpush1.msra.mxu0 %v110
    %224 = vmatprep.subr.mxu0 0.0
    %225 = vmatpush1.msra.mxu0 %v111
    %226 = vmatprep.subr.mxu0 0.0
    %227 = vmatpush1.msra.mxu0 %v112
    %228 = vmatprep.subr.mxu0 0.0
    %229 = vmatpush1.msra.mxu0 %v113
    %230 = vmatprep.subr.mxu0 0.0
    %231 = vmatpush1.msra.mxu0 %v114
    %232 = vmatprep.subr.mxu0 0.0
    %233 = vmatpush1.msra.mxu0 %v115
    %234 = vmatprep.subr.mxu0 0.0
    %235 = vmatpush1.msra.mxu0 %v116
    %236 = vmatprep.subr.mxu0 0.0
    %237 = vmatpush1.msra.mxu0 %v117
    %238 = vmatprep.subr.mxu0 0.0
    %239 = vmatpush1.msra.mxu0 %v118
    %240 = vmatprep.subr.mxu0 0.0
    %241 = vmatpush1.msra.mxu0 %v119
    %242 = vmatprep.subr.mxu0 0.0
    %243 = vmatpush1.msra.mxu0 %v120
    %244 = vmatprep.subr.mxu0 0.0
    %245 = vmatpush1.msra.mxu0 %v121
    %246 = vmatprep.subr.mxu0 0.0
    %247 = vmatpush1.msra.mxu0 %v122
    %248 = vmatprep.subr.mxu0 0.0
    %249 = vmatpush1.msra.mxu0 %v123
    %250 = vmatprep.subr.mxu0 0.0
    %251 = vmatpush1.msra.mxu0 %v124
    %252 = vmatprep.subr.mxu0 0.0
    %253 = vmatpush1.msra.mxu0 %v125
    %254 = vmatprep.subr.mxu0 0.0
    %255 = vmatpush1.msra.mxu0 %v126
    %256 = vmatprep.subr.mxu0 0.0
    %257 = vmatpush1.msra.mxu0 %v127
    %258 = vmatprep.subr.mxu0 0.0
    %259 = vmatpush1.msra.mxu0 %v128
    %260 = vmatprep.subr.mxu0 0.0
    %261 = vmatpush1.msra.mxu0 %v129
    %262 = vmatprep.subr.mxu0 0.0
    %263 = vmatpush1.msra.mxu0 %v130
    %264 = vmatprep.subr.mxu0 0.0
    %265 = vmatpush1.msra.mxu0 %v131
    %266 = vmatprep.subr.mxu0 0.0
    %267 = vmatpush1.msra.mxu0 %v132
    %268 = vmatprep.mubr.f32.mxu0 %v100
    %269 = vmatmul.mubr.f32.gmra.mrb[0].mxu0 %v99
    %v270 = vpop.f32.mrb[0].mxu0
    %v271 = vadd.f32 %v202, %v270
    %v272 = vpop.f32.mrb[0].mxu0
    %273 = vdwg.mxu0
    %v274 = vmul.f32 %v271, 0.5
    %v275 = vtanh.pop %v274
    %v276 = vmul.f32 %v275, 0.5
    %v277 = vadd.f32 %v276, 0.5
    %v278 = vld [vmem:[%s5] sm:$0x1]
    %v280 = vlaneseq
    %v281 = vshrl.u32 %v280, 7
    %v282 = vsub.s32 0, %v281
    %v283 = vrot.slane %v278, %v282
    %v285 = vld [vmem:[#allocation10] sm:$0xff]
    %v286 = vld [vmem:[%s8] sm:$0xff]
    %287 = vmatprep.subr.mxu0 %v135
    %288 = vmatpush1.msra.mxu0 %v134
    %289 = vmatprep.subr.mxu0 %v137
    %290 = vmatpush1.msra.mxu0 %v136
    %291 = vmatprep.subr.mxu0 %v139
    %292 = vmatpush1.msra.mxu0 %v138
    %293 = vmatprep.subr.mxu0 %v141
    %294 = vmatpush1.msra.mxu0 %v140
    %295 = vmatprep.subr.mxu0 %v143
    %296 = vmatpush1.msra.mxu0 %v142
    %297 = vmatprep.subr.mxu0 %v145
    %298 = vmatpush1.msra.mxu0 %v144
    %299 = vmatprep.subr.mxu0 %v147
    %300 = vmatpush1.msra.mxu0 %v146
    %301 = vmatprep.subr.mxu0 %v149
    %302 = vmatpush1.msra.mxu0 %v148
    %303 = vmatprep.subr.mxu0 %v151
    %304 = vmatpush1.msra.mxu0 %v150
    %305 = vmatprep.subr.mxu0 %v153
    %306 = vmatpush1.msra.mxu0 %v152
    %307 = vmatprep.subr.mxu0 %v155
    %308 = vmatpush1.msra.mxu0 %v154
    %309 = vmatprep.subr.mxu0 %v157
    %310 = vmatpush1.msra.mxu0 %v156
    %311 = vmatprep.subr.mxu0 %v159
    %312 = vmatpush1.msra.mxu0 %v158
    %313 = vmatprep.subr.mxu0 %v161
    %314 = vmatpush1.msra.mxu0 %v160
    %315 = vmatprep.subr.mxu0 %v163
    %316 = vmatpush1.msra.mxu0 %v162
    %317 = vmatprep.subr.mxu0 %v165
    %318 = vmatpush1.msra.mxu0 %v164
    %319 = vmatprep.subr.mxu0 0.0
    %320 = vmatpush1.msra.mxu0 0.0
    %321 = vmatprep.subr.mxu0 0.0
    %322 = vmatpush1.msra.mxu0 0.0
    %323 = vmatprep.subr.mxu0 0.0
    %324 = vmatpush1.msra.mxu0 0.0
    %325 = vmatprep.subr.mxu0 0.0
    %326 = vmatpush1.msra.mxu0 0.0
    %327 = vmatprep.subr.mxu0 0.0
    %328 = vmatpush1.msra.mxu0 0.0
    %329 = vmatprep.subr.mxu0 0.0
    %330 = vmatpush1.msra.mxu0 0.0
    %331 = vmatprep.subr.mxu0 0.0
    %332 = vmatpush1.msra.mxu0 0.0
    %333 = vmatprep.subr.mxu0 0.0
    %334 = vmatpush1.msra.mxu0 0.0
    %335 = vmatprep.subr.mxu0 0.0
    %336 = vmatpush1.msra.mxu0 0.0
    %337 = vmatprep.subr.mxu0 0.0
    %338 = vmatpush1.msra.mxu0 0.0
    %339 = vmatprep.subr.mxu0 0.0
    %340 = vmatpush1.msra.mxu0 0.0
    %341 = vmatprep.subr.mxu0 0.0
    %342 = vmatpush1.msra.mxu0 0.0
    %343 = vmatprep.subr.mxu0 0.0
    %344 = vmatpush1.msra.mxu0 0.0
    %345 = vmatprep.subr.mxu0 0.0
    %346 = vmatpush1.msra.mxu0 0.0
    %347 = vmatprep.subr.mxu0 0.0
    %348 = vmatpush1.msra.mxu0 0.0
    %349 = vmatprep.subr.mxu0 0.0
    %350 = vmatpush1.msra.mxu0 0.0
    %351 = vmatprep.mubr.f32.mxu0 0.0
    %352 = vmatmul.mubr.f32.gmra.mrb[0].mxu0 %v285
    %v353 = vpop.f32.mrb[0].mxu0
    %v354 = vadd.f32 0.0, %v353
    %v355 = vpop.f32.mrb[0].mxu0
    %v356 = vadd.f32 0.0, %v355
    %357 = vdwg.mxu0
    %v358 = vadd.f32 %v354, %v283
    %v359 = vmul.f32 %v358, 0.5
    %v360 = vtanh.pop %v359
    %v361 = vmul.f32 %v360, 0.5
    %v362 = vadd.f32 %v361, 0.5
    %v363 = vsub.f32 %v285, %v277
    %v364 = vsub.f32 %v286, %v362
    %365 = vmatprep.subr.mxu0 0.0
    %366 = vmatpush1.msra.mxu0 %v182
    %367 = vmatprep.subr.mxu0 0.0
    %368 = vmatpush1.msra.mxu0 %v183
    %369 = vmatprep.subr.mxu0 0.0
    %370 = vmatpush1.msra.mxu0 %v184
    %371 = vmatprep.subr.mxu0 0.0
    %372 = vmatpush1.msra.mxu0 %v185
    %373 = vmatprep.subr.mxu0 0.0
    %374 = vmatpush1.msra.mxu0 %v186
    %375 = vmatprep.subr.mxu0 0.0
    %376 = vmatpush1.msra.mxu0 %v187
    %377 = vmatprep.subr.mxu0 0.0
    %378 = vmatpush1.msra.mxu0 %v188
    %379 = vmatprep.subr.mxu0 0.0
    %380 = vmatpush1.msra.mxu0 %v189
    %381 = vmatprep.subr.mxu0 0.0
    %382 = vmatpush1.msra.mxu0 %v190
    %383 = vmatprep.subr.mxu0 0.0
    %384 = vmatpush1.msra.mxu0 %v191
    %385 = vmatprep.subr.mxu0 0.0
    %386 = vmatpush1.msra.mxu0 %v192
    %387 = vmatprep.subr.mxu0 0.0
    %388 = vmatpush1.msra.mxu0 %v193
    %389 = vmatprep.subr.mxu0 0.0
    %390 = vmatpush1.msra.mxu0 %v194
    %391 = vmatprep.subr.mxu0 0.0
    %392 = vmatpush1.msra.mxu0 %v195
    %393 = vmatprep.subr.mxu0 0.0
    %394 = vmatpush1.msra.mxu0 %v196
    %395 = vmatprep.subr.mxu0 0.0
    %396 = vmatpush1.msra.mxu0 %v197
    %397 = vmatprep.subr.mxu0 0.0
    %398 = vmatpush1.msra.mxu0 0.0
    %399 = vmatprep.subr.mxu0 0.0
    %400 = vmatpush1.msra.mxu0 0.0
    %401 = vmatprep.subr.mxu0 0.0
    %402 = vmatpush1.msra.mxu0 0.0
    %403 = vmatprep.subr.mxu0 0.0
    %404 = vmatpush1.msra.mxu0 0.0
    %405 = vmatprep.subr.mxu0 0.0
    %406 = vmatpush1.msra.mxu0 0.0
    %407 = vmatprep.subr.mxu0 0.0
    %408 = vmatpush1.msra.mxu0 0.0
    %409 = vmatprep.subr.mxu0 0.0
    %410 = vmatpush1.msra.mxu0 0.0
    %411 = vmatprep.subr.mxu0 0.0
    %412 = vmatpush1.msra.mxu0 0.0
    %413 = vmatprep.subr.mxu0 0.0
    %414 = vmatpush1.msra.mxu0 0.0
    %415 = vmatprep.subr.mxu0 0.0
    %416 = vmatpush1.msra.mxu0 0.0
    %417 = vmatprep.subr.mxu0 0.0
    %418 = vmatpush1.msra.mxu0 0.0
    %419 = vmatprep.subr.mxu0 0.0
    %420 = vmatpush1.msra.mxu0 0.0
    %421 = vmatprep.subr.mxu0 0.0
    %422 = vmatpush1.msra.mxu0 0.0
    %423 = vmatprep.subr.mxu0 0.0
    %424 = vmatpush1.msra.mxu0 0.0
    %425 = vmatprep.subr.mxu0 0.0
    %426 = vmatpush1.msra.mxu0 0.0
    %427 = vmatprep.subr.mxu0 0.0
    %428 = vmatpush1.msra.mxu0 0.0
    %429 = vmatprep.mubr.f32.mxu0 0.0
    %430 = vmatmul.mubr.f32.gmra.mrb[0].mxu0 %v286
    %v431 = vpop.f32.mrb[0].mxu0
    %v432 = vadd.f32 0.0, %v431
    %v433 = vpop.f32.mrb[0].mxu0
    %434 = vdwg.mxu0
    %v435 = vadd.f32 %v364, %v432
    %436 = vmatprep.subr.mxu0 0.0
    %437 = vmatpush1.msra.mxu0 %v166
    %438 = vmatprep.subr.mxu0 0.0
    %439 = vmatpush1.msra.mxu0 %v167
    %440 = vmatprep.subr.mxu0 0.0
    %441 = vmatpush1.msra.mxu0 %v168
    %442 = vmatprep.subr.mxu0 0.0
    %443 = vmatpush1.msra.mxu0 %v169
    %444 = vmatprep.subr.mxu0 0.0
    %445 = vmatpush1.msra.mxu0 %v170
    %446 = vmatprep.subr.mxu0 0.0
    %447 = vmatpush1.msra.mxu0 %v171
    %448 = vmatprep.subr.mxu0 0.0
    %449 = vmatpush1.msra.mxu0 %v172
    %450 = vmatprep.subr.mxu0 0.0
    %451 = vmatpush1.msra.mxu0 %v173
    %452 = vmatprep.subr.mxu0 0.0
    %453 = vmatpush1.msra.mxu0 %v174
    %454 = vmatprep.subr.mxu0 0.0
    %455 = vmatpush1.msra.mxu0 %v175
    %456 = vmatprep.subr.mxu0 0.0
    %457 = vmatpush1.msra.mxu0 %v176
    %458 = vmatprep.subr.mxu0 0.0
    %459 = vmatpush1.msra.mxu0 %v177
    %460 = vmatprep.subr.mxu0 0.0
    %461 = vmatpush1.msra.mxu0 %v178
    %462 = vmatprep.subr.mxu0 0.0
    %463 = vmatpush1.msra.mxu0 %v179
    %464 = vmatprep.subr.mxu0 0.0
    %465 = vmatpush1.msra.mxu0 %v180
    %466 = vmatprep.subr.mxu0 0.0
    %467 = vmatpush1.msra.mxu0 %v181
    %468 = vmatprep.subr.mxu0 0.0
    %469 = vmatpush1.msra.mxu0 0.0
    %470 = vmatprep.subr.mxu0 0.0
    %471 = vmatpush1.msra.mxu0 0.0
    %472 = vmatprep.subr.mxu0 0.0
    %473 = vmatpush1.msra.mxu0 0.0
    %474 = vmatprep.subr.mxu0 0.0
    %475 = vmatpush1.msra.mxu0 0.0
    %476 = vmatprep.subr.mxu0 0.0
    %477 = vmatpush1.msra.mxu0 0.0
    %478 = vmatprep.subr.mxu0 0.0
    %479 = vmatpush1.msra.mxu0 0.0
    %480 = vmatprep.subr.mxu0 0.0
    %481 = vmatpush1.msra.mxu0 0.0
    %482 = vmatprep.subr.mxu0 0.0
    %483 = vmatpush1.msra.mxu0 0.0
    %484 = vmatprep.subr.mxu0 0.0
    %485 = vmatpush1.msra.mxu0 0.0
    %486 = vmatprep.subr.mxu0 0.0
    %487 = vmatpush1.msra.mxu0 0.0
    %488 = vmatprep.subr.mxu0 0.0
    %489 = vmatpush1.msra.mxu0 0.0
    %490 = vmatprep.subr.mxu0 0.0
    %491 = vmatpush1.msra.mxu0 0.0
    %492 = vmatprep.subr.mxu0 0.0
    %493 = vmatpush1.msra.mxu0 0.0
    %494 = vmatprep.subr.mxu0 0.0
    %495 = vmatpush1.msra.mxu0 0.0
    %496 = vmatprep.subr.mxu0 0.0
    %497 = vmatpush1.msra.mxu0 0.0
    %498 = vmatprep.subr.mxu0 0.0
    %499 = vmatpush1.msra.mxu0 0.0
    %500 = vmatprep.mubr.f32.mxu0 0.0
    %501 = vmatmul.mubr.f32.gmra.mrb[0].mxu0 %v435
    %v502 = vpop.f32.mrb[0].mxu0
    %v503 = vadd.f32 0.0, %v502
    %v504 = vpop.f32.mrb[0].mxu0
    %505 = vdwg.mxu0
    %v506 = vadd.f32 %v363, %v503
    %v507 = vadd.f32 %v506, %v356
    %v508 = vmul.f32 %v507, 0.1
    %v509 = vsub.f32 %v285, %v508
    %v510 = vmul.f32 %v435, 0.1
    %v511 = vsub.f32 %v286, %v510
    %512 = vmatprep.subr.mxu0 %v135
    %513 = vmatpush1.msra.mxu0 %v134
    %514 = vmatprep.subr.mxu0 %v137
    %515 = vmatpush1.msra.mxu0 %v136
    %516 = vmatprep.subr.mxu0 %v139
    %517 = vmatpush1.msra.mxu0 %v138
    %518 = vmatprep.subr.mxu0 %v141
    %519 = vmatpush1.msra.mxu0 %v140
    %520 = vmatprep.subr.mxu0 %v143
    %521 = vmatpush1.msra.mxu0 %v142
    %522 = vmatprep.subr.mxu0 %v145
    %523 = vmatpush1.msra.mxu0 %v144
    %524 = vmatprep.subr.mxu0 %v147
    %525 = vmatpush1.msra.mxu0 %v146
    %526 = vmatprep.subr.mxu0 %v149
    %527 = vmatpush1.msra.mxu0 %v148
    %528 = vmatprep.subr.mxu0 %v151
    %529 = vmatpush1.msra.mxu0 %v150
    %530 = vmatprep.subr.mxu0 %v153
    %531 = vmatpush1.msra.mxu0 %v152
    %532 = vmatprep.subr.mxu0 %v155
    %533 = vmatpush1.msra.mxu0 %v154
    %534 = vmatprep.subr.mxu0 %v157
    %535 = vmatpush1.msra.mxu0 %v156
    %536 = vmatprep.subr.mxu0 %v159
    %537 = vmatpush1.msra.mxu0 %v158
    %538 = vmatprep.subr.mxu0 %v161
    %539 = vmatpush1.msra.mxu0 %v160
    %540 = vmatprep.subr.mxu0 %v163
    %541 = vmatpush1.msra.mxu0 %v162
    %542 = vmatprep.subr.mxu0 %v165
    %543 = vmatpush1.msra.mxu0 %v164
    %544 = vmatprep.subr.mxu0 0.0
    %545 = vmatpush1.msra.mxu0 0.0
    %546 = vmatprep.subr.mxu0 0.0
    %547 = vmatpush1.msra.mxu0 0.0
    %548 = vmatprep.subr.mxu0 0.0
    %549 = vmatpush1.msra.mxu0 0.0
    %550 = vmatprep.subr.mxu0 0.0
    %551 = vmatpush1.msra.mxu0 0.0
    %552 = vmatprep.subr.mxu0 0.0
    %553 = vmatpush1.msra.mxu0 0.0
    %554 = vmatprep.subr.mxu0 0.0
    %555 = vmatpush1.msra.mxu0 0.0
    %556 = vmatprep.subr.mxu0 0.0
    %557 = vmatpush1.msra.mxu0 0.0
    %558 = vmatprep.subr.mxu0 0.0
    %559 = vmatpush1.msra.mxu0 0.0
    %560 = vmatprep.subr.mxu0 0.0
    %561 = vmatpush1.msra.mxu0 0.0
    %562 = vmatprep.subr.mxu0 0.0
    %563 = vmatpush1.msra.mxu0 0.0
    %564 = vmatprep.subr.mxu0 0.0
    %565 = vmatpush1.msra.mxu0 0.0
    %566 = vmatprep.subr.mxu0 0.0
    %567 = vmatpush1.msra.mxu0 0.0
    %568 = vmatprep.subr.mxu0 0.0
    %569 = vmatpush1.msra.mxu0 0.0
    %570 = vmatprep.subr.mxu0 0.0
    %571 = vmatpush1.msra.mxu0 0.0
    %572 = vmatprep.subr.mxu0 0.0
    %573 = vmatpush1.msra.mxu0 0.0
    %574 = vmatprep.subr.mxu0 0.0
    %575 = vmatpush1.msra.mxu0 0.0
    %576 = vmatprep.mubr.f32.mxu0 0.0
    %577 = vmatmul.mubr.f32.gmra.mrb[0].mxu0 %v509
    %v578 = vpop.f32.mrb[0].mxu0
    %v579 = vadd.f32 0.0, %v578
    %v580 = vpop.f32.mrb[0].mxu0
    %v581 = vadd.f32 0.0, %v580
    %582 = vdwg.mxu0
    %v583 = vadd.f32 %v579, %v283
    %v584 = vmul.f32 %v583, 0.5
    %v585 = vtanh.pop %v584
    %v586 = vmul.f32 %v585, 0.5
    %v587 = vadd.f32 %v586, 0.5
    %v588 = vsub.f32 %v509, %v277
    %v589 = vsub.f32 %v511, %v587
    %590 = vmatprep.subr.mxu0 0.0
    %591 = vmatpush1.msra.mxu0 %v182
    %592 = vmatprep.subr.mxu0 0.0
    %593 = vmatpush1.msra.mxu0 %v183
    %594 = vmatprep.subr.mxu0 0.0
    %595 = vmatpush1.msra.mxu0 %v184
    %596 = vmatprep.subr.mxu0 0.0
    %597 = vmatpush1.msra.mxu0 %v185
    %598 = vmatprep.subr.mxu0 0.0
    %599 = vmatpush1.msra.mxu0 %v186
    %600 = vmatprep.subr.mxu0 0.0
    %601 = vmatpush1.msra.mxu0 %v187
    %602 = vmatprep.subr.mxu0 0.0
    %603 = vmatpush1.msra.mxu0 %v188
    %604 = vmatprep.subr.mxu0 0.0
    %605 = vmatpush1.msra.mxu0 %v189
    %606 = vmatprep.subr.mxu0 0.0
    %607 = vmatpush1.msra.mxu0 %v190
    %608 = vmatprep.subr.mxu0 0.0
    %609 = vmatpush1.msra.mxu0 %v191
    %610 = vmatprep.subr.mxu0 0.0
    %611 = vmatpush1.msra.mxu0 %v192
    %612 = vmatprep.subr.mxu0 0.0
    %613 = vmatpush1.msra.mxu0 %v193
    %614 = vmatprep.subr.mxu0 0.0
    %615 = vmatpush1.msra.mxu0 %v194
    %616 = vmatprep.subr.mxu0 0.0
    %617 = vmatpush1.msra.mxu0 %v195
    %618 = vmatprep.subr.mxu0 0.0
    %619 = vmatpush1.msra.mxu0 %v196
    %620 = vmatprep.subr.mxu0 0.0
    %621 = vmatpush1.msra.mxu0 %v197
    %622 = vmatprep.subr.mxu0 0.0
    %623 = vmatpush1.msra.mxu0 0.0
    %624 = vmatprep.subr.mxu0 0.0
    %625 = vmatpush1.msra.mxu0 0.0
    %626 = vmatprep.subr.mxu0 0.0
    %627 = vmatpush1.msra.mxu0 0.0
    %628 = vmatprep.subr.mxu0 0.0
    %629 = vmatpush1.msra.mxu0 0.0
    %630 = vmatprep.subr.mxu0 0.0
    %631 = vmatpush1.msra.mxu0 0.0
    %632 = vmatprep.subr.mxu0 0.0
    %633 = vmatpush1.msra.mxu0 0.0
    %634 = vmatprep.subr.mxu0 0.0
    %635 = vmatpush1.msra.mxu0 0.0
    %636 = vmatprep.subr.mxu0 0.0
    %637 = vmatpush1.msra.mxu0 0.0
    %638 = vmatprep.subr.mxu0 0.0
    %639 = vmatpush1.msra.mxu0 0.0
    %640 = vmatprep.subr.mxu0 0.0
    %641 = vmatpush1.msra.mxu0 0.0
    %642 = vmatprep.subr.mxu0 0.0
    %643 = vmatpush1.msra.mxu0 0.0
    %644 = vmatprep.subr.mxu0 0.0
    %645 = vmatpush1.msra.mxu0 0.0
    %646 = vmatprep.subr.mxu0 0.0
    %647 = vmatpush1.msra.mxu0 0.0
    %648 = vmatprep.subr.mxu0 0.0
    %649 = vmatpush1.msra.mxu0 0.0
    %650 = vmatprep.subr.mxu0 0.0
    %651 = vmatpush1.msra.mxu0 0.0
    %652 = vmatprep.subr.mxu0 0.0
    %653 = vmatpush1.msra.mxu0 0.0
    %654 = vmatprep.mubr.f32.mxu0 0.0
    %655 = vmatmul.mubr.f32.gmra.mrb[0].mxu0 %v511
    %v656 = vpop.f32.mrb[0].mxu0
    %v657 = vadd.f32 0.0, %v656
    %v658 = vpop.f32.mrb[0].mxu0
    %659 = vdwg.mxu0
    %v660 = vadd.f32 %v589, %v657
    %661 = vmatprep.subr.mxu0 0.0
    %662 = vmatpush1.msra.mxu0 %v166
    %663 = vmatprep.subr.mxu0 0.0
    %664 = vmatpush1.msra.mxu0 %v167
    %665 = vmatprep.subr.mxu0 0.0
    %666 = vmatpush1.msra.mxu0 %v168
    %667 = vmatprep.subr.mxu0 0.0
    %668 = vmatpush1.msra.mxu0 %v169
    %669 = vmatprep.subr.mxu0 0.0
    %670 = vmatpush1.msra.mxu0 %v170
    %671 = vmatprep.subr.mxu0 0.0
    %672 = vmatpush1.msra.mxu0 %v171
    %673 = vmatprep.subr.mxu0 0.0
    %674 = vmatpush1.msra.mxu0 %v172
    %675 = vmatprep.subr.mxu0 0.0
    %676 = vmatpush1.msra.mxu0 %v173
    %677 = vmatprep.subr.mxu0 0.0
    %678 = vmatpush1.msra.mxu0 %v174
    %679 = vmatprep.subr.mxu0 0.0
    %680 = vmatpush1.msra.mxu0 %v175
    %681 = vmatprep.subr.mxu0 0.0
    %682 = vmatpush1.msra.mxu0 %v176
    %683 = vmatprep.subr.mxu0 0.0
    %684 = vmatpush1.msra.mxu0 %v177
    %685 = vmatprep.subr.mxu0 0.0
    %686 = vmatpush1.msra.mxu0 %v178
    %687 = vmatprep.subr.mxu0 0.0
    %688 = vmatpush1.msra.mxu0 %v179
    %689 = vmatprep.subr.mxu0 0.0
    %690 = vmatpush1.msra.mxu0 %v180
    %691 = vmatprep.subr.mxu0 0.0
    %692 = vmatpush1.msra.mxu0 %v181
    %693 = vmatprep.subr.mxu0 0.0
    %694 = vmatpush1.msra.mxu0 0.0
    %695 = vmatprep.subr.mxu0 0.0
    %696 = vmatpush1.msra.mxu0 0.0
    %697 = vmatprep.subr.mxu0 0.0
    %698 = vmatpush1.msra.mxu0 0.0
    %699 = vmatprep.subr.mxu0 0.0
    %700 = vmatpush1.msra.mxu0 0.0
    %701 = vmatprep.subr.mxu0 0.0
    %702 = vmatpush1.msra.mxu0 0.0
    %703 = vmatprep.subr.mxu0 0.0
    %704 = vmatpush1.msra.mxu0 0.0
    %705 = vmatprep.subr.mxu0 0.0
    %706 = vmatpush1.msra.mxu0 0.0
    %707 = vmatprep.subr.mxu0 0.0
    %708 = vmatpush1.msra.mxu0 0.0
    %709 = vmatprep.subr.mxu0 0.0
    %710 = vmatpush1.msra.mxu0 0.0
    %711 = vmatprep.subr.mxu0 0.0
    %712 = vmatpush1.msra.mxu0 0.0
    %713 = vmatprep.subr.mxu0 0.0
    %714 = vmatpush1.msra.mxu0 0.0
    %715 = vmatprep.subr.mxu0 0.0
    %716 = vmatpush1.msra.mxu0 0.0
    %717 = vmatprep.subr.mxu0 0.0
    %718 = vmatpush1.msra.mxu0 0.0
    %719 = vmatprep.subr.mxu0 0.0
    %720 = vmatpush1.msra.mxu0 0.0
    %721 = vmatprep.subr.mxu0 0.0
    %722 = vmatpush1.msra.mxu0 0.0
    %723 = vmatprep.subr.mxu0 0.0
    %724 = vmatpush1.msra.mxu0 0.0
    %725 = vmatprep.mubr.f32.mxu0 0.0
    %726 = vmatmul.mubr.f32.gmra.mrb[0].mxu0 %v660
    %v727 = vpop.f32.mrb[0].mxu0
    %v728 = vadd.f32 0.0, %v727
    %v729 = vpop.f32.mrb[0].mxu0
    %730 = vdwg.mxu0
    %v731 = vadd.f32 %v588, %v728
    %v732 = vadd.f32 %v731, %v581
    %v733 = vmul.f32 %v732, 0.1
    %v734 = vsub.f32 %v509, %v733
    %v735 = vmul.f32 %v660, 0.1
    %v736 = vsub.f32 %v511, %v735
    %737 = vmatprep.subr.mxu0 %v135
    %738 = vmatpush1.msra.mxu0 %v134
    %739 = vmatprep.subr.mxu0 %v137
    %740 = vmatpush1.msra.mxu0 %v136
    %741 = vmatprep.subr.mxu0 %v139
    %742 = vmatpush1.msra.mxu0 %v138
    %743 = vmatprep.subr.mxu0 %v141
    %744 = vmatpush1.msra.mxu0 %v140
    %745 = vmatprep.subr.mxu0 %v143
    %746 = vmatpush1.msra.mxu0 %v142
    %747 = vmatprep.subr.mxu0 %v145
    %748 = vmatpush1.msra.mxu0 %v144
    %749 = vmatprep.subr.mxu0 %v147
    %750 = vmatpush1.msra.mxu0 %v146
    %751 = vmatprep.subr.mxu0 %v149
    %752 = vmatpush1.msra.mxu0 %v148
    %753 = vmatprep.subr.mxu0 %v151
    %754 = vmatpush1.msra.mxu0 %v150
    %755 = vmatprep.subr.mxu0 %v153
    %756 = vmatpush1.msra.mxu0 %v152
    %757 = vmatprep.subr.mxu0 %v155
    %758 = vmatpush1.msra.mxu0 %v154
    %759 = vmatprep.subr.mxu0 %v157
    %760 = vmatpush1.msra.mxu0 %v156
    %761 = vmatprep.subr.mxu0 %v159
    %762 = vmatpush1.msra.mxu0 %v158
    %763 = vmatprep.subr.mxu0 %v161
    %764 = vmatpush1.msra.mxu0 %v160
    %765 = vmatprep.subr.mxu0 %v163
    %766 = vmatpush1.msra.mxu0 %v162
    %767 = vmatprep.subr.mxu0 %v165
    %768 = vmatpush1.msra.mxu0 %v164
    %769 = vmatprep.subr.mxu0 0.0
    %770 = vmatpush1.msra.mxu0 0.0
    %771 = vmatprep.subr.mxu0 0.0
    %772 = vmatpush1.msra.mxu0 0.0
    %773 = vmatprep.subr.mxu0 0.0
    %774 = vmatpush1.msra.mxu0 0.0
    %775 = vmatprep.subr.mxu0 0.0
    %776 = vmatpush1.msra.mxu0 0.0
    %777 = vmatprep.subr.mxu0 0.0
    %778 = vmatpush1.msra.mxu0 0.0
    %779 = vmatprep.subr.mxu0 0.0
    %780 = vmatpush1.msra.mxu0 0.0
    %781 = vmatprep.subr.mxu0 0.0
    %782 = vmatpush1.msra.mxu0 0.0
    %783 = vmatprep.subr.mxu0 0.0
    %784 = vmatpush1.msra.mxu0 0.0
    %785 = vmatprep.subr.mxu0 0.0
    %786 = vmatpush1.msra.mxu0 0.0
    %787 = vmatprep.subr.mxu0 0.0
    %788 = vmatpush1.msra.mxu0 0.0
    %789 = vmatprep.subr.mxu0 0.0
    %790 = vmatpush1.msra.mxu0 0.0
    %791 = vmatprep.subr.mxu0 0.0
    %792 = vmatpush1.msra.mxu0 0.0
    %793 = vmatprep.subr.mxu0 0.0
    %794 = vmatpush1.msra.mxu0 0.0
    %795 = vmatprep.subr.mxu0 0.0
    %796 = vmatpush1.msra.mxu0 0.0
    %797 = vmatprep.subr.mxu0 0.0
    %798 = vmatpush1.msra.mxu0 0.0
    %799 = vmatprep.subr.mxu0 0.0
    %800 = vmatpush1.msra.mxu0 0.0
    %801 = vmatprep.mubr.f32.mxu0 0.0
    %802 = vmatmul.mubr.f32.gmra.mrb[0].mxu0 %v734
    %v803 = vpop.f32.mrb[0].mxu0
    %v804 = vadd.f32 0.0, %v803
    %v805 = vpop.f32.mrb[0].mxu0
    %v806 = vadd.f32 0.0, %v805
    %807 = vdwg.mxu0
    %v808 = vadd.f32 %v804, %v283
    %v809 = vmul.f32 %v808, 0.5
    %v810 = vtanh.pop %v809
    %v811 = vmul.f32 %v810, 0.5
    %v812 = vadd.f32 %v811, 0.5
    %v813 = vsub.f32 %v734, %v277
    %v814 = vsub.f32 %v736, %v812
    %815 = vmatprep.subr.mxu0 0.0
    %816 = vmatpush1.msra.mxu0 %v182
    %817 = vmatprep.subr.mxu0 0.0
    %818 = vmatpush1.msra.mxu0 %v183
    %819 = vmatprep.subr.mxu0 0.0
    %820 = vmatpush1.msra.mxu0 %v184
    %821 = vmatprep.subr.mxu0 0.0
    %822 = vmatpush1.msra.mxu0 %v185
    %823 = vmatprep.subr.mxu0 0.0
    %824 = vmatpush1.msra.mxu0 %v186
    %825 = vmatprep.subr.mxu0 0.0
    %826 = vmatpush1.msra.mxu0 %v187
    %827 = vmatprep.subr.mxu0 0.0
    %828 = vmatpush1.msra.mxu0 %v188
    %829 = vmatprep.subr.mxu0 0.0
    %830 = vmatpush1.msra.mxu0 %v189
    %831 = vmatprep.subr.mxu0 0.0
    %832 = vmatpush1.msra.mxu0 %v190
    %833 = vmatprep.subr.mxu0 0.0
    %834 = vmatpush1.msra.mxu0 %v191
    %835 = vmatprep.subr.mxu0 0.0
    %836 = vmatpush1.msra.mxu0 %v192
    %837 = vmatprep.subr.mxu0 0.0
    %838 = vmatpush1.msra.mxu0 %v193
    %839 = vmatprep.subr.mxu0 0.0
    %840 = vmatpush1.msra.mxu0 %v194
    %841 = vmatprep.subr.mxu0 0.0
    %842 = vmatpush1.msra.mxu0 %v195
    %843 = vmatprep.subr.mxu0 0.0
    %844 = vmatpush1.msra.mxu0 %v196
    %845 = vmatprep.subr.mxu0 0.0
    %846 = vmatpush1.msra.mxu0 %v197
    %847 = vmatprep.subr.mxu0 0.0
    %848 = vmatpush1.msra.mxu0 0.0
    %849 = vmatprep.subr.mxu0 0.0
    %850 = vmatpush1.msra.mxu0 0.0
    %851 = vmatprep.subr.mxu0 0.0
    %852 = vmatpush1.msra.mxu0 0.0
    %853 = vmatprep.subr.mxu0 0.0
    %854 = vmatpush1.msra.mxu0 0.0
    %855 = vmatprep.subr.mxu0 0.0
    %856 = vmatpush1.msra.mxu0 0.0
    %857 = vmatprep.subr.mxu0 0.0
    %858 = vmatpush1.msra.mxu0 0.0
    %859 = vmatprep.subr.mxu0 0.0
    %860 = vmatpush1.msra.mxu0 0.0
    %861 = vmatprep.subr.mxu0 0.0
    %862 = vmatpush1.msra.mxu0 0.0
    %863 = vmatprep.subr.mxu0 0.0
    %864 = vmatpush1.msra.mxu0 0.0
    %865 = vmatprep.subr.mxu0 0.0
    %866 = vmatpush1.msra.mxu0 0.0
    %867 = vmatprep.subr.mxu0 0.0
    %868 = vmatpush1.msra.mxu0 0.0
    %869 = vmatprep.subr.mxu0 0.0
    %870 = vmatpush1.msra.mxu0 0.0
    %871 = vmatprep.subr.mxu0 0.0
    %872 = vmatpush1.msra.mxu0 0.0
    %873 = vmatprep.subr.mxu0 0.0
    %874 = vmatpush1.msra.mxu0 0.0
    %875 = vmatprep.subr.mxu0 0.0
    %876 = vmatpush1.msra.mxu0 0.0
    %877 = vmatprep.subr.mxu0 0.0
    %878 = vmatpush1.msra.mxu0 0.0
    %879 = vmatprep.mubr.f32.mxu0 0.0
    %880 = vmatmul.mubr.f32.gmra.mrb[0].mxu0 %v736
    %v881 = vpop.f32.mrb[0].mxu0
    %v882 = vadd.f32 0.0, %v881
    %v883 = vpop.f32.mrb[0].mxu0
    %884 = vdwg.mxu0
    %v885 = vadd.f32 %v814, %v882
    %886 = vmatprep.subr.mxu0 0.0
    %887 = vmatpush1.msra.mxu0 %v166
    %888 = vmatprep.subr.mxu0 0.0
    %889 = vmatpush1.msra.mxu0 %v167
    %890 = vmatprep.subr.mxu0 0.0
    %891 = vmatpush1.msra.mxu0 %v168
    %892 = vmatprep.subr.mxu0 0.0
    %893 = vmatpush1.msra.mxu0 %v169
    %894 = vmatprep.subr.mxu0 0.0
    %895 = vmatpush1.msra.mxu0 %v170
    %896 = vmatprep.subr.mxu0 0.0
    %897 = vmatpush1.msra.mxu0 %v171
    %898 = vmatprep.subr.mxu0 0.0
    %899 = vmatpush1.msra.mxu0 %v172
    %900 = vmatprep.subr.mxu0 0.0
    %901 = vmatpush1.msra.mxu0 %v173
    %902 = vmatprep.subr.mxu0 0.0
    %903 = vmatpush1.msra.mxu0 %v174
    %904 = vmatprep.subr.mxu0 0.0
    %905 = vmatpush1.msra.mxu0 %v175
    %906 = vmatprep.subr.mxu0 0.0
    %907 = vmatpush1.msra.mxu0 %v176
    %908 = vmatprep.subr.mxu0 0.0
    %909 = vmatpush1.msra.mxu0 %v177
    %910 = vmatprep.subr.mxu0 0.0
    %911 = vmatpush1.msra.mxu0 %v178
    %912 = vmatprep.subr.mxu0 0.0
    %913 = vmatpush1.msra.mxu0 %v179
    %914 = vmatprep.subr.mxu0 0.0
    %915 = vmatpush1.msra.mxu0 %v180
    %916 = vmatprep.subr.mxu0 0.0
    %917 = vmatpush1.msra.mxu0 %v181
    %918 = vmatprep.subr.mxu0 0.0
    %919 = vmatpush1.msra.mxu0 0.0
    %920 = vmatprep.subr.mxu0 0.0
    %921 = vmatpush1.msra.mxu0 0.0
    %922 = vmatprep.subr.mxu0 0.0
    %923 = vmatpush1.msra.mxu0 0.0
    %924 = vmatprep.subr.mxu0 0.0
    %925 = vmatpush1.msra.mxu0 0.0
    %926 = vmatprep.subr.mxu0 0.0
    %927 = vmatpush1.msra.mxu0 0.0
    %928 = vmatprep.subr.mxu0 0.0
    %929 = vmatpush1.msra.mxu0 0.0
    %930 = vmatprep.subr.mxu0 0.0
    %931 = vmatpush1.msra.mxu0 0.0
    %932 = vmatprep.subr.mxu0 0.0
    %933 = vmatpush1.msra.mxu0 0.0
    %934 = vmatprep.subr.mxu0 0.0
    %935 = vmatpush1.msra.mxu0 0.0
    %936 = vmatprep.subr.mxu0 0.0
    %937 = vmatpush1.msra.mxu0 0.0
    %938 = vmatprep.subr.mxu0 0.0
    %939 = vmatpush1.msra.mxu0 0.0
    %940 = vmatprep.subr.mxu0 0.0
    %941 = vmatpush1.msra.mxu0 0.0
    %942 = vmatprep.subr.mxu0 0.0
    %943 = vmatpush1.msra.mxu0 0.0
    %944 = vmatprep.subr.mxu0 0.0
    %945 = vmatpush1.msra.mxu0 0.0
    %946 = vmatprep.subr.mxu0 0.0
    %947 = vmatpush1.msra.mxu0 0.0
    %948 = vmatprep.subr.mxu0 0.0
    %949 = vmatpush1.msra.mxu0 0.0
    %950 = vmatprep.mubr.f32.mxu0 0.0
    %951 = vmatmul.mubr.f32.gmra.mrb[0].mxu0 %v885
    %v952 = vpop.f32.mrb[0].mxu0
    %v953 = vadd.f32 0.0, %v952
    %v954 = vpop.f32.mrb[0].mxu0
    %955 = vdwg.mxu0
    %v956 = vadd.f32 %v813, %v953
    %v957 = vadd.f32 %v956, %v806
    %v958 = vmul.f32 %v957, 0.1
    %v959 = vsub.f32 %v734, %v958
    %v960 = vmul.f32 %v885, 0.1
    %v961 = vsub.f32 %v736, %v960
    %962 = vmatprep.subr.mxu0 %v135
    %963 = vmatpush1.msra.mxu0 %v134
    %964 = vmatprep.subr.mxu0 %v137
    %965 = vmatpush1.msra.mxu0 %v136
    %966 = vmatprep.subr.mxu0 %v139
    %967 = vmatpush1.msra.mxu0 %v138
    %968 = vmatprep.subr.mxu0 %v141
    %969 = vmatpush1.msra.mxu0 %v140
    %970 = vmatprep.subr.mxu0 %v143
    %971 = vmatpush1.msra.mxu0 %v142
    %972 = vmatprep.subr.mxu0 %v145
    %973 = vmatpush1.msra.mxu0 %v144
    %974 = vmatprep.subr.mxu0 %v147
    %975 = vmatpush1.msra.mxu0 %v146
    %976 = vmatprep.subr.mxu0 %v149
    %977 = vmatpush1.msra.mxu0 %v148
    %978 = vmatprep.subr.mxu0 %v151
    %979 = vmatpush1.msra.mxu0 %v150
    %980 = vmatprep.subr.mxu0 %v153
    %981 = vmatpush1.msra.mxu0 %v152
    %982 = vmatprep.subr.mxu0 %v155
    %983 = vmatpush1.msra.mxu0 %v154
    %984 = vmatprep.subr.mxu0 %v157
    %985 = vmatpush1.msra.mxu0 %v156
    %986 = vmatprep.subr.mxu0 %v159
    %987 = vmatpush1.msra.mxu0 %v158
    %988 = vmatprep.subr.mxu0 %v161
    %989 = vmatpush1.msra.mxu0 %v160
    %990 = vmatprep.subr.mxu0 %v163
    %991 = vmatpush1.msra.mxu0 %v162
    %992 = vmatprep.subr.mxu0 %v165
    %993 = vmatpush1.msra.mxu0 %v164
    %994 = vmatprep.subr.mxu0 0.0
    %995 = vmatpush1.msra.mxu0 0.0
    %996 = vmatprep.subr.mxu0 0.0
    %997 = vmatpush1.msra.mxu0 0.0
    %998 = vmatprep.subr.mxu0 0.0
    %999 = vmatpush1.msra.mxu0 0.0
    %1000 = vmatprep.subr.mxu0 0.0
    %1001 = vmatpush1.msra.mxu0 0.0
    %1002 = vmatprep.subr.mxu0 0.0
    %1003 = vmatpush1.msra.mxu0 0.0
    %1004 = vmatprep.subr.mxu0 0.0
    %1005 = vmatpush1.msra.mxu0 0.0
    %1006 = vmatprep.subr.mxu0 0.0
    %1007 = vmatpush1.msra.mxu0 0.0
    %1008 = vmatprep.subr.mxu0 0.0
    %1009 = vmatpush1.msra.mxu0 0.0
    %1010 = vmatprep.subr.mxu0 0.0
    %1011 = vmatpush1.msra.mxu0 0.0
    %1012 = vmatprep.subr.mxu0 0.0
    %1013 = vmatpush1.msra.mxu0 0.0
    %1014 = vmatprep.subr.mxu0 0.0
    %1015 = vmatpush1.msra.mxu0 0.0
    %1016 = vmatprep.subr.mxu0 0.0
    %1017 = vmatpush1.msra.mxu0 0.0
    %1018 = vmatprep.subr.mxu0 0.0
    %1019 = vmatpush1.msra.mxu0 0.0
    %1020 = vmatprep.subr.mxu0 0.0
    %1021 = vmatpush1.msra.mxu0 0.0
    %1022 = vmatprep.subr.mxu0 0.0
    %1023 = vmatpush1.msra.mxu0 0.0
    %1024 = vmatprep.subr.mxu0 0.0
    %1025 = vmatpush1.msra.mxu0 0.0
    %1026 = vmatprep.mubr.f32.mxu0 0.0
    %1027 = vmatmul.mubr.f32.gmra.mrb[0].mxu0 %v959
    %v1028 = vpop.f32.mrb[0].mxu0
    %v1029 = vadd.f32 0.0, %v1028
    %v1030 = vpop.f32.mrb[0].mxu0
    %v1031 = vadd.f32 0.0, %v1030
    %1032 = vdwg.mxu0
    %v1033 = vadd.f32 %v1029, %v283
    %v1034 = vmul.f32 %v1033, 0.5
    %v1035 = vtanh.pop %v1034
    %v1036 = vmul.f32 %v1035, 0.5
    %v1037 = vadd.f32 %v1036, 0.5
    %v1038 = vsub.f32 %v959, %v277
    %v1039 = vsub.f32 %v961, %v1037
    %1040 = vmatprep.subr.mxu0 0.0
    %1041 = vmatpush1.msra.mxu0 %v182
    %1042 = vmatprep.subr.mxu0 0.0
    %1043 = vmatpush1.msra.mxu0 %v183
    %1044 = vmatprep.subr.mxu0 0.0
    %1045 = vmatpush1.msra.mxu0 %v184
    %1046 = vmatprep.subr.mxu0 0.0
    %1047 = vmatpush1.msra.mxu0 %v185
    %1048 = vmatprep.subr.mxu0 0.0
    %1049 = vmatpush1.msra.mxu0 %v186
    %1050 = vmatprep.subr.mxu0 0.0
    %1051 = vmatpush1.msra.mxu0 %v187
    %1052 = vmatprep.subr.mxu0 0.0
    %1053 = vmatpush1.msra.mxu0 %v188
    %1054 = vmatprep.subr.mxu0 0.0
    %1055 = vmatpush1.msra.mxu0 %v189
    %1056 = vmatprep.subr.mxu0 0.0
    %1057 = vmatpush1.msra.mxu0 %v190
    %1058 = vmatprep.subr.mxu0 0.0
    %1059 = vmatpush1.msra.mxu0 %v191
    %1060 = vmatprep.subr.mxu0 0.0
    %1061 = vmatpush1.msra.mxu0 %v192
    %1062 = vmatprep.subr.mxu0 0.0
    %1063 = vmatpush1.msra.mxu0 %v193
    %1064 = vmatprep.subr.mxu0 0.0
    %1065 = vmatpush1.msra.mxu0 %v194
    %1066 = vmatprep.subr.mxu0 0.0
    %1067 = vmatpush1.msra.mxu0 %v195
    %1068 = vmatprep.subr.mxu0 0.0
    %1069 = vmatpush1.msra.mxu0 %v196
    %1070 = vmatprep.subr.mxu0 0.0
    %1071 = vmatpush1.msra.mxu0 %v197
    %1072 = vmatprep.subr.mxu0 0.0
    %1073 = vmatpush1.msra.mxu0 0.0
    %1074 = vmatprep.subr.mxu0 0.0
    %1075 = vmatpush1.msra.mxu0 0.0
    %1076 = vmatprep.subr.mxu0 0.0
    %1077 = vmatpush1.msra.mxu0 0.0
    %1078 = vmatprep.subr.mxu0 0.0
    %1079 = vmatpush1.msra.mxu0 0.0
    %1080 = vmatprep.subr.mxu0 0.0
    %1081 = vmatpush1.msra.mxu0 0.0
    %1082 = vmatprep.subr.mxu0 0.0
    %1083 = vmatpush1.msra.mxu0 0.0
    %1084 = vmatprep.subr.mxu0 0.0
    %1085 = vmatpush1.msra.mxu0 0.0
    %1086 = vmatprep.subr.mxu0 0.0
    %1087 = vmatpush1.msra.mxu0 0.0
    %1088 = vmatprep.subr.mxu0 0.0
    %1089 = vmatpush1.msra.mxu0 0.0
    %1090 = vmatprep.subr.mxu0 0.0
    %1091 = vmatpush1.msra.mxu0 0.0
    %1092 = vmatprep.subr.mxu0 0.0
    %1093 = vmatpush1.msra.mxu0 0.0
    %1094 = vmatprep.subr.mxu0 0.0
    %1095 = vmatpush1.msra.mxu0 0.0
    %1096 = vmatprep.subr.mxu0 0.0
    %1097 = vmatpush1.msra.mxu0 0.0
    %1098 = vmatprep.subr.mxu0 0.0
    %1099 = vmatpush1.msra.mxu0 0.0
    %1100 = vmatprep.subr.mxu0 0.0
    %1101 = vmatpush1.msra.mxu0 0.0
    %1102 = vmatprep.subr.mxu0 0.0
    %1103 = vmatpush1.msra.mxu0 0.0
    %1104 = vmatprep.mubr.f32.mxu0 0.0
    %1105 = vmatmul.mubr.f32.gmra.mrb[0].mxu0 %v961
    %v1106 = vpop.f32.mrb[0].mxu0
    %v1107 = vadd.f32 0.0, %v1106
    %v1108 = vpop.f32.mrb[0].mxu0
    %1109 = vdwg.mxu0
    %v1110 = vadd.f32 %v1039, %v1107
    %1111 = vmatprep.subr.mxu0 0.0
    %1112 = vmatpush1.msra.mxu0 %v166
    %1113 = vmatprep.subr.mxu0 0.0
    %1114 = vmatpush1.msra.mxu0 %v167
    %1115 = vmatprep.subr.mxu0 0.0
    %1116 = vmatpush1.msra.mxu0 %v168
    %1117 = vmatprep.subr.mxu0 0.0
    %1118 = vmatpush1.msra.mxu0 %v169
    %1119 = vmatprep.subr.mxu0 0.0
    %1120 = vmatpush1.msra.mxu0 %v170
    %1121 = vmatprep.subr.mxu0 0.0
    %1122 = vmatpush1.msra.mxu0 %v171
    %1123 = vmatprep.subr.mxu0 0.0
    %1124 = vmatpush1.msra.mxu0 %v172
    %1125 = vmatprep.subr.mxu0 0.0
    %1126 = vmatpush1.msra.mxu0 %v173
    %1127 = vmatprep.subr.mxu0 0.0
    %1128 = vmatpush1.msra.mxu0 %v174
    %1129 = vmatprep.subr.mxu0 0.0
    %1130 = vmatpush1.msra.mxu0 %v175
    %1131 = vmatprep.subr.mxu0 0.0
    %1132 = vmatpush1.msra.mxu0 %v176
    %1133 = vmatprep.subr.mxu0 0.0
    %1134 = vmatpush1.msra.mxu0 %v177
    %1135 = vmatprep.subr.mxu0 0.0
    %1136 = vmatpush1.msra.mxu0 %v178
    %1137 = vmatprep.subr.mxu0 0.0
    %1138 = vmatpush1.msra.mxu0 %v179
    %1139 = vmatprep.subr.mxu0 0.0
    %1140 = vmatpush1.msra.mxu0 %v180
    %1141 = vmatprep.subr.mxu0 0.0
    %1142 = vmatpush1.msra.mxu0 %v181
    %1143 = vmatprep.subr.mxu0 0.0
    %1144 = vmatpush1.msra.mxu0 0.0
    %1145 = vmatprep.subr.mxu0 0.0
    %1146 = vmatpush1.msra.mxu0 0.0
    %1147 = vmatprep.subr.mxu0 0.0
    %1148 = vmatpush1.msra.mxu0 0.0
    %1149 = vmatprep.subr.mxu0 0.0
    %1150 = vmatpush1.msra.mxu0 0.0
    %1151 = vmatprep.subr.mxu0 0.0
    %1152 = vmatpush1.msra.mxu0 0.0
    %1153 = vmatprep.subr.mxu0 0.0
    %1154 = vmatpush1.msra.mxu0 0.0
    %1155 = vmatprep.subr.mxu0 0.0
    %1156 = vmatpush1.msra.mxu0 0.0
    %1157 = vmatprep.subr.mxu0 0.0
    %1158 = vmatpush1.msra.mxu0 0.0
    %1159 = vmatprep.subr.mxu0 0.0
    %1160 = vmatpush1.msra.mxu0 0.0
    %1161 = vmatprep.subr.mxu0 0.0
    %1162 = vmatpush1.msra.mxu0 0.0
    %1163 = vmatprep.subr.mxu0 0.0
    %1164 = vmatpush1.msra.mxu0 0.0
    %1165 = vmatprep.subr.mxu0 0.0
    %1166 = vmatpush1.msra.mxu0 0.0
    %1167 = vmatprep.subr.mxu0 0.0
    %1168 = vmatpush1.msra.mxu0 0.0
    %1169 = vmatprep.subr.mxu0 0.0
    %1170 = vmatpush1.msra.mxu0 0.0
    %1171 = vmatprep.subr.mxu0 0.0
    %1172 = vmatpush1.msra.mxu0 0.0
    %1173 = vmatprep.subr.mxu0 0.0
    %1174 = vmatpush1.msra.mxu0 0.0
    %1175 = vmatprep.mubr.f32.mxu0 0.0
    %1176 = vmatmul.mubr.f32.gmra.mrb[0].mxu0 %v1110
    %v1177 = vpop.f32.mrb[0].mxu0
    %v1178 = vadd.f32 0.0, %v1177
    %v1179 = vpop.f32.mrb[0].mxu0
    %1180 = vdwg.mxu0
    %v1181 = vadd.f32 %v1038, %v1178
    %v1182 = vadd.f32 %v1181, %v1031
    %v1183 = vmul.f32 %v1182, 0.1
    %v1184 = vsub.f32 %v959, %v1183
    %v1185 = vmul.f32 %v1110, 0.1
    %v1186 = vsub.f32 %v961, %v1185
    %1187 = vmatprep.subr.mxu0 %v135
    %1188 = vmatpush1.msra.mxu0 %v134
    %1189 = vmatprep.subr.mxu0 %v137
    %1190 = vmatpush1.msra.mxu0 %v136
    %1191 = vmatprep.subr.mxu0 %v139
    %1192 = vmatpush1.msra.mxu0 %v138
    %1193 = vmatprep.subr.mxu0 %v141
    %1194 = vmatpush1.msra.mxu0 %v140
    %1195 = vmatprep.subr.mxu0 %v143
    %1196 = vmatpush1.msra.mxu0 %v142
    %1197 = vmatprep.subr.mxu0 %v145
    %1198 = vmatpush1.msra.mxu0 %v144
    %1199 = vmatprep.subr.mxu0 %v147
    %1200 = vmatpush1.msra.mxu0 %v146
    %1201 = vmatprep.subr.mxu0 %v149
    %1202 = vmatpush1.msra.mxu0 %v148
    %1203 = vmatprep.subr.mxu0 %v151
    %1204 = vmatpush1.msra.mxu0 %v150
    %1205 = vmatprep.subr.mxu0 %v153
    %1206 = vmatpush1.msra.mxu0 %v152
    %1207 = vmatprep.subr.mxu0 %v155
    %1208 = vmatpush1.msra.mxu0 %v154
    %1209 = vmatprep.subr.mxu0 %v157
    %1210 = vmatpush1.msra.mxu0 %v156
    %1211 = vmatprep.subr.mxu0 %v159
    %1212 = vmatpush1.msra.mxu0 %v158
    %1213 = vmatprep.subr.mxu0 %v161
    %1214 = vmatpush1.msra.mxu0 %v160
    %1215 = vmatprep.subr.mxu0 %v163
    %1216 = vmatpush1.msra.mxu0 %v162
    %1217 = vmatprep.subr.mxu0 %v165
    %1218 = vmatpush1.msra.mxu0 %v164
    %1219 = vmatprep.subr.mxu0 0.0
    %1220 = vmatpush1.msra.mxu0 0.0
    %1221 = vmatprep.subr.mxu0 0.0
    %1222 = vmatpush1.msra.mxu0 0.0
    %1223 = vmatprep.subr.mxu0 0.0
    %1224 = vmatpush1.msra.mxu0 0.0
    %1225 = vmatprep.subr.mxu0 0.0
    %1226 = vmatpush1.msra.mxu0 0.0
    %1227 = vmatprep.subr.mxu0 0.0
    %1228 = vmatpush1.msra.mxu0 0.0
    %1229 = vmatprep.subr.mxu0 0.0
    %1230 = vmatpush1.msra.mxu0 0.0
    %1231 = vmatprep.subr.mxu0 0.0
    %1232 = vmatpush1.msra.mxu0 0.0
    %1233 = vmatprep.subr.mxu0 0.0
    %1234 = vmatpush1.msra.mxu0 0.0
    %1235 = vmatprep.subr.mxu0 0.0
    %1236 = vmatpush1.msra.mxu0 0.0
    %1237 = vmatprep.subr.mxu0 0.0
    %1238 = vmatpush1.msra.mxu0 0.0
    %1239 = vmatprep.subr.mxu0 0.0
    %1240 = vmatpush1.msra.mxu0 0.0
    %1241 = vmatprep.subr.mxu0 0.0
    %1242 = vmatpush1.msra.mxu0 0.0
    %1243 = vmatprep.subr.mxu0 0.0
    %1244 = vmatpush1.msra.mxu0 0.0
    %1245 = vmatprep.subr.mxu0 0.0
    %1246 = vmatpush1.msra.mxu0 0.0
    %1247 = vmatprep.subr.mxu0 0.0
    %1248 = vmatpush1.msra.mxu0 0.0
    %1249 = vmatprep.subr.mxu0 0.0
    %1250 = vmatpush1.msra.mxu0 0.0
    %1251 = vmatprep.mubr.f32.mxu0 0.0
    %1252 = vmatmul.mubr.f32.gmra.mrb[0].mxu0 %v1184
    %v1253 = vpop.f32.mrb[0].mxu0
    %v1254 = vadd.f32 0.0, %v1253
    %v1255 = vpop.f32.mrb[0].mxu0
    %v1256 = vadd.f32 0.0, %v1255
    %1257 = vdwg.mxu0
    %v1258 = vadd.f32 %v1254, %v283
    %v1259 = vmul.f32 %v1258, 0.5
    %v1260 = vtanh.pop %v1259
    %v1261 = vmul.f32 %v1260, 0.5
    %v1262 = vadd.f32 %v1261, 0.5
    %v1263 = vsub.f32 %v1184, %v277
    %v1264 = vsub.f32 %v1186, %v1262
    %1265 = vmatprep.subr.mxu0 0.0
    %1266 = vmatpush1.msra.mxu0 %v182
    %1267 = vmatprep.subr.mxu0 0.0
    %1268 = vmatpush1.msra.mxu0 %v183
    %1269 = vmatprep.subr.mxu0 0.0
    %1270 = vmatpush1.msra.mxu0 %v184
    %1271 = vmatprep.subr.mxu0 0.0
    %1272 = vmatpush1.msra.mxu0 %v185
    %1273 = vmatprep.subr.mxu0 0.0
    %1274 = vmatpush1.msra.mxu0 %v186
    %1275 = vmatprep.subr.mxu0 0.0
    %1276 = vmatpush1.msra.mxu0 %v187
    %1277 = vmatprep.subr.mxu0 0.0
    %1278 = vmatpush1.msra.mxu0 %v188
    %1279 = vmatprep.subr.mxu0 0.0
    %1280 = vmatpush1.msra.mxu0 %v189
    %1281 = vmatprep.subr.mxu0 0.0
    %1282 = vmatpush1.msra.mxu0 %v190
    %1283 = vmatprep.subr.mxu0 0.0
    %1284 = vmatpush1.msra.mxu0 %v191
    %1285 = vmatprep.subr.mxu0 0.0
    %1286 = vmatpush1.msra.mxu0 %v192
    %1287 = vmatprep.subr.mxu0 0.0
    %1288 = vmatpush1.msra.mxu0 %v193
    %1289 = vmatprep.subr.mxu0 0.0
    %1290 = vmatpush1.msra.mxu0 %v194
    %1291 = vmatprep.subr.mxu0 0.0
    %1292 = vmatpush1.msra.mxu0 %v195
    %1293 = vmatprep.subr.mxu0 0.0
    %1294 = vmatpush1.msra.mxu0 %v196
    %1295 = vmatprep.subr.mxu0 0.0
    %1296 = vmatpush1.msra.mxu0 %v197
    %1297 = vmatprep.subr.mxu0 0.0
    %1298 = vmatpush1.msra.mxu0 0.0
    %1299 = vmatprep.subr.mxu0 0.0
    %1300 = vmatpush1.msra.mxu0 0.0
    %1301 = vmatprep.subr.mxu0 0.0
    %1302 = vmatpush1.msra.mxu0 0.0
    %1303 = vmatprep.subr.mxu0 0.0
    %1304 = vmatpush1.msra.mxu0 0.0
    %1305 = vmatprep.subr.mxu0 0.0
    %1306 = vmatpush1.msra.mxu0 0.0
    %1307 = vmatprep.subr.mxu0 0.0
    %1308 = vmatpush1.msra.mxu0 0.0
    %1309 = vmatprep.subr.mxu0 0.0
    %1310 = vmatpush1.msra.mxu0 0.0
    %1311 = vmatprep.subr.mxu0 0.0
    %1312 = vmatpush1.msra.mxu0 0.0
    %1313 = vmatprep.subr.mxu0 0.0
    %1314 = vmatpush1.msra.mxu0 0.0
    %1315 = vmatprep.subr.mxu0 0.0
    %1316 = vmatpush1.msra.mxu0 0.0
    %1317 = vmatprep.subr.mxu0 0.0
    %1318 = vmatpush1.msra.mxu0 0.0
    %1319 = vmatprep.subr.mxu0 0.0
    %1320 = vmatpush1.msra.mxu0 0.0
    %1321 = vmatprep.subr.mxu0 0.0
    %1322 = vmatpush1.msra.mxu0 0.0
    %1323 = vmatprep.subr.mxu0 0.0
    %1324 = vmatpush1.msra.mxu0 0.0
    %1325 = vmatprep.subr.mxu0 0.0
    %1326 = vmatpush1.msra.mxu0 0.0
    %1327 = vmatprep.subr.mxu0 0.0
    %1328 = vmatpush1.msra.mxu0 0.0
    %1329 = vmatprep.mubr.f32.mxu0 0.0
    %1330 = vmatmul.mubr.f32.gmra.mrb[0].mxu0 %v1186
    %v1331 = vpop.f32.mrb[0].mxu0
    %v1332 = vadd.f32 0.0, %v1331
    %v1333 = vpop.f32.mrb[0].mxu0
    %1334 = vdwg.mxu0
    %v1335 = vadd.f32 %v1264, %v1332
    %1336 = vmatprep.subr.mxu0 0.0
    %1337 = vmatpush1.msra.mxu0 %v166
    %1338 = vmatprep.subr.mxu0 0.0
    %1339 = vmatpush1.msra.mxu0 %v167
    %1340 = vmatprep.subr.mxu0 0.0
    %1341 = vmatpush1.msra.mxu0 %v168
    %1342 = vmatprep.subr.mxu0 0.0
    %1343 = vmatpush1.msra.mxu0 %v169
    %1344 = vmatprep.subr.mxu0 0.0
    %1345 = vmatpush1.msra.mxu0 %v170
    %1346 = vmatprep.subr.mxu0 0.0
    %1347 = vmatpush1.msra.mxu0 %v171
    %1348 = vmatprep.subr.mxu0 0.0
    %1349 = vmatpush1.msra.mxu0 %v172
    %1350 = vmatprep.subr.mxu0 0.0
    %1351 = vmatpush1.msra.mxu0 %v173
    %1352 = vmatprep.subr.mxu0 0.0
    %1353 = vmatpush1.msra.mxu0 %v174
    %1354 = vmatprep.subr.mxu0 0.0
    %1355 = vmatpush1.msra.mxu0 %v175
    %1356 = vmatprep.subr.mxu0 0.0
    %1357 = vmatpush1.msra.mxu0 %v176
    %1358 = vmatprep.subr.mxu0 0.0
    %1359 = vmatpush1.msra.mxu0 %v177
    %1360 = vmatprep.subr.mxu0 0.0
    %1361 = vmatpush1.msra.mxu0 %v178
    %1362 = vmatprep.subr.mxu0 0.0
    %1363 = vmatpush1.msra.mxu0 %v179
    %1364 = vmatprep.subr.mxu0 0.0
    %1365 = vmatpush1.msra.mxu0 %v180
    %1366 = vmatprep.subr.mxu0 0.0
    %1367 = vmatpush1.msra.mxu0 %v181
    %1368 = vmatprep.subr.mxu0 0.0
    %1369 = vmatpush1.msra.mxu0 0.0
    %1370 = vmatprep.subr.mxu0 0.0
    %1371 = vmatpush1.msra.mxu0 0.0
    %1372 = vmatprep.subr.mxu0 0.0
    %1373 = vmatpush1.msra.mxu0 0.0
    %1374 = vmatprep.subr.mxu0 0.0
    %1375 = vmatpush1.msra.mxu0 0.0
    %1376 = vmatprep.subr.mxu0 0.0
    %1377 = vmatpush1.msra.mxu0 0.0
    %1378 = vmatprep.subr.mxu0 0.0
    %1379 = vmatpush1.msra.mxu0 0.0
    %1380 = vmatprep.subr.mxu0 0.0
    %1381 = vmatpush1.msra.mxu0 0.0
    %1382 = vmatprep.subr.mxu0 0.0
    %1383 = vmatpush1.msra.mxu0 0.0
    %1384 = vmatprep.subr.mxu0 0.0
    %1385 = vmatpush1.msra.mxu0 0.0
    %1386 = vmatprep.subr.mxu0 0.0
    %1387 = vmatpush1.msra.mxu0 0.0
    %1388 = vmatprep.subr.mxu0 0.0
    %1389 = vmatpush1.msra.mxu0 0.0
    %1390 = vmatprep.subr.mxu0 0.0
    %1391 = vmatpush1.msra.mxu0 0.0
    %1392 = vmatprep.subr.mxu0 0.0
    %1393 = vmatpush1.msra.mxu0 0.0
    %1394 = vmatprep.subr.mxu0 0.0
    %1395 = vmatpush1.msra.mxu0 0.0
    %1396 = vmatprep.subr.mxu0 0.0
    %1397 = vmatpush1.msra.mxu0 0.0
    %1398 = vmatprep.subr.mxu0 0.0
    %1399 = vmatpush1.msra.mxu0 0.0
    %1400 = vmatprep.mubr.f32.mxu0 0.0
    %1401 = vmatmul.mubr.f32.gmra.mrb[0].mxu0 %v1335
    %v1402 = vpop.f32.mrb[0].mxu0
    %v1403 = vadd.f32 0.0, %v1402
    %v1404 = vpop.f32.mrb[0].mxu0
    %1405 = vdwg.mxu0
    %v1406 = vadd.f32 %v1263, %v1403
    %v1407 = vadd.f32 %v1406, %v1256
    %v1408 = vmul.f32 %v1407, 0.1
    %v1409 = vsub.f32 %v1184, %v1408
    %v1410 = vmul.f32 %v1335, 0.1
    %v1411 = vsub.f32 %v1186, %v1410
    %1412 = vmatprep.subr.mxu0 %v135
    %1413 = vmatpush1.msra.mxu0 %v134
    %1414 = vmatprep.subr.mxu0 %v137
    %1415 = vmatpush1.msra.mxu0 %v136
    %1416 = vmatprep.subr.mxu0 %v139
    %1417 = vmatpush1.msra.mxu0 %v138
    %1418 = vmatprep.subr.mxu0 %v141
    %1419 = vmatpush1.msra.mxu0 %v140
    %1420 = vmatprep.subr.mxu0 %v143
    %1421 = vmatpush1.msra.mxu0 %v142
    %1422 = vmatprep.subr.mxu0 %v145
    %1423 = vmatpush1.msra.mxu0 %v144
    %1424 = vmatprep.subr.mxu0 %v147
    %1425 = vmatpush1.msra.mxu0 %v146
    %1426 = vmatprep.subr.mxu0 %v149
    %1427 = vmatpush1.msra.mxu0 %v148
    %1428 = vmatprep.subr.mxu0 %v151
    %1429 = vmatpush1.msra.mxu0 %v150
    %1430 = vmatprep.subr.mxu0 %v153
    %1431 = vmatpush1.msra.mxu0 %v152
    %1432 = vmatprep.subr.mxu0 %v155
    %1433 = vmatpush1.msra.mxu0 %v154
    %1434 = vmatprep.subr.mxu0 %v157
    %1435 = vmatpush1.msra.mxu0 %v156
    %1436 = vmatprep.subr.mxu0 %v159
    %1437 = vmatpush1.msra.mxu0 %v158
    %1438 = vmatprep.subr.mxu0 %v161
    %1439 = vmatpush1.msra.mxu0 %v160
    %1440 = vmatprep.subr.mxu0 %v163
    %1441 = vmatpush1.msra.mxu0 %v162
    %1442 = vmatprep.subr.mxu0 %v165
    %1443 = vmatpush1.msra.mxu0 %v164
    %1444 = vmatprep.subr.mxu0 0.0
    %1445 = vmatpush1.msra.mxu0 0.0
    %1446 = vmatprep.subr.mxu0 0.0
    %1447 = vmatpush1.msra.mxu0 0.0
    %1448 = vmatprep.subr.mxu0 0.0
    %1449 = vmatpush1.msra.mxu0 0.0
    %1450 = vmatprep.subr.mxu0 0.0
    %1451 = vmatpush1.msra.mxu0 0.0
    %1452 = vmatprep.subr.mxu0 0.0
    %1453 = vmatpush1.msra.mxu0 0.0
    %1454 = vmatprep.subr.mxu0 0.0
    %1455 = vmatpush1.msra.mxu0 0.0
    %1456 = vmatprep.subr.mxu0 0.0
    %1457 = vmatpush1.msra.mxu0 0.0
    %1458 = vmatprep.subr.mxu0 0.0
    %1459 = vmatpush1.msra.mxu0 0.0
    %1460 = vmatprep.subr.mxu0 0.0
    %1461 = vmatpush1.msra.mxu0 0.0
    %1462 = vmatprep.subr.mxu0 0.0
    %1463 = vmatpush1.msra.mxu0 0.0
    %1464 = vmatprep.subr.mxu0 0.0
    %1465 = vmatpush1.msra.mxu0 0.0
    %1466 = vmatprep.subr.mxu0 0.0
    %1467 = vmatpush1.msra.mxu0 0.0
    %1468 = vmatprep.subr.mxu0 0.0
    %1469 = vmatpush1.msra.mxu0 0.0
    %1470 = vmatprep.subr.mxu0 0.0
    %1471 = vmatpush1.msra.mxu0 0.0
    %1472 = vmatprep.subr.mxu0 0.0
    %1473 = vmatpush1.msra.mxu0 0.0
    %1474 = vmatprep.subr.mxu0 0.0
    %1475 = vmatpush1.msra.mxu0 0.0
    %1476 = vmatprep.mubr.f32.mxu0 0.0
    %1477 = vmatmul.mubr.f32.gmra.mrb[0].mxu0 %v1409
    %v1478 = vpop.f32.mrb[0].mxu0
    %v1479 = vadd.f32 0.0, %v1478
    %v1480 = vpop.f32.mrb[0].mxu0
    %v1481 = vadd.f32 0.0, %v1480
    %1482 = vdwg.mxu0
    %v1483 = vadd.f32 %v1479, %v283
    %v1484 = vmul.f32 %v1483, 0.5
    %v1485 = vtanh.pop %v1484
    %v1486 = vmul.f32 %v1485, 0.5
    %v1487 = vadd.f32 %v1486, 0.5
    %v1488 = vsub.f32 %v1409, %v277
    %v1489 = vsub.f32 %v1411, %v1487
    %1490 = vmatprep.subr.mxu0 0.0
    %1491 = vmatpush1.msra.mxu0 %v182
    %1492 = vmatprep.subr.mxu0 0.0
    %1493 = vmatpush1.msra.mxu0 %v183
    %1494 = vmatprep.subr.mxu0 0.0
    %1495 = vmatpush1.msra.mxu0 %v184
    %1496 = vmatprep.subr.mxu0 0.0
    %1497 = vmatpush1.msra.mxu0 %v185
    %1498 = vmatprep.subr.mxu0 0.0
    %1499 = vmatpush1.msra.mxu0 %v186
    %1500 = vmatprep.subr.mxu0 0.0
    %1501 = vmatpush1.msra.mxu0 %v187
    %1502 = vmatprep.subr.mxu0 0.0
    %1503 = vmatpush1.msra.mxu0 %v188
    %1504 = vmatprep.subr.mxu0 0.0
    %1505 = vmatpush1.msra.mxu0 %v189
    %1506 = vmatprep.subr.mxu0 0.0
    %1507 = vmatpush1.msra.mxu0 %v190
    %1508 = vmatprep.subr.mxu0 0.0
    %1509 = vmatpush1.msra.mxu0 %v191
    %1510 = vmatprep.subr.mxu0 0.0
    %1511 = vmatpush1.msra.mxu0 %v192
    %1512 = vmatprep.subr.mxu0 0.0
    %1513 = vmatpush1.msra.mxu0 %v193
    %1514 = vmatprep.subr.mxu0 0.0
    %1515 = vmatpush1.msra.mxu0 %v194
    %1516 = vmatprep.subr.mxu0 0.0
    %1517 = vmatpush1.msra.mxu0 %v195
    %1518 = vmatprep.subr.mxu0 0.0
    %1519 = vmatpush1.msra.mxu0 %v196
    %1520 = vmatprep.subr.mxu0 0.0
    %1521 = vmatpush1.msra.mxu0 %v197
    %1522 = vmatprep.subr.mxu0 0.0
    %1523 = vmatpush1.msra.mxu0 0.0
    %1524 = vmatprep.subr.mxu0 0.0
    %1525 = vmatpush1.msra.mxu0 0.0
    %1526 = vmatprep.subr.mxu0 0.0
    %1527 = vmatpush1.msra.mxu0 0.0
    %1528 = vmatprep.subr.mxu0 0.0
    %1529 = vmatpush1.msra.mxu0 0.0
    %1530 = vmatprep.subr.mxu0 0.0
    %1531 = vmatpush1.msra.mxu0 0.0
    %1532 = vmatprep.subr.mxu0 0.0
    %1533 = vmatpush1.msra.mxu0 0.0
    %1534 = vmatprep.subr.mxu0 0.0
    %1535 = vmatpush1.msra.mxu0 0.0
    %1536 = vmatprep.subr.mxu0 0.0
    %1537 = vmatpush1.msra.mxu0 0.0
    %1538 = vmatprep.subr.mxu0 0.0
    %1539 = vmatpush1.msra.mxu0 0.0
    %1540 = vmatprep.subr.mxu0 0.0
    %1541 = vmatpush1.msra.mxu0 0.0
    %1542 = vmatprep.subr.mxu0 0.0
    %1543 = vmatpush1.msra.mxu0 0.0
    %1544 = vmatprep.subr.mxu0 0.0
    %1545 = vmatpush1.msra.mxu0 0.0
    %1546 = vmatprep.subr.mxu0 0.0
    %1547 = vmatpush1.msra.mxu0 0.0
    %1548 = vmatprep.subr.mxu0 0.0
    %1549 = vmatpush1.msra.mxu0 0.0
    %1550 = vmatprep.subr.mxu0 0.0
    %1551 = vmatpush1.msra.mxu0 0.0
    %1552 = vmatprep.subr.mxu0 0.0
    %1553 = vmatpush1.msra.mxu0 0.0
    %1554 = vmatprep.mubr.f32.mxu0 0.0
    %1555 = vmatmul.mubr.f32.gmra.mrb[0].mxu0 %v1411
    %v1556 = vpop.f32.mrb[0].mxu0
    %v1557 = vadd.f32 0.0, %v1556
    %v1558 = vpop.f32.mrb[0].mxu0
    %1559 = vdwg.mxu0
    %v1560 = vadd.f32 %v1489, %v1557
    %1561 = vmatprep.subr.mxu0 0.0
    %1562 = vmatpush1.msra.mxu0 %v166
    %1563 = vmatprep.subr.mxu0 0.0
    %1564 = vmatpush1.msra.mxu0 %v167
    %1565 = vmatprep.subr.mxu0 0.0
    %1566 = vmatpush1.msra.mxu0 %v168
    %1567 = vmatprep.subr.mxu0 0.0
    %1568 = vmatpush1.msra.mxu0 %v169
    %1569 = vmatprep.subr.mxu0 0.0
    %1570 = vmatpush1.msra.mxu0 %v170
    %1571 = vmatprep.subr.mxu0 0.0
    %1572 = vmatpush1.msra.mxu0 %v171
    %1573 = vmatprep.subr.mxu0 0.0
    %1574 = vmatpush1.msra.mxu0 %v172
    %1575 = vmatprep.subr.mxu0 0.0
    %1576 = vmatpush1.msra.mxu0 %v173
    %1577 = vmatprep.subr.mxu0 0.0
    %1578 = vmatpush1.msra.mxu0 %v174
    %1579 = vmatprep.subr.mxu0 0.0
    %1580 = vmatpush1.msra.mxu0 %v175
    %1581 = vmatprep.subr.mxu0 0.0
    %1582 = vmatpush1.msra.mxu0 %v176
    %1583 = vmatprep.subr.mxu0 0.0
    %1584 = vmatpush1.msra.mxu0 %v177
    %1585 = vmatprep.subr.mxu0 0.0
    %1586 = vmatpush1.msra.mxu0 %v178
    %1587 = vmatprep.subr.mxu0 0.0
    %1588 = vmatpush1.msra.mxu0 %v179
    %1589 = vmatprep.subr.mxu0 0.0
    %1590 = vmatpush1.msra.mxu0 %v180
    %1591 = vmatprep.subr.mxu0 0.0
    %1592 = vmatpush1.msra.mxu0 %v181
    %1593 = vmatprep.subr.mxu0 0.0
    %1594 = vmatpush1.msra.mxu0 0.0
    %1595 = vmatprep.subr.mxu0 0.0
    %1596 = vmatpush1.msra.mxu0 0.0
    %1597 = vmatprep.subr.mxu0 0.0
    %1598 = vmatpush1.msra.mxu0 0.0
    %1599 = vmatprep.subr.mxu0 0.0
    %1600 = vmatpush1.msra.mxu0 0.0
    %1601 = vmatprep.subr.mxu0 0.0
    %1602 = vmatpush1.msra.mxu0 0.0
    %1603 = vmatprep.subr.mxu0 0.0
    %1604 = vmatpush1.msra.mxu0 0.0
    %1605 = vmatprep.subr.mxu0 0.0
    %1606 = vmatpush1.msra.mxu0 0.0
    %1607 = vmatprep.subr.mxu0 0.0
    %1608 = vmatpush1.msra.mxu0 0.0
    %1609 = vmatprep.subr.mxu0 0.0
    %1610 = vmatpush1.msra.mxu0 0.0
    %1611 = vmatprep.subr.mxu0 0.0
    %1612 = vmatpush1.msra.mxu0 0.0
    %1613 = vmatprep.subr.mxu0 0.0
    %1614 = vmatpush1.msra.mxu0 0.0
    %1615 = vmatprep.subr.mxu0 0.0
    %1616 = vmatpush1.msra.mxu0 0.0
    %1617 = vmatprep.subr.mxu0 0.0
    %1618 = vmatpush1.msra.mxu0 0.0
    %1619 = vmatprep.subr.mxu0 0.0
    %1620 = vmatpush1.msra.mxu0 0.0
    %1621 = vmatprep.subr.mxu0 0.0
    %1622 = vmatpush1.msra.mxu0 0.0
    %1623 = vmatprep.subr.mxu0 0.0
    %1624 = vmatpush1.msra.mxu0 0.0
    %1625 = vmatprep.mubr.f32.mxu0 0.0
    %1626 = vmatmul.mubr.f32.gmra.mrb[0].mxu0 %v1560
    %v1627 = vpop.f32.mrb[0].mxu0
    %v1628 = vadd.f32 0.0, %v1627
    %v1629 = vpop.f32.mrb[0].mxu0
    %1630 = vdwg.mxu0
    %v1631 = vadd.f32 %v1488, %v1628
    %v1632 = vadd.f32 %v1631, %v1481
    %v1633 = vmul.f32 %v1632, 0.1
    %v1634 = vsub.f32 %v1409, %v1633
    %v1635 = vmul.f32 %v1560, 0.1
    %v1636 = vsub.f32 %v1411, %v1635
    %1637 = vmatprep.subr.mxu0 %v135
    %1638 = vmatpush1.msra.mxu0 %v134
    %1639 = vmatprep.subr.mxu0 %v137
    %1640 = vmatpush1.msra.mxu0 %v136
    %1641 = vmatprep.subr.mxu0 %v139
    %1642 = vmatpush1.msra.mxu0 %v138
    %1643 = vmatprep.subr.mxu0 %v141
    %1644 = vmatpush1.msra.mxu0 %v140
    %1645 = vmatprep.subr.mxu0 %v143
    %1646 = vmatpush1.msra.mxu0 %v142
    %1647 = vmatprep.subr.mxu0 %v145
    %1648 = vmatpush1.msra.mxu0 %v144
    %1649 = vmatprep.subr.mxu0 %v147
    %1650 = vmatpush1.msra.mxu0 %v146
    %1651 = vmatprep.subr.mxu0 %v149
    %1652 = vmatpush1.msra.mxu0 %v148
    %1653 = vmatprep.subr.mxu0 %v151
    %1654 = vmatpush1.msra.mxu0 %v150
    %1655 = vmatprep.subr.mxu0 %v153
    %1656 = vmatpush1.msra.mxu0 %v152
    %1657 = vmatprep.subr.mxu0 %v155
    %1658 = vmatpush1.msra.mxu0 %v154
    %1659 = vmatprep.subr.mxu0 %v157
    %1660 = vmatpush1.msra.mxu0 %v156
    %1661 = vmatprep.subr.mxu0 %v159
    %1662 = vmatpush1.msra.mxu0 %v158
    %1663 = vmatprep.subr.mxu0 %v161
    %1664 = vmatpush1.msra.mxu0 %v160
    %1665 = vmatprep.subr.mxu0 %v163
    %1666 = vmatpush1.msra.mxu0 %v162
    %1667 = vmatprep.subr.mxu0 %v165
    %1668 = vmatpush1.msra.mxu0 %v164
    %1669 = vmatprep.subr.mxu0 0.0
    %1670 = vmatpush1.msra.mxu0 0.0
    %1671 = vmatprep.subr.mxu0 0.0
    %1672 = vmatpush1.msra.mxu0 0.0
    %1673 = vmatprep.subr.mxu0 0.0
    %1674 = vmatpush1.msra.mxu0 0.0
    %1675 = vmatprep.subr.mxu0 0.0
    %1676 = vmatpush1.msra.mxu0 0.0
    %1677 = vmatprep.subr.mxu0 0.0
    %1678 = vmatpush1.msra.mxu0 0.0
    %1679 = vmatprep.subr.mxu0 0.0
    %1680 = vmatpush1.msra.mxu0 0.0
    %1681 = vmatprep.subr.mxu0 0.0
    %1682 = vmatpush1.msra.mxu0 0.0
    %1683 = vmatprep.subr.mxu0 0.0
    %1684 = vmatpush1.msra.mxu0 0.0
    %1685 = vmatprep.subr.mxu0 0.0
    %1686 = vmatpush1.msra.mxu0 0.0
    %1687 = vmatprep.subr.mxu0 0.0
    %1688 = vmatpush1.msra.mxu0 0.0
    %1689 = vmatprep.subr.mxu0 0.0
    %1690 = vmatpush1.msra.mxu0 0.0
    %1691 = vmatprep.subr.mxu0 0.0
    %1692 = vmatpush1.msra.mxu0 0.0
    %1693 = vmatprep.subr.mxu0 0.0
    %1694 = vmatpush1.msra.mxu0 0.0
    %1695 = vmatprep.subr.mxu0 0.0
    %1696 = vmatpush1.msra.mxu0 0.0
    %1697 = vmatprep.subr.mxu0 0.0
    %1698 = vmatpush1.msra.mxu0 0.0
    %1699 = vmatprep.subr.mxu0 0.0
    %1700 = vmatpush1.msra.mxu0 0.0
    %1701 = vmatprep.mubr.f32.mxu0 0.0
    %1702 = vmatmul.mubr.f32.gmra.mrb[0].mxu0 %v1634
    %v1703 = vpop.f32.mrb[0].mxu0
    %v1704 = vadd.f32 0.0, %v1703
    %v1705 = vpop.f32.mrb[0].mxu0
    %v1706 = vadd.f32 0.0, %v1705
    %1707 = vdwg.mxu0
    %v1708 = vadd.f32 %v1704, %v283
    %v1709 = vmul.f32 %v1708, 0.5
    %v1710 = vtanh.pop %v1709
    %v1711 = vmul.f32 %v1710, 0.5
    %v1712 = vadd.f32 %v1711, 0.5
    %v1713 = vsub.f32 %v1634, %v277
    %v1714 = vsub.f32 %v1636, %v1712
    %1715 = vmatprep.subr.mxu0 0.0
    %1716 = vmatpush1.msra.mxu0 %v182
    %1717 = vmatprep.subr.mxu0 0.0
    %1718 = vmatpush1.msra.mxu0 %v183
    %1719 = vmatprep.subr.mxu0 0.0
    %1720 = vmatpush1.msra.mxu0 %v184
    %1721 = vmatprep.subr.mxu0 0.0
    %1722 = vmatpush1.msra.mxu0 %v185
    %1723 = vmatprep.subr.mxu0 0.0
    %1724 = vmatpush1.msra.mxu0 %v186
    %1725 = vmatprep.subr.mxu0 0.0
    %1726 = vmatpush1.msra.mxu0 %v187
    %1727 = vmatprep.subr.mxu0 0.0
    %1728 = vmatpush1.msra.mxu0 %v188
    %1729 = vmatprep.subr.mxu0 0.0
    %1730 = vmatpush1.msra.mxu0 %v189
    %1731 = vmatprep.subr.mxu0 0.0
    %1732 = vmatpush1.msra.mxu0 %v190
    %1733 = vmatprep.subr.mxu0 0.0
    %1734 = vmatpush1.msra.mxu0 %v191
    %1735 = vmatprep.subr.mxu0 0.0
    %1736 = vmatpush1.msra.mxu0 %v192
    %1737 = vmatprep.subr.mxu0 0.0
    %1738 = vmatpush1.msra.mxu0 %v193
    %1739 = vmatprep.subr.mxu0 0.0
    %1740 = vmatpush1.msra.mxu0 %v194
    %1741 = vmatprep.subr.mxu0 0.0
    %1742 = vmatpush1.msra.mxu0 %v195
    %1743 = vmatprep.subr.mxu0 0.0
    %1744 = vmatpush1.msra.mxu0 %v196
    %1745 = vmatprep.subr.mxu0 0.0
    %1746 = vmatpush1.msra.mxu0 %v197
    %1747 = vmatprep.subr.mxu0 0.0
    %1748 = vmatpush1.msra.mxu0 0.0
    %1749 = vmatprep.subr.mxu0 0.0
    %1750 = vmatpush1.msra.mxu0 0.0
    %1751 = vmatprep.subr.mxu0 0.0
    %1752 = vmatpush1.msra.mxu0 0.0
    %1753 = vmatprep.subr.mxu0 0.0
    %1754 = vmatpush1.msra.mxu0 0.0
    %1755 = vmatprep.subr.mxu0 0.0
    %1756 = vmatpush1.msra.mxu0 0.0
    %1757 = vmatprep.subr.mxu0 0.0
    %1758 = vmatpush1.msra.mxu0 0.0
    %1759 = vmatprep.subr.mxu0 0.0
    %1760 = vmatpush1.msra.mxu0 0.0
    %1761 = vmatprep.subr.mxu0 0.0
    %1762 = vmatpush1.msra.mxu0 0.0
    %1763 = vmatprep.subr.mxu0 0.0
    %1764 = vmatpush1.msra.mxu0 0.0
    %1765 = vmatprep.subr.mxu0 0.0
    %1766 = vmatpush1.msra.mxu0 0.0
    %1767 = vmatprep.subr.mxu0 0.0
    %1768 = vmatpush1.msra.mxu0 0.0
    %1769 = vmatprep.subr.mxu0 0.0
    %1770 = vmatpush1.msra.mxu0 0.0
    %1771 = vmatprep.subr.mxu0 0.0
    %1772 = vmatpush1.msra.mxu0 0.0
    %1773 = vmatprep.subr.mxu0 0.0
    %1774 = vmatpush1.msra.mxu0 0.0
    %1775 = vmatprep.subr.mxu0 0.0
    %1776 = vmatpush1.msra.mxu0 0.0
    %1777 = vmatprep.subr.mxu0 0.0
    %1778 = vmatpush1.msra.mxu0 0.0
    %1779 = vmatprep.mubr.f32.mxu0 0.0
    %1780 = vmatmul.mubr.f32.gmra.mrb[0].mxu0 %v1636
    %v1781 = vpop.f32.mrb[0].mxu0
    %v1782 = vadd.f32 0.0, %v1781
    %v1783 = vpop.f32.mrb[0].mxu0
    %1784 = vdwg.mxu0
    %v1785 = vadd.f32 %v1714, %v1782
    %1786 = vmatprep.subr.mxu0 0.0
    %1787 = vmatpush1.msra.mxu0 %v166
    %1788 = vmatprep.subr.mxu0 0.0
    %1789 = vmatpush1.msra.mxu0 %v167
    %1790 = vmatprep.subr.mxu0 0.0
    %1791 = vmatpush1.msra.mxu0 %v168
    %1792 = vmatprep.subr.mxu0 0.0
    %1793 = vmatpush1.msra.mxu0 %v169
    %1794 = vmatprep.subr.mxu0 0.0
    %1795 = vmatpush1.msra.mxu0 %v170
    %1796 = vmatprep.subr.mxu0 0.0
    %1797 = vmatpush1.msra.mxu0 %v171
    %1798 = vmatprep.subr.mxu0 0.0
    %1799 = vmatpush1.msra.mxu0 %v172
    %1800 = vmatprep.subr.mxu0 0.0
    %1801 = vmatpush1.msra.mxu0 %v173
    %1802 = vmatprep.subr.mxu0 0.0
    %1803 = vmatpush1.msra.mxu0 %v174
    %1804 = vmatprep.subr.mxu0 0.0
    %1805 = vmatpush1.msra.mxu0 %v175
    %1806 = vmatprep.subr.mxu0 0.0
    %1807 = vmatpush1.msra.mxu0 %v176
    %1808 = vmatprep.subr.mxu0 0.0
    %1809 = vmatpush1.msra.mxu0 %v177
    %1810 = vmatprep.subr.mxu0 0.0
    %1811 = vmatpush1.msra.mxu0 %v178
    %1812 = vmatprep.subr.mxu0 0.0
    %1813 = vmatpush1.msra.mxu0 %v179
    %1814 = vmatprep.subr.mxu0 0.0
    %1815 = vmatpush1.msra.mxu0 %v180
    %1816 = vmatprep.subr.mxu0 0.0
    %1817 = vmatpush1.msra.mxu0 %v181
    %1818 = vmatprep.subr.mxu0 0.0
    %1819 = vmatpush1.msra.mxu0 0.0
    %1820 = vmatprep.subr.mxu0 0.0
    %1821 = vmatpush1.msra.mxu0 0.0
    %1822 = vmatprep.subr.mxu0 0.0
    %1823 = vmatpush1.msra.mxu0 0.0
    %1824 = vmatprep.subr.mxu0 0.0
    %1825 = vmatpush1.msra.mxu0 0.0
    %1826 = vmatprep.subr.mxu0 0.0
    %1827 = vmatpush1.msra.mxu0 0.0
    %1828 = vmatprep.subr.mxu0 0.0
    %1829 = vmatpush1.msra.mxu0 0.0
    %1830 = vmatprep.subr.mxu0 0.0
    %1831 = vmatpush1.msra.mxu0 0.0
    %1832 = vmatprep.subr.mxu0 0.0
    %1833 = vmatpush1.msra.mxu0 0.0
    %1834 = vmatprep.subr.mxu0 0.0
    %1835 = vmatpush1.msra.mxu0 0.0
    %1836 = vmatprep.subr.mxu0 0.0
    %1837 = vmatpush1.msra.mxu0 0.0
    %1838 = vmatprep.subr.mxu0 0.0
    %1839 = vmatpush1.msra.mxu0 0.0
    %1840 = vmatprep.subr.mxu0 0.0
    %1841 = vmatpush1.msra.mxu0 0.0
    %1842 = vmatprep.subr.mxu0 0.0
    %1843 = vmatpush1.msra.mxu0 0.0
    %1844 = vmatprep.subr.mxu0 0.0
    %1845 = vmatpush1.msra.mxu0 0.0
    %1846 = vmatprep.subr.mxu0 0.0
    %1847 = vmatpush1.msra.mxu0 0.0
    %1848 = vmatprep.subr.mxu0 0.0
    %1849 = vmatpush1.msra.mxu0 0.0
    %1850 = vmatprep.mubr.f32.mxu0 0.0
    %1851 = vmatmul.mubr.f32.gmra.mrb[0].mxu0 %v1785
    %v1852 = vpop.f32.mrb[0].mxu0
    %v1853 = vadd.f32 0.0, %v1852
    %v1854 = vpop.f32.mrb[0].mxu0
    %1855 = vdwg.mxu0
    %v1856 = vadd.f32 %v1713, %v1853
    %v1857 = vadd.f32 %v1856, %v1706
    %v1858 = vmul.f32 %v1857, 0.1
    %v1859 = vsub.f32 %v1634, %v1858
    %v1860 = vmul.f32 %v1785, 0.1
    %v1861 = vsub.f32 %v1636, %v1860
    %1862 = vmatprep.subr.mxu0 %v135
    %1863 = vmatpush1.msra.mxu0 %v134
    %1864 = vmatprep.subr.mxu0 %v137
    %1865 = vmatpush1.msra.mxu0 %v136
    %1866 = vmatprep.subr.mxu0 %v139
    %1867 = vmatpush1.msra.mxu0 %v138
    %1868 = vmatprep.subr.mxu0 %v141
    %1869 = vmatpush1.msra.mxu0 %v140
    %1870 = vmatprep.subr.mxu0 %v143
    %1871 = vmatpush1.msra.mxu0 %v142
    %1872 = vmatprep.subr.mxu0 %v145
    %1873 = vmatpush1.msra.mxu0 %v144
    %1874 = vmatprep.subr.mxu0 %v147
    %1875 = vmatpush1.msra.mxu0 %v146
    %1876 = vmatprep.subr.mxu0 %v149
    %1877 = vmatpush1.msra.mxu0 %v148
    %1878 = vmatprep.subr.mxu0 %v151
    %1879 = vmatpush1.msra.mxu0 %v150
    %1880 = vmatprep.subr.mxu0 %v153
    %1881 = vmatpush1.msra.mxu0 %v152
    %1882 = vmatprep.subr.mxu0 %v155
    %1883 = vmatpush1.msra.mxu0 %v154
    %1884 = vmatprep.subr.mxu0 %v157
    %1885 = vmatpush1.msra.mxu0 %v156
    %1886 = vmatprep.subr.mxu0 %v159
    %1887 = vmatpush1.msra.mxu0 %v158
    %1888 = vmatprep.subr.mxu0 %v161
    %1889 = vmatpush1.msra.mxu0 %v160
    %1890 = vmatprep.subr.mxu0 %v163
    %1891 = vmatpush1.msra.mxu0 %v162
    %1892 = vmatprep.subr.mxu0 %v165
    %1893 = vmatpush1.msra.mxu0 %v164
    %1894 = vmatprep.subr.mxu0 0.0
    %1895 = vmatpush1.msra.mxu0 0.0
    %1896 = vmatprep.subr.mxu0 0.0
    %1897 = vmatpush1.msra.mxu0 0.0
    %1898 = vmatprep.subr.mxu0 0.0
    %1899 = vmatpush1.msra.mxu0 0.0
    %1900 = vmatprep.subr.mxu0 0.0
    %1901 = vmatpush1.msra.mxu0 0.0
    %1902 = vmatprep.subr.mxu0 0.0
    %1903 = vmatpush1.msra.mxu0 0.0
    %1904 = vmatprep.subr.mxu0 0.0
    %1905 = vmatpush1.msra.mxu0 0.0
    %1906 = vmatprep.subr.mxu0 0.0
    %1907 = vmatpush1.msra.mxu0 0.0
    %1908 = vmatprep.subr.mxu0 0.0
    %1909 = vmatpush1.msra.mxu0 0.0
    %1910 = vmatprep.subr.mxu0 0.0
    %1911 = vmatpush1.msra.mxu0 0.0
    %1912 = vmatprep.subr.mxu0 0.0
    %1913 = vmatpush1.msra.mxu0 0.0
    %1914 = vmatprep.subr.mxu0 0.0
    %1915 = vmatpush1.msra.mxu0 0.0
    %1916 = vmatprep.subr.mxu0 0.0
    %1917 = vmatpush1.msra.mxu0 0.0
    %1918 = vmatprep.subr.mxu0 0.0
    %1919 = vmatpush1.msra.mxu0 0.0
    %1920 = vmatprep.subr.mxu0 0.0
    %1921 = vmatpush1.msra.mxu0 0.0
    %1922 = vmatprep.subr.mxu0 0.0
    %1923 = vmatpush1.msra.mxu0 0.0
    %1924 = vmatprep.subr.mxu0 0.0
    %1925 = vmatpush1.msra.mxu0 0.0
    %1926 = vmatprep.mubr.f32.mxu0 0.0
    %1927 = vmatmul.mubr.f32.gmra.mrb[0].mxu0 %v1859
    %v1928 = vpop.f32.mrb[0].mxu0
    %v1929 = vadd.f32 0.0, %v1928
    %v1930 = vpop.f32.mrb[0].mxu0
    %v1931 = vadd.f32 0.0, %v1930
    %1932 = vdwg.mxu0
    %v1933 = vadd.f32 %v1929, %v283
    %v1934 = vmul.f32 %v1933, 0.5
    %v1935 = vtanh.pop %v1934
    %v1936 = vmul.f32 %v1935, 0.5
    %v1937 = vadd.f32 %v1936, 0.5
    %v1938 = vsub.f32 %v1859, %v277
    %v1939 = vsub.f32 %v1861, %v1937
    %1940 = vmatprep.subr.mxu0 0.0
    %1941 = vmatpush1.msra.mxu0 %v182
    %1942 = vmatprep.subr.mxu0 0.0
    %1943 = vmatpush1.msra.mxu0 %v183
    %1944 = vmatprep.subr.mxu0 0.0
    %1945 = vmatpush1.msra.mxu0 %v184
    %1946 = vmatprep.subr.mxu0 0.0
    %1947 = vmatpush1.msra.mxu0 %v185
    %1948 = vmatprep.subr.mxu0 0.0
    %1949 = vmatpush1.msra.mxu0 %v186
    %1950 = vmatprep.subr.mxu0 0.0
    %1951 = vmatpush1.msra.mxu0 %v187
    %1952 = vmatprep.subr.mxu0 0.0
    %1953 = vmatpush1.msra.mxu0 %v188
    %1954 = vmatprep.subr.mxu0 0.0
    %1955 = vmatpush1.msra.mxu0 %v189
    %1956 = vmatprep.subr.mxu0 0.0
    %1957 = vmatpush1.msra.mxu0 %v190
    %1958 = vmatprep.subr.mxu0 0.0
    %1959 = vmatpush1.msra.mxu0 %v191
    %1960 = vmatprep.subr.mxu0 0.0
    %1961 = vmatpush1.msra.mxu0 %v192
    %1962 = vmatprep.subr.mxu0 0.0
    %1963 = vmatpush1.msra.mxu0 %v193
    %1964 = vmatprep.subr.mxu0 0.0
    %1965 = vmatpush1.msra.mxu0 %v194
    %1966 = vmatprep.subr.mxu0 0.0
    %1967 = vmatpush1.msra.mxu0 %v195
    %1968 = vmatprep.subr.mxu0 0.0
    %1969 = vmatpush1.msra.mxu0 %v196
    %1970 = vmatprep.subr.mxu0 0.0
    %1971 = vmatpush1.msra.mxu0 %v197
    %1972 = vmatprep.subr.mxu0 0.0
    %1973 = vmatpush1.msra.mxu0 0.0
    %1974 = vmatprep.subr.mxu0 0.0
    %1975 = vmatpush1.msra.mxu0 0.0
    %1976 = vmatprep.subr.mxu0 0.0
    %1977 = vmatpush1.msra.mxu0 0.0
    %1978 = vmatprep.subr.mxu0 0.0
    %1979 = vmatpush1.msra.mxu0 0.0
    %1980 = vmatprep.subr.mxu0 0.0
    %1981 = vmatpush1.msra.mxu0 0.0
    %1982 = vmatprep.subr.mxu0 0.0
    %1983 = vmatpush1.msra.mxu0 0.0
    %1984 = vmatprep.subr.mxu0 0.0
    %1985 = vmatpush1.msra.mxu0 0.0
    %1986 = vmatprep.subr.mxu0 0.0
    %1987 = vmatpush1.msra.mxu0 0.0
    %1988 = vmatprep.subr.mxu0 0.0
    %1989 = vmatpush1.msra.mxu0 0.0
    %1990 = vmatprep.subr.mxu0 0.0
    %1991 = vmatpush1.msra.mxu0 0.0
    %1992 = vmatprep.subr.mxu0 0.0
    %1993 = vmatpush1.msra.mxu0 0.0
    %1994 = vmatprep.subr.mxu0 0.0
    %1995 = vmatpush1.msra.mxu0 0.0
    %1996 = vmatprep.subr.mxu0 0.0
    %1997 = vmatpush1.msra.mxu0 0.0
    %1998 = vmatprep.subr.mxu0 0.0
    %1999 = vmatpush1.msra.mxu0 0.0
    %2000 = vmatprep.subr.mxu0 0.0
    %2001 = vmatpush1.msra.mxu0 0.0
    %2002 = vmatprep.subr.mxu0 0.0
    %2003 = vmatpush1.msra.mxu0 0.0
    %2004 = vmatprep.mubr.f32.mxu0 0.0
    %2005 = vmatmul.mubr.f32.gmra.mrb[0].mxu0 %v1861
    %v2006 = vpop.f32.mrb[0].mxu0
    %v2007 = vadd.f32 0.0, %v2006
    %v2008 = vpop.f32.mrb[0].mxu0
    %2009 = vdwg.mxu0
    %v2010 = vadd.f32 %v1939, %v2007
    %2011 = vmatprep.subr.mxu0 0.0
    %2012 = vmatpush1.msra.mxu0 %v166
    %2013 = vmatprep.subr.mxu0 0.0
    %2014 = vmatpush1.msra.mxu0 %v167
    %2015 = vmatprep.subr.mxu0 0.0
    %2016 = vmatpush1.msra.mxu0 %v168
    %2017 = vmatprep.subr.mxu0 0.0
    %2018 = vmatpush1.msra.mxu0 %v169
    %2019 = vmatprep.subr.mxu0 0.0
    %2020 = vmatpush1.msra.mxu0 %v170
    %2021 = vmatprep.subr.mxu0 0.0
    %2022 = vmatpush1.msra.mxu0 %v171
    %2023 = vmatprep.subr.mxu0 0.0
    %2024 = vmatpush1.msra.mxu0 %v172
    %2025 = vmatprep.subr.mxu0 0.0
    %2026 = vmatpush1.msra.mxu0 %v173
    %2027 = vmatprep.subr.mxu0 0.0
    %2028 = vmatpush1.msra.mxu0 %v174
    %2029 = vmatprep.subr.mxu0 0.0
    %2030 = vmatpush1.msra.mxu0 %v175
    %2031 = vmatprep.subr.mxu0 0.0
    %2032 = vmatpush1.msra.mxu0 %v176
    %2033 = vmatprep.subr.mxu0 0.0
    %2034 = vmatpush1.msra.mxu0 %v177
    %2035 = vmatprep.subr.mxu0 0.0
    %2036 = vmatpush1.msra.mxu0 %v178
    %2037 = vmatprep.subr.mxu0 0.0
    %2038 = vmatpush1.msra.mxu0 %v179
    %2039 = vmatprep.subr.mxu0 0.0
    %2040 = vmatpush1.msra.mxu0 %v180
    %2041 = vmatprep.subr.mxu0 0.0
    %2042 = vmatpush1.msra.mxu0 %v181
    %2043 = vmatprep.subr.mxu0 0.0
    %2044 = vmatpush1.msra.mxu0 0.0
    %2045 = vmatprep.subr.mxu0 0.0
    %2046 = vmatpush1.msra.mxu0 0.0
    %2047 = vmatprep.subr.mxu0 0.0
    %2048 = vmatpush1.msra.mxu0 0.0
    %2049 = vmatprep.subr.mxu0 0.0
    %2050 = vmatpush1.msra.mxu0 0.0
    %2051 = vmatprep.subr.mxu0 0.0
    %2052 = vmatpush1.msra.mxu0 0.0
    %2053 = vmatprep.subr.mxu0 0.0
    %2054 = vmatpush1.msra.mxu0 0.0
    %2055 = vmatprep.subr.mxu0 0.0
    %2056 = vmatpush1.msra.mxu0 0.0
    %2057 = vmatprep.subr.mxu0 0.0
    %2058 = vmatpush1.msra.mxu0 0.0
    %2059 = vmatprep.subr.mxu0 0.0
    %2060 = vmatpush1.msra.mxu0 0.0
    %2061 = vmatprep.subr.mxu0 0.0
    %2062 = vmatpush1.msra.mxu0 0.0
    %2063 = vmatprep.subr.mxu0 0.0
    %2064 = vmatpush1.msra.mxu0 0.0
    %2065 = vmatprep.subr.mxu0 0.0
    %2066 = vmatpush1.msra.mxu0 0.0
    %2067 = vmatprep.subr.mxu0 0.0
    %2068 = vmatpush1.msra.mxu0 0.0
    %2069 = vmatprep.subr.mxu0 0.0
    %2070 = vmatpush1.msra.mxu0 0.0
    %2071 = vmatprep.subr.mxu0 0.0
    %2072 = vmatpush1.msra.mxu0 0.0
    %2073 = vmatprep.subr.mxu0 0.0
    %2074 = vmatpush1.msra.mxu0 0.0
    %2075 = vmatprep.mubr.f32.mxu0 0.0
    %2076 = vmatmul.mubr.f32.gmra.mrb[0].mxu0 %v2010
    %v2077 = vpop.f32.mrb[0].mxu0
    %v2078 = vadd.f32 0.0, %v2077
    %v2079 = vpop.f32.mrb[0].mxu0
    %2080 = vdwg.mxu0
    %v2081 = vadd.f32 %v1938, %v2078
    %v2082 = vadd.f32 %v2081, %v1931
    %v2083 = vmul.f32 %v2082, 0.1
    %v2084 = vsub.f32 %v1859, %v2083
    %v2085 = vmul.f32 %v2010, 0.1
    %v2086 = vsub.f32 %v1861, %v2085
    %2087 = vmatprep.subr.mxu0 %v135
    %2088 = vmatpush1.msra.mxu0 %v134
    %2089 = vmatprep.subr.mxu0 %v137
    %2090 = vmatpush1.msra.mxu0 %v136
    %2091 = vmatprep.subr.mxu0 %v139
    %2092 = vmatpush1.msra.mxu0 %v138
    %2093 = vmatprep.subr.mxu0 %v141
    %2094 = vmatpush1.msra.mxu0 %v140
    %2095 = vmatprep.subr.mxu0 %v143
    %2096 = vmatpush1.msra.mxu0 %v142
    %2097 = vmatprep.subr.mxu0 %v145
    %2098 = vmatpush1.msra.mxu0 %v144
    %2099 = vmatprep.subr.mxu0 %v147
    %2100 = vmatpush1.msra.mxu0 %v146
    %2101 = vmatprep.subr.mxu0 %v149
    %2102 = vmatpush1.msra.mxu0 %v148
    %2103 = vmatprep.subr.mxu0 %v151
    %2104 = vmatpush1.msra.mxu0 %v150
    %2105 = vmatprep.subr.mxu0 %v153
    %2106 = vmatpush1.msra.mxu0 %v152
    %2107 = vmatprep.subr.mxu0 %v155
    %2108 = vmatpush1.msra.mxu0 %v154
    %2109 = vmatprep.subr.mxu0 %v157
    %2110 = vmatpush1.msra.mxu0 %v156
    %2111 = vmatprep.subr.mxu0 %v159
    %2112 = vmatpush1.msra.mxu0 %v158
    %2113 = vmatprep.subr.mxu0 %v161
    %2114 = vmatpush1.msra.mxu0 %v160
    %2115 = vmatprep.subr.mxu0 %v163
    %2116 = vmatpush1.msra.mxu0 %v162
    %2117 = vmatprep.subr.mxu0 %v165
    %2118 = vmatpush1.msra.mxu0 %v164
    %2119 = vmatprep.subr.mxu0 0.0
    %2120 = vmatpush1.msra.mxu0 0.0
    %2121 = vmatprep.subr.mxu0 0.0
    %2122 = vmatpush1.msra.mxu0 0.0
    %2123 = vmatprep.subr.mxu0 0.0
    %2124 = vmatpush1.msra.mxu0 0.0
    %2125 = vmatprep.subr.mxu0 0.0
    %2126 = vmatpush1.msra.mxu0 0.0
    %2127 = vmatprep.subr.mxu0 0.0
    %2128 = vmatpush1.msra.mxu0 0.0
    %2129 = vmatprep.subr.mxu0 0.0
    %2130 = vmatpush1.msra.mxu0 0.0
    %2131 = vmatprep.subr.mxu0 0.0
    %2132 = vmatpush1.msra.mxu0 0.0
    %2133 = vmatprep.subr.mxu0 0.0
    %2134 = vmatpush1.msra.mxu0 0.0
    %2135 = vmatprep.subr.mxu0 0.0
    %2136 = vmatpush1.msra.mxu0 0.0
    %2137 = vmatprep.subr.mxu0 0.0
    %2138 = vmatpush1.msra.mxu0 0.0
    %2139 = vmatprep.subr.mxu0 0.0
    %2140 = vmatpush1.msra.mxu0 0.0
    %2141 = vmatprep.subr.mxu0 0.0
    %2142 = vmatpush1.msra.mxu0 0.0
    %2143 = vmatprep.subr.mxu0 0.0
    %2144 = vmatpush1.msra.mxu0 0.0
    %2145 = vmatprep.subr.mxu0 0.0
    %2146 = vmatpush1.msra.mxu0 0.0
    %2147 = vmatprep.subr.mxu0 0.0
    %2148 = vmatpush1.msra.mxu0 0.0
    %2149 = vmatprep.subr.mxu0 0.0
    %2150 = vmatpush1.msra.mxu0 0.0
    %2151 = vmatprep.mubr.f32.mxu0 0.0
    %2152 = vmatmul.mubr.f32.gmra.mrb[0].mxu0 %v2084
    %v2153 = vpop.f32.mrb[0].mxu0
    %v2154 = vadd.f32 0.0, %v2153
    %v2155 = vpop.f32.mrb[0].mxu0
    %v2156 = vadd.f32 0.0, %v2155
    %2157 = vdwg.mxu0
    %v2158 = vadd.f32 %v2154, %v283
    %v2159 = vmul.f32 %v2158, 0.5
    %v2160 = vtanh.pop %v2159
    %v2161 = vmul.f32 %v2160, 0.5
    %v2162 = vadd.f32 %v2161, 0.5
    %v2163 = vsub.f32 %v2084, %v277
    %v2164 = vsub.f32 %v2086, %v2162
    %2165 = vmatprep.subr.mxu0 0.0
    %2166 = vmatpush1.msra.mxu0 %v182
    %2167 = vmatprep.subr.mxu0 0.0
    %2168 = vmatpush1.msra.mxu0 %v183
    %2169 = vmatprep.subr.mxu0 0.0
    %2170 = vmatpush1.msra.mxu0 %v184
    %2171 = vmatprep.subr.mxu0 0.0
    %2172 = vmatpush1.msra.mxu0 %v185
    %2173 = vmatprep.subr.mxu0 0.0
    %2174 = vmatpush1.msra.mxu0 %v186
    %2175 = vmatprep.subr.mxu0 0.0
    %2176 = vmatpush1.msra.mxu0 %v187
    %2177 = vmatprep.subr.mxu0 0.0
    %2178 = vmatpush1.msra.mxu0 %v188
    %2179 = vmatprep.subr.mxu0 0.0
    %2180 = vmatpush1.msra.mxu0 %v189
    %2181 = vmatprep.subr.mxu0 0.0
    %2182 = vmatpush1.msra.mxu0 %v190
    %2183 = vmatprep.subr.mxu0 0.0
    %2184 = vmatpush1.msra.mxu0 %v191
    %2185 = vmatprep.subr.mxu0 0.0
    %2186 = vmatpush1.msra.mxu0 %v192
    %2187 = vmatprep.subr.mxu0 0.0
    %2188 = vmatpush1.msra.mxu0 %v193
    %2189 = vmatprep.subr.mxu0 0.0
    %2190 = vmatpush1.msra.mxu0 %v194
    %2191 = vmatprep.subr.mxu0 0.0
    %2192 = vmatpush1.msra.mxu0 %v195
    %2193 = vmatprep.subr.mxu0 0.0
    %2194 = vmatpush1.msra.mxu0 %v196
    %2195 = vmatprep.subr.mxu0 0.0
    %2196 = vmatpush1.msra.mxu0 %v197
    %2197 = vmatprep.subr.mxu0 0.0
    %2198 = vmatpush1.msra.mxu0 0.0
    %2199 = vmatprep.subr.mxu0 0.0
    %2200 = vmatpush1.msra.mxu0 0.0
    %2201 = vmatprep.subr.mxu0 0.0
    %2202 = vmatpush1.msra.mxu0 0.0
    %2203 = vmatprep.subr.mxu0 0.0
    %2204 = vmatpush1.msra.mxu0 0.0
    %2205 = vmatprep.subr.mxu0 0.0
    %2206 = vmatpush1.msra.mxu0 0.0
    %2207 = vmatprep.subr.mxu0 0.0
    %2208 = vmatpush1.msra.mxu0 0.0
    %2209 = vmatprep.subr.mxu0 0.0
    %2210 = vmatpush1.msra.mxu0 0.0
    %2211 = vmatprep.subr.mxu0 0.0
    %2212 = vmatpush1.msra.mxu0 0.0
    %2213 = vmatprep.subr.mxu0 0.0
    %2214 = vmatpush1.msra.mxu0 0.0
    %2215 = vmatprep.subr.mxu0 0.0
    %2216 = vmatpush1.msra.mxu0 0.0
    %2217 = vmatprep.subr.mxu0 0.0
    %2218 = vmatpush1.msra.mxu0 0.0
    %2219 = vmatprep.subr.mxu0 0.0
    %2220 = vmatpush1.msra.mxu0 0.0
    %2221 = vmatprep.subr.mxu0 0.0
    %2222 = vmatpush1.msra.mxu0 0.0
    %2223 = vmatprep.subr.mxu0 0.0
    %2224 = vmatpush1.msra.mxu0 0.0
    %2225 = vmatprep.subr.mxu0 0.0
    %2226 = vmatpush1.msra.mxu0 0.0
    %2227 = vmatprep.subr.mxu0 0.0
    %2228 = vmatpush1.msra.mxu0 0.0
    %2229 = vmatprep.mubr.f32.mxu0 0.0
    %2230 = vmatmul.mubr.f32.gmra.mrb[0].mxu0 %v2086
    %v2231 = vpop.f32.mrb[0].mxu0
    %v2232 = vadd.f32 0.0, %v2231
    %v2233 = vpop.f32.mrb[0].mxu0
    %2234 = vdwg.mxu0
    %v2235 = vadd.f32 %v2164, %v2232
    %2236 = vmatprep.subr.mxu0 0.0
    %2237 = vmatpush1.msra.mxu0 %v166
    %2238 = vmatprep.subr.mxu0 0.0
    %2239 = vmatpush1.msra.mxu0 %v167
    %2240 = vmatprep.subr.mxu0 0.0
    %2241 = vmatpush1.msra.mxu0 %v168
    %2242 = vmatprep.subr.mxu0 0.0
    %2243 = vmatpush1.msra.mxu0 %v169
    %2244 = vmatprep.subr.mxu0 0.0
    %2245 = vmatpush1.msra.mxu0 %v170
    %2246 = vmatprep.subr.mxu0 0.0
    %2247 = vmatpush1.msra.mxu0 %v171
    %2248 = vmatprep.subr.mxu0 0.0
    %2249 = vmatpush1.msra.mxu0 %v172
    %2250 = vmatprep.subr.mxu0 0.0
    %2251 = vmatpush1.msra.mxu0 %v173
    %2252 = vmatprep.subr.mxu0 0.0
    %2253 = vmatpush1.msra.mxu0 %v174
    %2254 = vmatprep.subr.mxu0 0.0
    %2255 = vmatpush1.msra.mxu0 %v175
    %2256 = vmatprep.subr.mxu0 0.0
    %2257 = vmatpush1.msra.mxu0 %v176
    %2258 = vmatprep.subr.mxu0 0.0
    %2259 = vmatpush1.msra.mxu0 %v177
    %2260 = vmatprep.subr.mxu0 0.0
    %2261 = vmatpush1.msra.mxu0 %v178
    %2262 = vmatprep.subr.mxu0 0.0
    %2263 = vmatpush1.msra.mxu0 %v179
    %2264 = vmatprep.subr.mxu0 0.0
    %2265 = vmatpush1.msra.mxu0 %v180
    %2266 = vmatprep.subr.mxu0 0.0
    %2267 = vmatpush1.msra.mxu0 %v181
    %2268 = vmatprep.subr.mxu0 0.0
    %2269 = vmatpush1.msra.mxu0 0.0
    %2270 = vmatprep.subr.mxu0 0.0
    %2271 = vmatpush1.msra.mxu0 0.0
    %2272 = vmatprep.subr.mxu0 0.0
    %2273 = vmatpush1.msra.mxu0 0.0
    %2274 = vmatprep.subr.mxu0 0.0
    %2275 = vmatpush1.msra.mxu0 0.0
    %2276 = vmatprep.subr.mxu0 0.0
    %2277 = vmatpush1.msra.mxu0 0.0
    %2278 = vmatprep.subr.mxu0 0.0
    %2279 = vmatpush1.msra.mxu0 0.0
    %2280 = vmatprep.subr.mxu0 0.0
    %2281 = vmatpush1.msra.mxu0 0.0
    %2282 = vmatprep.subr.mxu0 0.0
    %2283 = vmatpush1.msra.mxu0 0.0
    %2284 = vmatprep.subr.mxu0 0.0
    %2285 = vmatpush1.msra.mxu0 0.0
    %2286 = vmatprep.subr.mxu0 0.0
    %2287 = vmatpush1.msra.mxu0 0.0
    %2288 = vmatprep.subr.mxu0 0.0
    %2289 = vmatpush1.msra.mxu0 0.0
    %2290 = vmatprep.subr.mxu0 0.0
    %2291 = vmatpush1.msra.mxu0 0.0
    %2292 = vmatprep.subr.mxu0 0.0
    %2293 = vmatpush1.msra.mxu0 0.0
    %2294 = vmatprep.subr.mxu0 0.0
    %2295 = vmatpush1.msra.mxu0 0.0
    %2296 = vmatprep.subr.mxu0 0.0
    %2297 = vmatpush1.msra.mxu0 0.0
    %2298 = vmatprep.subr.mxu0 0.0
    %2299 = vmatpush1.msra.mxu0 0.0
    %2300 = vmatprep.mubr.f32.mxu0 0.0
    %2301 = vmatmul.mubr.f32.gmra.mrb[0].mxu0 %v2235
    %v2302 = vpop.f32.mrb[0].mxu0
    %v2303 = vadd.f32 0.0, %v2302
    %v2304 = vpop.f32.mrb[0].mxu0
    %2305 = vdwg.mxu0
    %v2306 = vadd.f32 %v2163, %v2303
    %v2307 = vadd.f32 %v2306, %v2156
    %v2308 = vmul.f32 %v2307, 0.1
    %v2309 = vsub.f32 %v2084, %v2308
    %v2310 = vmul.f32 %v2235, 0.1
    %v2311 = vsub.f32 %v2086, %v2310
    %2312 = vmatprep.subr.mxu0 %v135
    %2313 = vmatpush1.msra.mxu0 %v134
    %2314 = vmatprep.subr.mxu0 %v137
    %2315 = vmatpush1.msra.mxu0 %v136
    %2316 = vmatprep.subr.mxu0 %v139
    %2317 = vmatpush1.msra.mxu0 %v138
    %2318 = vmatprep.subr.mxu0 %v141
    %2319 = vmatpush1.msra.mxu0 %v140
    %2320 = vmatprep.subr.mxu0 %v143
    %2321 = vmatpush1.msra.mxu0 %v142
    %2322 = vmatprep.subr.mxu0 %v145
    %2323 = vmatpush1.msra.mxu0 %v144
    %2324 = vmatprep.subr.mxu0 %v147
    %2325 = vmatpush1.msra.mxu0 %v146
    %2326 = vmatprep.subr.mxu0 %v149
    %2327 = vmatpush1.msra.mxu0 %v148
    %2328 = vmatprep.subr.mxu0 %v151
    %2329 = vmatpush1.msra.mxu0 %v150
    %2330 = vmatprep.subr.mxu0 %v153
    %2331 = vmatpush1.msra.mxu0 %v152
    %2332 = vmatprep.subr.mxu0 %v155
    %2333 = vmatpush1.msra.mxu0 %v154
    %2334 = vmatprep.subr.mxu0 %v157
    %2335 = vmatpush1.msra.mxu0 %v156
    %2336 = vmatprep.subr.mxu0 %v159
    %2337 = vmatpush1.msra.mxu0 %v158
    %2338 = vmatprep.subr.mxu0 %v161
    %2339 = vmatpush1.msra.mxu0 %v160
    %2340 = vmatprep.subr.mxu0 %v163
    %2341 = vmatpush1.msra.mxu0 %v162
    %2342 = vmatprep.subr.mxu0 %v165
    %2343 = vmatpush1.msra.mxu0 %v164
    %2344 = vmatprep.subr.mxu0 0.0
    %2345 = vmatpush1.msra.mxu0 0.0
    %2346 = vmatprep.subr.mxu0 0.0
    %2347 = vmatpush1.msra.mxu0 0.0
    %2348 = vmatprep.subr.mxu0 0.0
    %2349 = vmatpush1.msra.mxu0 0.0
    %2350 = vmatprep.subr.mxu0 0.0
    %2351 = vmatpush1.msra.mxu0 0.0
    %2352 = vmatprep.subr.mxu0 0.0
    %2353 = vmatpush1.msra.mxu0 0.0
    %2354 = vmatprep.subr.mxu0 0.0
    %2355 = vmatpush1.msra.mxu0 0.0
    %2356 = vmatprep.subr.mxu0 0.0
    %2357 = vmatpush1.msra.mxu0 0.0
    %2358 = vmatprep.subr.mxu0 0.0
    %2359 = vmatpush1.msra.mxu0 0.0
    %2360 = vmatprep.subr.mxu0 0.0
    %2361 = vmatpush1.msra.mxu0 0.0
    %2362 = vmatprep.subr.mxu0 0.0
    %2363 = vmatpush1.msra.mxu0 0.0
    %2364 = vmatprep.subr.mxu0 0.0
    %2365 = vmatpush1.msra.mxu0 0.0
    %2366 = vmatprep.subr.mxu0 0.0
    %2367 = vmatpush1.msra.mxu0 0.0
    %2368 = vmatprep.subr.mxu0 0.0
    %2369 = vmatpush1.msra.mxu0 0.0
    %2370 = vmatprep.subr.mxu0 0.0
    %2371 = vmatpush1.msra.mxu0 0.0
    %2372 = vmatprep.subr.mxu0 0.0
    %2373 = vmatpush1.msra.mxu0 0.0
    %2374 = vmatprep.subr.mxu0 0.0
    %2375 = vmatpush1.msra.mxu0 0.0
    %2376 = vmatprep.mubr.f32.mxu0 0.0
    %2377 = vmatmul.mubr.f32.gmra.mrb[0].mxu0 %v2309
    %v2378 = vpop.f32.mrb[0].mxu0
    %v2379 = vadd.f32 0.0, %v2378
    %v2380 = vpop.f32.mrb[0].mxu0
    %v2381 = vadd.f32 0.0, %v2380
    %2382 = vdwg.mxu0
    %v2383 = vadd.f32 %v2379, %v283
    %v2384 = vmul.f32 %v2383, 0.5
    %v2385 = vtanh.pop %v2384
    %v2386 = vmul.f32 %v2385, 0.5
    %v2387 = vadd.f32 %v2386, 0.5
    %v2388 = vsub.f32 %v2309, %v277
    %v2389 = vsub.f32 %v2311, %v2387
    %2390 = vmatprep.subr.mxu0 0.0
    %2391 = vmatpush1.msra.mxu0 %v182
    %2392 = vmatprep.subr.mxu0 0.0
    %2393 = vmatpush1.msra.mxu0 %v183
    %2394 = vmatprep.subr.mxu0 0.0
    %2395 = vmatpush1.msra.mxu0 %v184
    %2396 = vmatprep.subr.mxu0 0.0
    %2397 = vmatpush1.msra.mxu0 %v185
    %2398 = vmatprep.subr.mxu0 0.0
    %2399 = vmatpush1.msra.mxu0 %v186
    %2400 = vmatprep.subr.mxu0 0.0
    %2401 = vmatpush1.msra.mxu0 %v187
    %2402 = vmatprep.subr.mxu0 0.0
    %2403 = vmatpush1.msra.mxu0 %v188
    %2404 = vmatprep.subr.mxu0 0.0
    %2405 = vmatpush1.msra.mxu0 %v189
    %2406 = vmatprep.subr.mxu0 0.0
    %2407 = vmatpush1.msra.mxu0 %v190
    %2408 = vmatprep.subr.mxu0 0.0
    %2409 = vmatpush1.msra.mxu0 %v191
    %2410 = vmatprep.subr.mxu0 0.0
    %2411 = vmatpush1.msra.mxu0 %v192
    %2412 = vmatprep.subr.mxu0 0.0
    %2413 = vmatpush1.msra.mxu0 %v193
    %2414 = vmatprep.subr.mxu0 0.0
    %2415 = vmatpush1.msra.mxu0 %v194
    %2416 = vmatprep.subr.mxu0 0.0
    %2417 = vmatpush1.msra.mxu0 %v195
    %2418 = vmatprep.subr.mxu0 0.0
    %2419 = vmatpush1.msra.mxu0 %v196
    %2420 = vmatprep.subr.mxu0 0.0
    %2421 = vmatpush1.msra.mxu0 %v197
    %2422 = vmatprep.subr.mxu0 0.0
    %2423 = vmatpush1.msra.mxu0 0.0
    %2424 = vmatprep.subr.mxu0 0.0
    %2425 = vmatpush1.msra.mxu0 0.0
    %2426 = vmatprep.subr.mxu0 0.0
    %2427 = vmatpush1.msra.mxu0 0.0
    %2428 = vmatprep.subr.mxu0 0.0
    %2429 = vmatpush1.msra.mxu0 0.0
    %2430 = vmatprep.subr.mxu0 0.0
    %2431 = vmatpush1.msra.mxu0 0.0
    %2432 = vmatprep.subr.mxu0 0.0
    %2433 = vmatpush1.msra.mxu0 0.0
    %2434 = vmatprep.subr.mxu0 0.0
    %2435 = vmatpush1.msra.mxu0 0.0
    %2436 = vmatprep.subr.mxu0 0.0
    %2437 = vmatpush1.msra.mxu0 0.0
    %2438 = vmatprep.subr.mxu0 0.0
    %2439 = vmatpush1.msra.mxu0 0.0
    %2440 = vmatprep.subr.mxu0 0.0
    %2441 = vmatpush1.msra.mxu0 0.0
    %2442 = vmatprep.subr.mxu0 0.0
    %2443 = vmatpush1.msra.mxu0 0.0
    %2444 = vmatprep.subr.mxu0 0.0
    %2445 = vmatpush1.msra.mxu0 0.0
    %2446 = vmatprep.subr.mxu0 0.0
    %2447 = vmatpush1.msra.mxu0 0.0
    %2448 = vmatprep.subr.mxu0 0.0
    %2449 = vmatpush1.msra.mxu0 0.0
    %2450 = vmatprep.subr.mxu0 0.0
    %2451 = vmatpush1.msra.mxu0 0.0
    %2452 = vmatprep.subr.mxu0 0.0
    %2453 = vmatpush1.msra.mxu0 0.0
    %2454 = vmatprep.mubr.f32.mxu0 0.0
    %2455 = vmatmul.mubr.f32.gmra.mrb[0].mxu0 %v2311
    %v2456 = vpop.f32.mrb[0].mxu0
    %v2457 = vadd.f32 0.0, %v2456
    %v2458 = vpop.f32.mrb[0].mxu0
    %2459 = vdwg.mxu0
    %v2460 = vadd.f32 %v2389, %v2457
    %2461 = vmatprep.subr.mxu0 0.0
    %2462 = vmatpush1.msra.mxu0 %v166
    %2463 = vmatprep.subr.mxu0 0.0
    %2464 = vmatpush1.msra.mxu0 %v167
    %2465 = vmatprep.subr.mxu0 0.0
    %2466 = vmatpush1.msra.mxu0 %v168
    %2467 = vmatprep.subr.mxu0 0.0
    %2468 = vmatpush1.msra.mxu0 %v169
    %2469 = vmatprep.subr.mxu0 0.0
    %2470 = vmatpush1.msra.mxu0 %v170
    %2471 = vmatprep.subr.mxu0 0.0
    %2472 = vmatpush1.msra.mxu0 %v171
    %2473 = vmatprep.subr.mxu0 0.0
    %2474 = vmatpush1.msra.mxu0 %v172
    %2475 = vmatprep.subr.mxu0 0.0
    %2476 = vmatpush1.msra.mxu0 %v173
    %2477 = vmatprep.subr.mxu0 0.0
    %2478 = vmatpush1.msra.mxu0 %v174
    %2479 = vmatprep.subr.mxu0 0.0
    %2480 = vmatpush1.msra.mxu0 %v175
    %2481 = vmatprep.subr.mxu0 0.0
    %2482 = vmatpush1.msra.mxu0 %v176
    %2483 = vmatprep.subr.mxu0 0.0
    %2484 = vmatpush1.msra.mxu0 %v177
    %2485 = vmatprep.subr.mxu0 0.0
    %2486 = vmatpush1.msra.mxu0 %v178
    %2487 = vmatprep.subr.mxu0 0.0
    %2488 = vmatpush1.msra.mxu0 %v179
    %2489 = vmatprep.subr.mxu0 0.0
    %2490 = vmatpush1.msra.mxu0 %v180
    %2491 = vmatprep.subr.mxu0 0.0
    %2492 = vmatpush1.msra.mxu0 %v181
    %2493 = vmatprep.subr.mxu0 0.0
    %2494 = vmatpush1.msra.mxu0 0.0
    %2495 = vmatprep.subr.mxu0 0.0
    %2496 = vmatpush1.msra.mxu0 0.0
    %2497 = vmatprep.subr.mxu0 0.0
    %2498 = vmatpush1.msra.mxu0 0.0
    %2499 = vmatprep.subr.mxu0 0.0
    %2500 = vmatpush1.msra.mxu0 0.0
    %2501 = vmatprep.subr.mxu0 0.0
    %2502 = vmatpush1.msra.mxu0 0.0
    %2503 = vmatprep.subr.mxu0 0.0
    %2504 = vmatpush1.msra.mxu0 0.0
    %2505 = vmatprep.subr.mxu0 0.0
    %2506 = vmatpush1.msra.mxu0 0.0
    %2507 = vmatprep.subr.mxu0 0.0
    %2508 = vmatpush1.msra.mxu0 0.0
    %2509 = vmatprep.subr.mxu0 0.0
    %2510 = vmatpush1.msra.mxu0 0.0
    %2511 = vmatprep.subr.mxu0 0.0
    %2512 = vmatpush1.msra.mxu0 0.0
    %2513 = vmatprep.subr.mxu0 0.0
    %2514 = vmatpush1.msra.mxu0 0.0
    %2515 = vmatprep.subr.mxu0 0.0
    %2516 = vmatpush1.msra.mxu0 0.0
    %2517 = vmatprep.subr.mxu0 0.0
    %2518 = vmatpush1.msra.mxu0 0.0
    %2519 = vmatprep.subr.mxu0 0.0
    %2520 = vmatpush1.msra.mxu0 0.0
    %2521 = vmatprep.subr.mxu0 0.0
    %2522 = vmatpush1.msra.mxu0 0.0
    %2523 = vmatprep.subr.mxu0 0.0
    %2524 = vmatpush1.msra.mxu0 0.0
    %2525 = vmatprep.mubr.f32.mxu0 0.0
    %2526 = vmatmul.mubr.f32.gmra.mrb[0].mxu0 %v2460
    %v2527 = vpop.f32.mrb[0].mxu0
    %v2528 = vadd.f32 0.0, %v2527
    %v2529 = vpop.f32.mrb[0].mxu0
    %2530 = vdwg.mxu0
    %v2531 = vadd.f32 %v2388, %v2528
    %v2532 = vadd.f32 %v2531, %v2381
    %v2533 = vmul.f32 %v2532, 0.1
    %v2534 = vsub.f32 %v2309, %v2533
    %v2535 = vmul.f32 %v2460, 0.1
    %v2536 = vsub.f32 %v2311, %v2535
    %2537 = vmatprep.subr.mxu0 %v135
    %2538 = vmatpush1.msra.mxu0 %v134
    %2539 = vmatprep.subr.mxu0 %v137
    %2540 = vmatpush1.msra.mxu0 %v136
    %2541 = vmatprep.subr.mxu0 %v139
    %2542 = vmatpush1.msra.mxu0 %v138
    %2543 = vmatprep.subr.mxu0 %v141
    %2544 = vmatpush1.msra.mxu0 %v140
    %2545 = vmatprep.subr.mxu0 %v143
    %2546 = vmatpush1.msra.mxu0 %v142
    %2547 = vmatprep.subr.mxu0 %v145
    %2548 = vmatpush1.msra.mxu0 %v144
    %2549 = vmatprep.subr.mxu0 %v147
    %2550 = vmatpush1.msra.mxu0 %v146
    %2551 = vmatprep.subr.mxu0 %v149
    %2552 = vmatpush1.msra.mxu0 %v148
    %2553 = vmatprep.subr.mxu0 %v151
    %2554 = vmatpush1.msra.mxu0 %v150
    %2555 = vmatprep.subr.mxu0 %v153
    %2556 = vmatpush1.msra.mxu0 %v152
    %2557 = vmatprep.subr.mxu0 %v155
    %2558 = vmatpush1.msra.mxu0 %v154
    %2559 = vmatprep.subr.mxu0 %v157
    %2560 = vmatpush1.msra.mxu0 %v156
    %2561 = vmatprep.subr.mxu0 %v159
    %2562 = vmatpush1.msra.mxu0 %v158
    %2563 = vmatprep.subr.mxu0 %v161
    %2564 = vmatpush1.msra.mxu0 %v160
    %2565 = vmatprep.subr.mxu0 %v163
    %2566 = vmatpush1.msra.mxu0 %v162
    %2567 = vmatprep.subr.mxu0 %v165
    %2568 = vmatpush1.msra.mxu0 %v164
    %2569 = vmatprep.subr.mxu0 0.0
    %2570 = vmatpush1.msra.mxu0 0.0
    %2571 = vmatprep.subr.mxu0 0.0
    %2572 = vmatpush1.msra.mxu0 0.0
    %2573 = vmatprep.subr.mxu0 0.0
    %2574 = vmatpush1.msra.mxu0 0.0
    %2575 = vmatprep.subr.mxu0 0.0
    %2576 = vmatpush1.msra.mxu0 0.0
    %2577 = vmatprep.subr.mxu0 0.0
    %2578 = vmatpush1.msra.mxu0 0.0
    %2579 = vmatprep.subr.mxu0 0.0
    %2580 = vmatpush1.msra.mxu0 0.0
    %2581 = vmatprep.subr.mxu0 0.0
    %2582 = vmatpush1.msra.mxu0 0.0
    %2583 = vmatprep.subr.mxu0 0.0
    %2584 = vmatpush1.msra.mxu0 0.0
    %2585 = vmatprep.subr.mxu0 0.0
    %2586 = vmatpush1.msra.mxu0 0.0
    %2587 = vmatprep.subr.mxu0 0.0
    %2588 = vmatpush1.msra.mxu0 0.0
    %2589 = vmatprep.subr.mxu0 0.0
    %2590 = vmatpush1.msra.mxu0 0.0
    %2591 = vmatprep.subr.mxu0 0.0
    %2592 = vmatpush1.msra.mxu0 0.0
    %2593 = vmatprep.subr.mxu0 0.0
    %2594 = vmatpush1.msra.mxu0 0.0
    %2595 = vmatprep.subr.mxu0 0.0
    %2596 = vmatpush1.msra.mxu0 0.0
    %2597 = vmatprep.subr.mxu0 0.0
    %2598 = vmatpush1.msra.mxu0 0.0
    %2599 = vmatprep.subr.mxu0 0.0
    %2600 = vmatpush1.msra.mxu0 0.0
    %2601 = vmatprep.mubr.f32.mxu0 0.0
    %2602 = vmatmul.mubr.f32.gmra.mrb[0].mxu0 %v2534
    %v2603 = vpop.f32.mrb[0].mxu0
    %v2604 = vadd.f32 0.0, %v2603
    %v2605 = vpop.f32.mrb[0].mxu0
    %v2606 = vadd.f32 0.0, %v2605
    %2607 = vdwg.mxu0
    %v2608 = vadd.f32 %v2604, %v283
    %v2609 = vmul.f32 %v2608, 0.5
    %v2610 = vtanh.pop %v2609
    %v2611 = vmul.f32 %v2610, 0.5
    %v2612 = vadd.f32 %v2611, 0.5
    %v2613 = vsub.f32 %v2534, %v277
    %v2614 = vsub.f32 %v2536, %v2612
    %2615 = vmatprep.subr.mxu0 0.0
    %2616 = vmatpush1.msra.mxu0 %v182
    %2617 = vmatprep.subr.mxu0 0.0
    %2618 = vmatpush1.msra.mxu0 %v183
    %2619 = vmatprep.subr.mxu0 0.0
    %2620 = vmatpush1.msra.mxu0 %v184
    %2621 = vmatprep.subr.mxu0 0.0
    %2622 = vmatpush1.msra.mxu0 %v185
    %2623 = vmatprep.subr.mxu0 0.0
    %2624 = vmatpush1.msra.mxu0 %v186
    %2625 = vmatprep.subr.mxu0 0.0
    %2626 = vmatpush1.msra.mxu0 %v187
    %2627 = vmatprep.subr.mxu0 0.0
    %2628 = vmatpush1.msra.mxu0 %v188
    %2629 = vmatprep.subr.mxu0 0.0
    %2630 = vmatpush1.msra.mxu0 %v189
    %2631 = vmatprep.subr.mxu0 0.0
    %2632 = vmatpush1.msra.mxu0 %v190
    %2633 = vmatprep.subr.mxu0 0.0
    %2634 = vmatpush1.msra.mxu0 %v191
    %2635 = vmatprep.subr.mxu0 0.0
    %2636 = vmatpush1.msra.mxu0 %v192
    %2637 = vmatprep.subr.mxu0 0.0
    %2638 = vmatpush1.msra.mxu0 %v193
    %2639 = vmatprep.subr.mxu0 0.0
    %2640 = vmatpush1.msra.mxu0 %v194
    %2641 = vmatprep.subr.mxu0 0.0
    %2642 = vmatpush1.msra.mxu0 %v195
    %2643 = vmatprep.subr.mxu0 0.0
    %2644 = vmatpush1.msra.mxu0 %v196
    %2645 = vmatprep.subr.mxu0 0.0
    %2646 = vmatpush1.msra.mxu0 %v197
    %2647 = vmatprep.subr.mxu0 0.0
    %2648 = vmatpush1.msra.mxu0 0.0
    %2649 = vmatprep.subr.mxu0 0.0
    %2650 = vmatpush1.msra.mxu0 0.0
    %2651 = vmatprep.subr.mxu0 0.0
    %2652 = vmatpush1.msra.mxu0 0.0
    %2653 = vmatprep.subr.mxu0 0.0
    %2654 = vmatpush1.msra.mxu0 0.0
    %2655 = vmatprep.subr.mxu0 0.0
    %2656 = vmatpush1.msra.mxu0 0.0
    %2657 = vmatprep.subr.mxu0 0.0
    %2658 = vmatpush1.msra.mxu0 0.0
    %2659 = vmatprep.subr.mxu0 0.0
    %2660 = vmatpush1.msra.mxu0 0.0
    %2661 = vmatprep.subr.mxu0 0.0
    %2662 = vmatpush1.msra.mxu0 0.0
    %2663 = vmatprep.subr.mxu0 0.0
    %2664 = vmatpush1.msra.mxu0 0.0
    %2665 = vmatprep.subr.mxu0 0.0
    %2666 = vmatpush1.msra.mxu0 0.0
    %2667 = vmatprep.subr.mxu0 0.0
    %2668 = vmatpush1.msra.mxu0 0.0
    %2669 = vmatprep.subr.mxu0 0.0
    %2670 = vmatpush1.msra.mxu0 0.0
    %2671 = vmatprep.subr.mxu0 0.0
    %2672 = vmatpush1.msra.mxu0 0.0
    %2673 = vmatprep.subr.mxu0 0.0
    %2674 = vmatpush1.msra.mxu0 0.0
    %2675 = vmatprep.subr.mxu0 0.0
    %2676 = vmatpush1.msra.mxu0 0.0
    %2677 = vmatprep.subr.mxu0 0.0
    %2678 = vmatpush1.msra.mxu0 0.0
    %2679 = vmatprep.mubr.f32.mxu0 0.0
    %2680 = vmatmul.mubr.f32.gmra.mrb[0].mxu0 %v2536
    %v2681 = vpop.f32.mrb[0].mxu0
    %v2682 = vadd.f32 0.0, %v2681
    %v2683 = vpop.f32.mrb[0].mxu0
    %2684 = vdwg.mxu0
    %v2685 = vadd.f32 %v2614, %v2682
    %2686 = vmatprep.subr.mxu0 0.0
    %2687 = vmatpush1.msra.mxu0 %v166
    %2688 = vmatprep.subr.mxu0 0.0
    %2689 = vmatpush1.msra.mxu0 %v167
    %2690 = vmatprep.subr.mxu0 0.0
    %2691 = vmatpush1.msra.mxu0 %v168
    %2692 = vmatprep.subr.mxu0 0.0
    %2693 = vmatpush1.msra.mxu0 %v169
    %2694 = vmatprep.subr.mxu0 0.0
    %2695 = vmatpush1.msra.mxu0 %v170
    %2696 = vmatprep.subr.mxu0 0.0
    %2697 = vmatpush1.msra.mxu0 %v171
    %2698 = vmatprep.subr.mxu0 0.0
    %2699 = vmatpush1.msra.mxu0 %v172
    %2700 = vmatprep.subr.mxu0 0.0
    %2701 = vmatpush1.msra.mxu0 %v173
    %2702 = vmatprep.subr.mxu0 0.0
    %2703 = vmatpush1.msra.mxu0 %v174
    %2704 = vmatprep.subr.mxu0 0.0
    %2705 = vmatpush1.msra.mxu0 %v175
    %2706 = vmatprep.subr.mxu0 0.0
    %2707 = vmatpush1.msra.mxu0 %v176
    %2708 = vmatprep.subr.mxu0 0.0
    %2709 = vmatpush1.msra.mxu0 %v177
    %2710 = vmatprep.subr.mxu0 0.0
    %2711 = vmatpush1.msra.mxu0 %v178
    %2712 = vmatprep.subr.mxu0 0.0
    %2713 = vmatpush1.msra.mxu0 %v179
    %2714 = vmatprep.subr.mxu0 0.0
    %2715 = vmatpush1.msra.mxu0 %v180
    %2716 = vmatprep.subr.mxu0 0.0
    %2717 = vmatpush1.msra.mxu0 %v181
    %2718 = vmatprep.subr.mxu0 0.0
    %2719 = vmatpush1.msra.mxu0 0.0
    %2720 = vmatprep.subr.mxu0 0.0
    %2721 = vmatpush1.msra.mxu0 0.0
    %2722 = vmatprep.subr.mxu0 0.0
    %2723 = vmatpush1.msra.mxu0 0.0
    %2724 = vmatprep.subr.mxu0 0.0
    %2725 = vmatpush1.msra.mxu0 0.0
    %2726 = vmatprep.subr.mxu0 0.0
    %2727 = vmatpush1.msra.mxu0 0.0
    %2728 = vmatprep.subr.mxu0 0.0
    %2729 = vmatpush1.msra.mxu0 0.0
    %2730 = vmatprep.subr.mxu0 0.0
    %2731 = vmatpush1.msra.mxu0 0.0
    %2732 = vmatprep.subr.mxu0 0.0
    %2733 = vmatpush1.msra.mxu0 0.0
    %2734 = vmatprep.subr.mxu0 0.0
    %2735 = vmatpush1.msra.mxu0 0.0
    %2736 = vmatprep.subr.mxu0 0.0
    %2737 = vmatpush1.msra.mxu0 0.0
    %2738 = vmatprep.subr.mxu0 0.0
    %2739 = vmatpush1.msra.mxu0 0.0
    %2740 = vmatprep.subr.mxu0 0.0
    %2741 = vmatpush1.msra.mxu0 0.0
    %2742 = vmatprep.subr.mxu0 0.0
    %2743 = vmatpush1.msra.mxu0 0.0
    %2744 = vmatprep.subr.mxu0 0.0
    %2745 = vmatpush1.msra.mxu0 0.0
    %2746 = vmatprep.subr.mxu0 0.0
    %2747 = vmatpush1.msra.mxu0 0.0
    %2748 = vmatprep.subr.mxu0 0.0
    %2749 = vmatpush1.msra.mxu0 0.0
    %2750 = vmatprep.mubr.f32.mxu0 0.0
    %2751 = vmatmul.mubr.f32.gmra.mrb[0].mxu0 %v2685
    %v2752 = vpop.f32.mrb[0].mxu0
    %v2753 = vadd.f32 0.0, %v2752
    %v2754 = vpop.f32.mrb[0].mxu0
    %2755 = vdwg.mxu0
    %v2756 = vadd.f32 %v2613, %v2753
    %v2757 = vadd.f32 %v2756, %v2606
    %v2758 = vmul.f32 %v2757, 0.1
    %v2759 = vsub.f32 %v2534, %v2758
    %v2760 = vmul.f32 %v2685, 0.1
    %v2761 = vsub.f32 %v2536, %v2760
    %2762 = vmatprep.subr.mxu0 %v135
    %2763 = vmatpush1.msra.mxu0 %v134
    %2764 = vmatprep.subr.mxu0 %v137
    %2765 = vmatpush1.msra.mxu0 %v136
    %2766 = vmatprep.subr.mxu0 %v139
    %2767 = vmatpush1.msra.mxu0 %v138
    %2768 = vmatprep.subr.mxu0 %v141
    %2769 = vmatpush1.msra.mxu0 %v140
    %2770 = vmatprep.subr.mxu0 %v143
    %2771 = vmatpush1.msra.mxu0 %v142
    %2772 = vmatprep.subr.mxu0 %v145
    %2773 = vmatpush1.msra.mxu0 %v144
    %2774 = vmatprep.subr.mxu0 %v147
    %2775 = vmatpush1.msra.mxu0 %v146
    %2776 = vmatprep.subr.mxu0 %v149
    %2777 = vmatpush1.msra.mxu0 %v148
    %2778 = vmatprep.subr.mxu0 %v151
    %2779 = vmatpush1.msra.mxu0 %v150
    %2780 = vmatprep.subr.mxu0 %v153
    %2781 = vmatpush1.msra.mxu0 %v152
    %2782 = vmatprep.subr.mxu0 %v155
    %2783 = vmatpush1.msra.mxu0 %v154
    %2784 = vmatprep.subr.mxu0 %v157
    %2785 = vmatpush1.msra.mxu0 %v156
    %2786 = vmatprep.subr.mxu0 %v159
    %2787 = vmatpush1.msra.mxu0 %v158
    %2788 = vmatprep.subr.mxu0 %v161
    %2789 = vmatpush1.msra.mxu0 %v160
    %2790 = vmatprep.subr.mxu0 %v163
    %2791 = vmatpush1.msra.mxu0 %v162
    %2792 = vmatprep.subr.mxu0 %v165
    %2793 = vmatpush1.msra.mxu0 %v164
    %2794 = vmatprep.subr.mxu0 0.0
    %2795 = vmatpush1.msra.mxu0 0.0
    %2796 = vmatprep.subr.mxu0 0.0
    %2797 = vmatpush1.msra.mxu0 0.0
    %2798 = vmatprep.subr.mxu0 0.0
    %2799 = vmatpush1.msra.mxu0 0.0
    %2800 = vmatprep.subr.mxu0 0.0
    %2801 = vmatpush1.msra.mxu0 0.0
    %2802 = vmatprep.subr.mxu0 0.0
    %2803 = vmatpush1.msra.mxu0 0.0
    %2804 = vmatprep.subr.mxu0 0.0
    %2805 = vmatpush1.msra.mxu0 0.0
    %2806 = vmatprep.subr.mxu0 0.0
    %2807 = vmatpush1.msra.mxu0 0.0
    %2808 = vmatprep.subr.mxu0 0.0
    %2809 = vmatpush1.msra.mxu0 0.0
    %2810 = vmatprep.subr.mxu0 0.0
    %2811 = vmatpush1.msra.mxu0 0.0
    %2812 = vmatprep.subr.mxu0 0.0
    %2813 = vmatpush1.msra.mxu0 0.0
    %2814 = vmatprep.subr.mxu0 0.0
    %2815 = vmatpush1.msra.mxu0 0.0
    %2816 = vmatprep.subr.mxu0 0.0
    %2817 = vmatpush1.msra.mxu0 0.0
    %2818 = vmatprep.subr.mxu0 0.0
    %2819 = vmatpush1.msra.mxu0 0.0
    %2820 = vmatprep.subr.mxu0 0.0
    %2821 = vmatpush1.msra.mxu0 0.0
    %2822 = vmatprep.subr.mxu0 0.0
    %2823 = vmatpush1.msra.mxu0 0.0
    %2824 = vmatprep.subr.mxu0 0.0
    %2825 = vmatpush1.msra.mxu0 0.0
    %2826 = vmatprep.mubr.f32.mxu0 0.0
    %2827 = vmatmul.mubr.f32.gmra.mrb[0].mxu0 %v2759
    %v2828 = vpop.f32.mrb[0].mxu0
    %v2829 = vadd.f32 0.0, %v2828
    %v2830 = vpop.f32.mrb[0].mxu0
    %v2831 = vadd.f32 0.0, %v2830
    %2832 = vdwg.mxu0
    %v2833 = vadd.f32 %v2829, %v283
    %v2834 = vmul.f32 %v2833, 0.5
    %v2835 = vtanh.pop %v2834
    %v2836 = vmul.f32 %v2835, 0.5
    %v2837 = vadd.f32 %v2836, 0.5
    %v2838 = vsub.f32 %v2759, %v277
    %v2839 = vsub.f32 %v2761, %v2837
    %2840 = vmatprep.subr.mxu0 0.0
    %2841 = vmatpush1.msra.mxu0 %v182
    %2842 = vmatprep.subr.mxu0 0.0
    %2843 = vmatpush1.msra.mxu0 %v183
    %2844 = vmatprep.subr.mxu0 0.0
    %2845 = vmatpush1.msra.mxu0 %v184
    %2846 = vmatprep.subr.mxu0 0.0
    %2847 = vmatpush1.msra.mxu0 %v185
    %2848 = vmatprep.subr.mxu0 0.0
    %2849 = vmatpush1.msra.mxu0 %v186
    %2850 = vmatprep.subr.mxu0 0.0
    %2851 = vmatpush1.msra.mxu0 %v187
    %2852 = vmatprep.subr.mxu0 0.0
    %2853 = vmatpush1.msra.mxu0 %v188
    %2854 = vmatprep.subr.mxu0 0.0
    %2855 = vmatpush1.msra.mxu0 %v189
    %2856 = vmatprep.subr.mxu0 0.0
    %2857 = vmatpush1.msra.mxu0 %v190
    %2858 = vmatprep.subr.mxu0 0.0
    %2859 = vmatpush1.msra.mxu0 %v191
    %2860 = vmatprep.subr.mxu0 0.0
    %2861 = vmatpush1.msra.mxu0 %v192
    %2862 = vmatprep.subr.mxu0 0.0
    %2863 = vmatpush1.msra.mxu0 %v193
    %2864 = vmatprep.subr.mxu0 0.0
    %2865 = vmatpush1.msra.mxu0 %v194
    %2866 = vmatprep.subr.mxu0 0.0
    %2867 = vmatpush1.msra.mxu0 %v195
    %2868 = vmatprep.subr.mxu0 0.0
    %2869 = vmatpush1.msra.mxu0 %v196
    %2870 = vmatprep.subr.mxu0 0.0
    %2871 = vmatpush1.msra.mxu0 %v197
    %2872 = vmatprep.subr.mxu0 0.0
    %2873 = vmatpush1.msra.mxu0 0.0
    %2874 = vmatprep.subr.mxu0 0.0
    %2875 = vmatpush1.msra.mxu0 0.0
    %2876 = vmatprep.subr.mxu0 0.0
    %2877 = vmatpush1.msra.mxu0 0.0
    %2878 = vmatprep.subr.mxu0 0.0
    %2879 = vmatpush1.msra.mxu0 0.0
    %2880 = vmatprep.subr.mxu0 0.0
    %2881 = vmatpush1.msra.mxu0 0.0
    %2882 = vmatprep.subr.mxu0 0.0
    %2883 = vmatpush1.msra.mxu0 0.0
    %2884 = vmatprep.subr.mxu0 0.0
    %2885 = vmatpush1.msra.mxu0 0.0
    %2886 = vmatprep.subr.mxu0 0.0
    %2887 = vmatpush1.msra.mxu0 0.0
    %2888 = vmatprep.subr.mxu0 0.0
    %2889 = vmatpush1.msra.mxu0 0.0
    %2890 = vmatprep.subr.mxu0 0.0
    %2891 = vmatpush1.msra.mxu0 0.0
    %2892 = vmatprep.subr.mxu0 0.0
    %2893 = vmatpush1.msra.mxu0 0.0
    %2894 = vmatprep.subr.mxu0 0.0
    %2895 = vmatpush1.msra.mxu0 0.0
    %2896 = vmatprep.subr.mxu0 0.0
    %2897 = vmatpush1.msra.mxu0 0.0
    %2898 = vmatprep.subr.mxu0 0.0
    %2899 = vmatpush1.msra.mxu0 0.0
    %2900 = vmatprep.subr.mxu0 0.0
    %2901 = vmatpush1.msra.mxu0 0.0
    %2902 = vmatprep.subr.mxu0 0.0
    %2903 = vmatpush1.msra.mxu0 0.0
    %2904 = vmatprep.mubr.f32.mxu0 0.0
    %2905 = vmatmul.mubr.f32.gmra.mrb[0].mxu0 %v2761
    %v2906 = vpop.f32.mrb[0].mxu0
    %v2907 = vadd.f32 0.0, %v2906
    %v2908 = vpop.f32.mrb[0].mxu0
    %2909 = vdwg.mxu0
    %v2910 = vadd.f32 %v2839, %v2907
    %2911 = vmatprep.subr.mxu0 0.0
    %2912 = vmatpush1.msra.mxu0 %v166
    %2913 = vmatprep.subr.mxu0 0.0
    %2914 = vmatpush1.msra.mxu0 %v167
    %2915 = vmatprep.subr.mxu0 0.0
    %2916 = vmatpush1.msra.mxu0 %v168
    %2917 = vmatprep.subr.mxu0 0.0
    %2918 = vmatpush1.msra.mxu0 %v169
    %2919 = vmatprep.subr.mxu0 0.0
    %2920 = vmatpush1.msra.mxu0 %v170
    %2921 = vmatprep.subr.mxu0 0.0
    %2922 = vmatpush1.msra.mxu0 %v171
    %2923 = vmatprep.subr.mxu0 0.0
    %2924 = vmatpush1.msra.mxu0 %v172
    %2925 = vmatprep.subr.mxu0 0.0
    %2926 = vmatpush1.msra.mxu0 %v173
    %2927 = vmatprep.subr.mxu0 0.0
    %2928 = vmatpush1.msra.mxu0 %v174
    %2929 = vmatprep.subr.mxu0 0.0
    %2930 = vmatpush1.msra.mxu0 %v175
    %2931 = vmatprep.subr.mxu0 0.0
    %2932 = vmatpush1.msra.mxu0 %v176
    %2933 = vmatprep.subr.mxu0 0.0
    %2934 = vmatpush1.msra.mxu0 %v177
    %2935 = vmatprep.subr.mxu0 0.0
    %2936 = vmatpush1.msra.mxu0 %v178
    %2937 = vmatprep.subr.mxu0 0.0
    %2938 = vmatpush1.msra.mxu0 %v179
    %2939 = vmatprep.subr.mxu0 0.0
    %2940 = vmatpush1.msra.mxu0 %v180
    %2941 = vmatprep.subr.mxu0 0.0
    %2942 = vmatpush1.msra.mxu0 %v181
    %2943 = vmatprep.subr.mxu0 0.0
    %2944 = vmatpush1.msra.mxu0 0.0
    %2945 = vmatprep.subr.mxu0 0.0
    %2946 = vmatpush1.msra.mxu0 0.0
    %2947 = vmatprep.subr.mxu0 0.0
    %2948 = vmatpush1.msra.mxu0 0.0
    %2949 = vmatprep.subr.mxu0 0.0
    %2950 = vmatpush1.msra.mxu0 0.0
    %2951 = vmatprep.subr.mxu0 0.0
    %2952 = vmatpush1.msra.mxu0 0.0
    %2953 = vmatprep.subr.mxu0 0.0
    %2954 = vmatpush1.msra.mxu0 0.0
    %2955 = vmatprep.subr.mxu0 0.0
    %2956 = vmatpush1.msra.mxu0 0.0
    %2957 = vmatprep.subr.mxu0 0.0
    %2958 = vmatpush1.msra.mxu0 0.0
    %2959 = vmatprep.subr.mxu0 0.0
    %2960 = vmatpush1.msra.mxu0 0.0
    %2961 = vmatprep.subr.mxu0 0.0
    %2962 = vmatpush1.msra.mxu0 0.0
    %2963 = vmatprep.subr.mxu0 0.0
    %2964 = vmatpush1.msra.mxu0 0.0
    %2965 = vmatprep.subr.mxu0 0.0
    %2966 = vmatpush1.msra.mxu0 0.0
    %2967 = vmatprep.subr.mxu0 0.0
    %2968 = vmatpush1.msra.mxu0 0.0
    %2969 = vmatprep.subr.mxu0 0.0
    %2970 = vmatpush1.msra.mxu0 0.0
    %2971 = vmatprep.subr.mxu0 0.0
    %2972 = vmatpush1.msra.mxu0 0.0
    %2973 = vmatprep.subr.mxu0 0.0
    %2974 = vmatpush1.msra.mxu0 0.0
    %2975 = vmatprep.mubr.f32.mxu0 0.0
    %2976 = vmatmul.mubr.f32.gmra.mrb[0].mxu0 %v2910
    %v2977 = vpop.f32.mrb[0].mxu0
    %v2978 = vadd.f32 0.0, %v2977
    %v2979 = vpop.f32.mrb[0].mxu0
    %2980 = vdwg.mxu0
    %v2981 = vadd.f32 %v2838, %v2978
    %v2982 = vadd.f32 %v2981, %v2831
    %v2983 = vmul.f32 %v2982, 0.1
    %v2984 = vsub.f32 %v2759, %v2983
    %v2985 = vmul.f32 %v2910, 0.1
    %v2986 = vsub.f32 %v2761, %v2985
    %2987 = vmatprep.subr.mxu0 %v135
    %2988 = vmatpush1.msra.mxu0 %v134
    %2989 = vmatprep.subr.mxu0 %v137
    %2990 = vmatpush1.msra.mxu0 %v136
    %2991 = vmatprep.subr.mxu0 %v139
    %2992 = vmatpush1.msra.mxu0 %v138
    %2993 = vmatprep.subr.mxu0 %v141
    %2994 = vmatpush1.msra.mxu0 %v140
    %2995 = vmatprep.subr.mxu0 %v143
    %2996 = vmatpush1.msra.mxu0 %v142
    %2997 = vmatprep.subr.mxu0 %v145
    %2998 = vmatpush1.msra.mxu0 %v144
    %2999 = vmatprep.subr.mxu0 %v147
    %3000 = vmatpush1.msra.mxu0 %v146
    %3001 = vmatprep.subr.mxu0 %v149
    %3002 = vmatpush1.msra.mxu0 %v148
    %3003 = vmatprep.subr.mxu0 %v151
    %3004 = vmatpush1.msra.mxu0 %v150
    %3005 = vmatprep.subr.mxu0 %v153
    %3006 = vmatpush1.msra.mxu0 %v152
    %3007 = vmatprep.subr.mxu0 %v155
    %3008 = vmatpush1.msra.mxu0 %v154
    %3009 = vmatprep.subr.mxu0 %v157
    %3010 = vmatpush1.msra.mxu0 %v156
    %3011 = vmatprep.subr.mxu0 %v159
    %3012 = vmatpush1.msra.mxu0 %v158
    %3013 = vmatprep.subr.mxu0 %v161
    %3014 = vmatpush1.msra.mxu0 %v160
    %3015 = vmatprep.subr.mxu0 %v163
    %3016 = vmatpush1.msra.mxu0 %v162
    %3017 = vmatprep.subr.mxu0 %v165
    %3018 = vmatpush1.msra.mxu0 %v164
    %3019 = vmatprep.subr.mxu0 0.0
    %3020 = vmatpush1.msra.mxu0 0.0
    %3021 = vmatprep.subr.mxu0 0.0
    %3022 = vmatpush1.msra.mxu0 0.0
    %3023 = vmatprep.subr.mxu0 0.0
    %3024 = vmatpush1.msra.mxu0 0.0
    %3025 = vmatprep.subr.mxu0 0.0
    %3026 = vmatpush1.msra.mxu0 0.0
    %3027 = vmatprep.subr.mxu0 0.0
    %3028 = vmatpush1.msra.mxu0 0.0
    %3029 = vmatprep.subr.mxu0 0.0
    %3030 = vmatpush1.msra.mxu0 0.0
    %3031 = vmatprep.subr.mxu0 0.0
    %3032 = vmatpush1.msra.mxu0 0.0
    %3033 = vmatprep.subr.mxu0 0.0
    %3034 = vmatpush1.msra.mxu0 0.0
    %3035 = vmatprep.subr.mxu0 0.0
    %3036 = vmatpush1.msra.mxu0 0.0
    %3037 = vmatprep.subr.mxu0 0.0
    %3038 = vmatpush1.msra.mxu0 0.0
    %3039 = vmatprep.subr.mxu0 0.0
    %3040 = vmatpush1.msra.mxu0 0.0
    %3041 = vmatprep.subr.mxu0 0.0
    %3042 = vmatpush1.msra.mxu0 0.0
    %3043 = vmatprep.subr.mxu0 0.0
    %3044 = vmatpush1.msra.mxu0 0.0
    %3045 = vmatprep.subr.mxu0 0.0
    %3046 = vmatpush1.msra.mxu0 0.0
    %3047 = vmatprep.subr.mxu0 0.0
    %3048 = vmatpush1.msra.mxu0 0.0
    %3049 = vmatprep.subr.mxu0 0.0
    %3050 = vmatpush1.msra.mxu0 0.0
    %3051 = vmatprep.mubr.f32.mxu0 0.0
    %3052 = vmatmul.mubr.f32.gmra.mrb[0].mxu0 %v2984
    %v3053 = vpop.f32.mrb[0].mxu0
    %v3054 = vadd.f32 0.0, %v3053
    %v3055 = vpop.f32.mrb[0].mxu0
    %v3056 = vadd.f32 0.0, %v3055
    %3057 = vdwg.mxu0
    %v3058 = vadd.f32 %v3054, %v283
    %v3059 = vmul.f32 %v3058, 0.5
    %v3060 = vtanh.pop %v3059
    %v3061 = vmul.f32 %v3060, 0.5
    %v3062 = vadd.f32 %v3061, 0.5
    %v3063 = vsub.f32 %v2984, %v277
    %v3064 = vsub.f32 %v2986, %v3062
    %3065 = vmatprep.subr.mxu0 0.0
    %3066 = vmatpush1.msra.mxu0 %v182
    %3067 = vmatprep.subr.mxu0 0.0
    %3068 = vmatpush1.msra.mxu0 %v183
    %3069 = vmatprep.subr.mxu0 0.0
    %3070 = vmatpush1.msra.mxu0 %v184
    %3071 = vmatprep.subr.mxu0 0.0
    %3072 = vmatpush1.msra.mxu0 %v185
    %3073 = vmatprep.subr.mxu0 0.0
    %3074 = vmatpush1.msra.mxu0 %v186
    %3075 = vmatprep.subr.mxu0 0.0
    %3076 = vmatpush1.msra.mxu0 %v187
    %3077 = vmatprep.subr.mxu0 0.0
    %3078 = vmatpush1.msra.mxu0 %v188
    %3079 = vmatprep.subr.mxu0 0.0
    %3080 = vmatpush1.msra.mxu0 %v189
    %3081 = vmatprep.subr.mxu0 0.0
    %3082 = vmatpush1.msra.mxu0 %v190
    %3083 = vmatprep.subr.mxu0 0.0
    %3084 = vmatpush1.msra.mxu0 %v191
    %3085 = vmatprep.subr.mxu0 0.0
    %3086 = vmatpush1.msra.mxu0 %v192
    %3087 = vmatprep.subr.mxu0 0.0
    %3088 = vmatpush1.msra.mxu0 %v193
    %3089 = vmatprep.subr.mxu0 0.0
    %3090 = vmatpush1.msra.mxu0 %v194
    %3091 = vmatprep.subr.mxu0 0.0
    %3092 = vmatpush1.msra.mxu0 %v195
    %3093 = vmatprep.subr.mxu0 0.0
    %3094 = vmatpush1.msra.mxu0 %v196
    %3095 = vmatprep.subr.mxu0 0.0
    %3096 = vmatpush1.msra.mxu0 %v197
    %3097 = vmatprep.subr.mxu0 0.0
    %3098 = vmatpush1.msra.mxu0 0.0
    %3099 = vmatprep.subr.mxu0 0.0
    %3100 = vmatpush1.msra.mxu0 0.0
    %3101 = vmatprep.subr.mxu0 0.0
    %3102 = vmatpush1.msra.mxu0 0.0
    %3103 = vmatprep.subr.mxu0 0.0
    %3104 = vmatpush1.msra.mxu0 0.0
    %3105 = vmatprep.subr.mxu0 0.0
    %3106 = vmatpush1.msra.mxu0 0.0
    %3107 = vmatprep.subr.mxu0 0.0
    %3108 = vmatpush1.msra.mxu0 0.0
    %3109 = vmatprep.subr.mxu0 0.0
    %3110 = vmatpush1.msra.mxu0 0.0
    %3111 = vmatprep.subr.mxu0 0.0
    %3112 = vmatpush1.msra.mxu0 0.0
    %3113 = vmatprep.subr.mxu0 0.0
    %3114 = vmatpush1.msra.mxu0 0.0
    %3115 = vmatprep.subr.mxu0 0.0
    %3116 = vmatpush1.msra.mxu0 0.0
    %3117 = vmatprep.subr.mxu0 0.0
    %3118 = vmatpush1.msra.mxu0 0.0
    %3119 = vmatprep.subr.mxu0 0.0
    %3120 = vmatpush1.msra.mxu0 0.0
    %3121 = vmatprep.subr.mxu0 0.0
    %3122 = vmatpush1.msra.mxu0 0.0
    %3123 = vmatprep.subr.mxu0 0.0
    %3124 = vmatpush1.msra.mxu0 0.0
    %3125 = vmatprep.subr.mxu0 0.0
    %3126 = vmatpush1.msra.mxu0 0.0
    %3127 = vmatprep.subr.mxu0 0.0
    %3128 = vmatpush1.msra.mxu0 0.0
    %3129 = vmatprep.mubr.f32.mxu0 0.0
    %3130 = vmatmul.mubr.f32.gmra.mrb[0].mxu0 %v2986
    %v3131 = vpop.f32.mrb[0].mxu0
    %v3132 = vadd.f32 0.0, %v3131
    %v3133 = vpop.f32.mrb[0].mxu0
    %3134 = vdwg.mxu0
    %v3135 = vadd.f32 %v3064, %v3132
    %3136 = vmatprep.subr.mxu0 0.0
    %3137 = vmatpush1.msra.mxu0 %v166
    %3138 = vmatprep.subr.mxu0 0.0
    %3139 = vmatpush1.msra.mxu0 %v167
    %3140 = vmatprep.subr.mxu0 0.0
    %3141 = vmatpush1.msra.mxu0 %v168
    %3142 = vmatprep.subr.mxu0 0.0
    %3143 = vmatpush1.msra.mxu0 %v169
    %3144 = vmatprep.subr.mxu0 0.0
    %3145 = vmatpush1.msra.mxu0 %v170
    %3146 = vmatprep.subr.mxu0 0.0
    %3147 = vmatpush1.msra.mxu0 %v171
    %3148 = vmatprep.subr.mxu0 0.0
    %3149 = vmatpush1.msra.mxu0 %v172
    %3150 = vmatprep.subr.mxu0 0.0
    %3151 = vmatpush1.msra.mxu0 %v173
    %3152 = vmatprep.subr.mxu0 0.0
    %3153 = vmatpush1.msra.mxu0 %v174
    %3154 = vmatprep.subr.mxu0 0.0
    %3155 = vmatpush1.msra.mxu0 %v175
    %3156 = vmatprep.subr.mxu0 0.0
    %3157 = vmatpush1.msra.mxu0 %v176
    %3158 = vmatprep.subr.mxu0 0.0
    %3159 = vmatpush1.msra.mxu0 %v177
    %3160 = vmatprep.subr.mxu0 0.0
    %3161 = vmatpush1.msra.mxu0 %v178
    %3162 = vmatprep.subr.mxu0 0.0
    %3163 = vmatpush1.msra.mxu0 %v179
    %3164 = vmatprep.subr.mxu0 0.0
    %3165 = vmatpush1.msra.mxu0 %v180
    %3166 = vmatprep.subr.mxu0 0.0
    %3167 = vmatpush1.msra.mxu0 %v181
    %3168 = vmatprep.subr.mxu0 0.0
    %3169 = vmatpush1.msra.mxu0 0.0
    %3170 = vmatprep.subr.mxu0 0.0
    %3171 = vmatpush1.msra.mxu0 0.0
    %3172 = vmatprep.subr.mxu0 0.0
    %3173 = vmatpush1.msra.mxu0 0.0
    %3174 = vmatprep.subr.mxu0 0.0
    %3175 = vmatpush1.msra.mxu0 0.0
    %3176 = vmatprep.subr.mxu0 0.0
    %3177 = vmatpush1.msra.mxu0 0.0
    %3178 = vmatprep.subr.mxu0 0.0
    %3179 = vmatpush1.msra.mxu0 0.0
    %3180 = vmatprep.subr.mxu0 0.0
    %3181 = vmatpush1.msra.mxu0 0.0
    %3182 = vmatprep.subr.mxu0 0.0
    %3183 = vmatpush1.msra.mxu0 0.0
    %3184 = vmatprep.subr.mxu0 0.0
    %3185 = vmatpush1.msra.mxu0 0.0
    %3186 = vmatprep.subr.mxu0 0.0
    %3187 = vmatpush1.msra.mxu0 0.0
    %3188 = vmatprep.subr.mxu0 0.0
    %3189 = vmatpush1.msra.mxu0 0.0
    %3190 = vmatprep.subr.mxu0 0.0
    %3191 = vmatpush1.msra.mxu0 0.0
    %3192 = vmatprep.subr.mxu0 0.0
    %3193 = vmatpush1.msra.mxu0 0.0
    %3194 = vmatprep.subr.mxu0 0.0
    %3195 = vmatpush1.msra.mxu0 0.0
    %3196 = vmatprep.subr.mxu0 0.0
    %3197 = vmatpush1.msra.mxu0 0.0
    %3198 = vmatprep.subr.mxu0 0.0
    %3199 = vmatpush1.msra.mxu0 0.0
    %3200 = vmatprep.mubr.f32.mxu0 0.0
    %3201 = vmatmul.mubr.f32.gmra.mrb[0].mxu0 %v3135
    %v3202 = vpop.f32.mrb[0].mxu0
    %v3203 = vadd.f32 0.0, %v3202
    %v3204 = vpop.f32.mrb[0].mxu0
    %3205 = vdwg.mxu0
    %v3206 = vadd.f32 %v3063, %v3203
    %v3207 = vadd.f32 %v3206, %v3056
    %v3208 = vmul.f32 %v3207, 0.1
    %v3209 = vsub.f32 %v2984, %v3208
    %v3210 = vmul.f32 %v3135, 0.1
    %v3211 = vsub.f32 %v2986, %v3210
    %3212 = vmatprep.subr.mxu0 %v135
    %3213 = vmatpush1.msra.mxu0 %v134
    %3214 = vmatprep.subr.mxu0 %v137
    %3215 = vmatpush1.msra.mxu0 %v136
    %3216 = vmatprep.subr.mxu0 %v139
    %3217 = vmatpush1.msra.mxu0 %v138
    %3218 = vmatprep.subr.mxu0 %v141
    %3219 = vmatpush1.msra.mxu0 %v140
    %3220 = vmatprep.subr.mxu0 %v143
    %3221 = vmatpush1.msra.mxu0 %v142
    %3222 = vmatprep.subr.mxu0 %v145
    %3223 = vmatpush1.msra.mxu0 %v144
    %3224 = vmatprep.subr.mxu0 %v147
    %3225 = vmatpush1.msra.mxu0 %v146
    %3226 = vmatprep.subr.mxu0 %v149
    %3227 = vmatpush1.msra.mxu0 %v148
    %3228 = vmatprep.subr.mxu0 %v151
    %3229 = vmatpush1.msra.mxu0 %v150
    %3230 = vmatprep.subr.mxu0 %v153
    %3231 = vmatpush1.msra.mxu0 %v152
    %3232 = vmatprep.subr.mxu0 %v155
    %3233 = vmatpush1.msra.mxu0 %v154
    %3234 = vmatprep.subr.mxu0 %v157
    %3235 = vmatpush1.msra.mxu0 %v156
    %3236 = vmatprep.subr.mxu0 %v159
    %3237 = vmatpush1.msra.mxu0 %v158
    %3238 = vmatprep.subr.mxu0 %v161
    %3239 = vmatpush1.msra.mxu0 %v160
    %3240 = vmatprep.subr.mxu0 %v163
    %3241 = vmatpush1.msra.mxu0 %v162
    %3242 = vmatprep.subr.mxu0 %v165
    %3243 = vmatpush1.msra.mxu0 %v164
    %3244 = vmatprep.subr.mxu0 0.0
    %3245 = vmatpush1.msra.mxu0 0.0
    %3246 = vmatprep.subr.mxu0 0.0
    %3247 = vmatpush1.msra.mxu0 0.0
    %3248 = vmatprep.subr.mxu0 0.0
    %3249 = vmatpush1.msra.mxu0 0.0
    %3250 = vmatprep.subr.mxu0 0.0
    %3251 = vmatpush1.msra.mxu0 0.0
    %3252 = vmatprep.subr.mxu0 0.0
    %3253 = vmatpush1.msra.mxu0 0.0
    %3254 = vmatprep.subr.mxu0 0.0
    %3255 = vmatpush1.msra.mxu0 0.0
    %3256 = vmatprep.subr.mxu0 0.0
    %3257 = vmatpush1.msra.mxu0 0.0
    %3258 = vmatprep.subr.mxu0 0.0
    %3259 = vmatpush1.msra.mxu0 0.0
    %3260 = vmatprep.subr.mxu0 0.0
    %3261 = vmatpush1.msra.mxu0 0.0
    %3262 = vmatprep.subr.mxu0 0.0
    %3263 = vmatpush1.msra.mxu0 0.0
    %3264 = vmatprep.subr.mxu0 0.0
    %3265 = vmatpush1.msra.mxu0 0.0
    %3266 = vmatprep.subr.mxu0 0.0
    %3267 = vmatpush1.msra.mxu0 0.0
    %3268 = vmatprep.subr.mxu0 0.0
    %3269 = vmatpush1.msra.mxu0 0.0
    %3270 = vmatprep.subr.mxu0 0.0
    %3271 = vmatpush1.msra.mxu0 0.0
    %3272 = vmatprep.subr.mxu0 0.0
    %3273 = vmatpush1.msra.mxu0 0.0
    %3274 = vmatprep.subr.mxu0 0.0
    %3275 = vmatpush1.msra.mxu0 0.0
    %3276 = vmatprep.mubr.f32.mxu0 0.0
    %3277 = vmatmul.mubr.f32.gmra.mrb[0].mxu0 %v3209
    %v3278 = vpop.f32.mrb[0].mxu0
    %v3279 = vadd.f32 0.0, %v3278
    %v3280 = vpop.f32.mrb[0].mxu0
    %v3281 = vadd.f32 0.0, %v3280
    %3282 = vdwg.mxu0
    %v3283 = vadd.f32 %v3279, %v283
    %v3284 = vmul.f32 %v3283, 0.5
    %v3285 = vtanh.pop %v3284
    %v3286 = vmul.f32 %v3285, 0.5
    %v3287 = vadd.f32 %v3286, 0.5
    %v3288 = vsub.f32 %v3209, %v277
    %v3289 = vsub.f32 %v3211, %v3287
    %3290 = vmatprep.subr.mxu0 0.0
    %3291 = vmatpush1.msra.mxu0 %v182
    %3292 = vmatprep.subr.mxu0 0.0
    %3293 = vmatpush1.msra.mxu0 %v183
    %3294 = vmatprep.subr.mxu0 0.0
    %3295 = vmatpush1.msra.mxu0 %v184
    %3296 = vmatprep.subr.mxu0 0.0
    %3297 = vmatpush1.msra.mxu0 %v185
    %3298 = vmatprep.subr.mxu0 0.0
    %3299 = vmatpush1.msra.mxu0 %v186
    %3300 = vmatprep.subr.mxu0 0.0
    %3301 = vmatpush1.msra.mxu0 %v187
    %3302 = vmatprep.subr.mxu0 0.0
    %3303 = vmatpush1.msra.mxu0 %v188
    %3304 = vmatprep.subr.mxu0 0.0
    %3305 = vmatpush1.msra.mxu0 %v189
    %3306 = vmatprep.subr.mxu0 0.0
    %3307 = vmatpush1.msra.mxu0 %v190
    %3308 = vmatprep.subr.mxu0 0.0
    %3309 = vmatpush1.msra.mxu0 %v191
    %3310 = vmatprep.subr.mxu0 0.0
    %3311 = vmatpush1.msra.mxu0 %v192
    %3312 = vmatprep.subr.mxu0 0.0
    %3313 = vmatpush1.msra.mxu0 %v193
    %3314 = vmatprep.subr.mxu0 0.0
    %3315 = vmatpush1.msra.mxu0 %v194
    %3316 = vmatprep.subr.mxu0 0.0
    %3317 = vmatpush1.msra.mxu0 %v195
    %3318 = vmatprep.subr.mxu0 0.0
    %3319 = vmatpush1.msra.mxu0 %v196
    %3320 = vmatprep.subr.mxu0 0.0
    %3321 = vmatpush1.msra.mxu0 %v197
    %3322 = vmatprep.subr.mxu0 0.0
    %3323 = vmatpush1.msra.mxu0 0.0
    %3324 = vmatprep.subr.mxu0 0.0
    %3325 = vmatpush1.msra.mxu0 0.0
    %3326 = vmatprep.subr.mxu0 0.0
    %3327 = vmatpush1.msra.mxu0 0.0
    %3328 = vmatprep.subr.mxu0 0.0
    %3329 = vmatpush1.msra.mxu0 0.0
    %3330 = vmatprep.subr.mxu0 0.0
    %3331 = vmatpush1.msra.mxu0 0.0
    %3332 = vmatprep.subr.mxu0 0.0
    %3333 = vmatpush1.msra.mxu0 0.0
    %3334 = vmatprep.subr.mxu0 0.0
    %3335 = vmatpush1.msra.mxu0 0.0
    %3336 = vmatprep.subr.mxu0 0.0
    %3337 = vmatpush1.msra.mxu0 0.0
    %3338 = vmatprep.subr.mxu0 0.0
    %3339 = vmatpush1.msra.mxu0 0.0
    %3340 = vmatprep.subr.mxu0 0.0
    %3341 = vmatpush1.msra.mxu0 0.0
    %3342 = vmatprep.subr.mxu0 0.0
    %3343 = vmatpush1.msra.mxu0 0.0
    %3344 = vmatprep.subr.mxu0 0.0
    %3345 = vmatpush1.msra.mxu0 0.0
    %3346 = vmatprep.subr.mxu0 0.0
    %3347 = vmatpush1.msra.mxu0 0.0
    %3348 = vmatprep.subr.mxu0 0.0
    %3349 = vmatpush1.msra.mxu0 0.0
    %3350 = vmatprep.subr.mxu0 0.0
    %3351 = vmatpush1.msra.mxu0 0.0
    %3352 = vmatprep.subr.mxu0 0.0
    %3353 = vmatpush1.msra.mxu0 0.0
    %3354 = vmatprep.mubr.f32.mxu0 0.0
    %3355 = vmatmul.mubr.f32.gmra.mrb[0].mxu0 %v3211
    %v3356 = vpop.f32.mrb[0].mxu0
    %v3357 = vadd.f32 0.0, %v3356
    %v3358 = vpop.f32.mrb[0].mxu0
    %3359 = vdwg.mxu0
    %v3360 = vadd.f32 %v3289, %v3357
    %3361 = vmatprep.subr.mxu0 0.0
    %3362 = vmatpush1.msra.mxu0 %v166
    %3363 = vmatprep.subr.mxu0 0.0
    %3364 = vmatpush1.msra.mxu0 %v167
    %3365 = vmatprep.subr.mxu0 0.0
    %3366 = vmatpush1.msra.mxu0 %v168
    %3367 = vmatprep.subr.mxu0 0.0
    %3368 = vmatpush1.msra.mxu0 %v169
    %3369 = vmatprep.subr.mxu0 0.0
    %3370 = vmatpush1.msra.mxu0 %v170
    %3371 = vmatprep.subr.mxu0 0.0
    %3372 = vmatpush1.msra.mxu0 %v171
    %3373 = vmatprep.subr.mxu0 0.0
    %3374 = vmatpush1.msra.mxu0 %v172
    %3375 = vmatprep.subr.mxu0 0.0
    %3376 = vmatpush1.msra.mxu0 %v173
    %3377 = vmatprep.subr.mxu0 0.0
    %3378 = vmatpush1.msra.mxu0 %v174
    %3379 = vmatprep.subr.mxu0 0.0
    %3380 = vmatpush1.msra.mxu0 %v175
    %3381 = vmatprep.subr.mxu0 0.0
    %3382 = vmatpush1.msra.mxu0 %v176
    %3383 = vmatprep.subr.mxu0 0.0
    %3384 = vmatpush1.msra.mxu0 %v177
    %3385 = vmatprep.subr.mxu0 0.0
    %3386 = vmatpush1.msra.mxu0 %v178
    %3387 = vmatprep.subr.mxu0 0.0
    %3388 = vmatpush1.msra.mxu0 %v179
    %3389 = vmatprep.subr.mxu0 0.0
    %3390 = vmatpush1.msra.mxu0 %v180
    %3391 = vmatprep.subr.mxu0 0.0
    %3392 = vmatpush1.msra.mxu0 %v181
    %3393 = vmatprep.subr.mxu0 0.0
    %3394 = vmatpush1.msra.mxu0 0.0
    %3395 = vmatprep.subr.mxu0 0.0
    %3396 = vmatpush1.msra.mxu0 0.0
    %3397 = vmatprep.subr.mxu0 0.0
    %3398 = vmatpush1.msra.mxu0 0.0
    %3399 = vmatprep.subr.mxu0 0.0
    %3400 = vmatpush1.msra.mxu0 0.0
    %3401 = vmatprep.subr.mxu0 0.0
    %3402 = vmatpush1.msra.mxu0 0.0
    %3403 = vmatprep.subr.mxu0 0.0
    %3404 = vmatpush1.msra.mxu0 0.0
    %3405 = vmatprep.subr.mxu0 0.0
    %3406 = vmatpush1.msra.mxu0 0.0
    %3407 = vmatprep.subr.mxu0 0.0
    %3408 = vmatpush1.msra.mxu0 0.0
    %3409 = vmatprep.subr.mxu0 0.0
    %3410 = vmatpush1.msra.mxu0 0.0
    %3411 = vmatprep.subr.mxu0 0.0
    %3412 = vmatpush1.msra.mxu0 0.0
    %3413 = vmatprep.subr.mxu0 0.0
    %3414 = vmatpush1.msra.mxu0 0.0
    %3415 = vmatprep.subr.mxu0 0.0
    %3416 = vmatpush1.msra.mxu0 0.0
    %3417 = vmatprep.subr.mxu0 0.0
    %3418 = vmatpush1.msra.mxu0 0.0
    %3419 = vmatprep.subr.mxu0 0.0
    %3420 = vmatpush1.msra.mxu0 0.0
    %3421 = vmatprep.subr.mxu0 0.0
    %3422 = vmatpush1.msra.mxu0 0.0
    %3423 = vmatprep.subr.mxu0 0.0
    %3424 = vmatpush1.msra.mxu0 0.0
    %3425 = vmatprep.mubr.f32.mxu0 0.0
    %3426 = vmatmul.mubr.f32.gmra.mrb[0].mxu0 %v3360
    %v3427 = vpop.f32.mrb[0].mxu0
    %v3428 = vadd.f32 0.0, %v3427
    %v3429 = vpop.f32.mrb[0].mxu0
    %3430 = vdwg.mxu0
    %v3431 = vadd.f32 %v3288, %v3428
    %v3432 = vadd.f32 %v3431, %v3281
    %v3433 = vmul.f32 %v3432, 0.1
    %v3434 = vsub.f32 %v3209, %v3433
    %v3435 = vmul.f32 %v3360, 0.1
    %v3436 = vsub.f32 %v3211, %v3435
    %3437 = vmatprep.subr.mxu0 %v135
    %3438 = vmatpush1.msra.mxu0 %v134
    %3439 = vmatprep.subr.mxu0 %v137
    %3440 = vmatpush1.msra.mxu0 %v136
    %3441 = vmatprep.subr.mxu0 %v139
    %3442 = vmatpush1.msra.mxu0 %v138
    %3443 = vmatprep.subr.mxu0 %v141
    %3444 = vmatpush1.msra.mxu0 %v140
    %3445 = vmatprep.subr.mxu0 %v143
    %3446 = vmatpush1.msra.mxu0 %v142
    %3447 = vmatprep.subr.mxu0 %v145
    %3448 = vmatpush1.msra.mxu0 %v144
    %3449 = vmatprep.subr.mxu0 %v147
    %3450 = vmatpush1.msra.mxu0 %v146
    %3451 = vmatprep.subr.mxu0 %v149
    %3452 = vmatpush1.msra.mxu0 %v148
    %3453 = vmatprep.subr.mxu0 %v151
    %3454 = vmatpush1.msra.mxu0 %v150
    %3455 = vmatprep.subr.mxu0 %v153
    %3456 = vmatpush1.msra.mxu0 %v152
    %3457 = vmatprep.subr.mxu0 %v155
    %3458 = vmatpush1.msra.mxu0 %v154
    %3459 = vmatprep.subr.mxu0 %v157
    %3460 = vmatpush1.msra.mxu0 %v156
    %3461 = vmatprep.subr.mxu0 %v159
    %3462 = vmatpush1.msra.mxu0 %v158
    %3463 = vmatprep.subr.mxu0 %v161
    %3464 = vmatpush1.msra.mxu0 %v160
    %3465 = vmatprep.subr.mxu0 %v163
    %3466 = vmatpush1.msra.mxu0 %v162
    %3467 = vmatprep.subr.mxu0 %v165
    %3468 = vmatpush1.msra.mxu0 %v164
    %3469 = vmatprep.subr.mxu0 0.0
    %3470 = vmatpush1.msra.mxu0 0.0
    %3471 = vmatprep.subr.mxu0 0.0
    %3472 = vmatpush1.msra.mxu0 0.0
    %3473 = vmatprep.subr.mxu0 0.0
    %3474 = vmatpush1.msra.mxu0 0.0
    %3475 = vmatprep.subr.mxu0 0.0
    %3476 = vmatpush1.msra.mxu0 0.0
    %3477 = vmatprep.subr.mxu0 0.0
    %3478 = vmatpush1.msra.mxu0 0.0
    %3479 = vmatprep.subr.mxu0 0.0
    %3480 = vmatpush1.msra.mxu0 0.0
    %3481 = vmatprep.subr.mxu0 0.0
    %3482 = vmatpush1.msra.mxu0 0.0
    %3483 = vmatprep.subr.mxu0 0.0
    %3484 = vmatpush1.msra.mxu0 0.0
    %3485 = vmatprep.subr.mxu0 0.0
    %3486 = vmatpush1.msra.mxu0 0.0
    %3487 = vmatprep.subr.mxu0 0.0
    %3488 = vmatpush1.msra.mxu0 0.0
    %3489 = vmatprep.subr.mxu0 0.0
    %3490 = vmatpush1.msra.mxu0 0.0
    %3491 = vmatprep.subr.mxu0 0.0
    %3492 = vmatpush1.msra.mxu0 0.0
    %3493 = vmatprep.subr.mxu0 0.0
    %3494 = vmatpush1.msra.mxu0 0.0
    %3495 = vmatprep.subr.mxu0 0.0
    %3496 = vmatpush1.msra.mxu0 0.0
    %3497 = vmatprep.subr.mxu0 0.0
    %3498 = vmatpush1.msra.mxu0 0.0
    %3499 = vmatprep.subr.mxu0 0.0
    %3500 = vmatpush1.msra.mxu0 0.0
    %3501 = vmatprep.mubr.f32.mxu0 0.0
    %3502 = vmatmul.mubr.f32.gmra.mrb[0].mxu0 %v3434
    %v3503 = vpop.f32.mrb[0].mxu0
    %v3504 = vadd.f32 0.0, %v3503
    %v3505 = vpop.f32.mrb[0].mxu0
    %v3506 = vadd.f32 0.0, %v3505
    %3507 = vdwg.mxu0
    %v3508 = vadd.f32 %v3504, %v283
    %v3509 = vmul.f32 %v3508, 0.5
    %v3510 = vtanh.pop %v3509
    %v3511 = vmul.f32 %v3510, 0.5
    %v3512 = vadd.f32 %v3511, 0.5
    %v3513 = vsub.f32 %v3434, %v277
    %v3514 = vsub.f32 %v3436, %v3512
    %3515 = vmatprep.subr.mxu0 0.0
    %3516 = vmatpush1.msra.mxu0 %v182
    %3517 = vmatprep.subr.mxu0 0.0
    %3518 = vmatpush1.msra.mxu0 %v183
    %3519 = vmatprep.subr.mxu0 0.0
    %3520 = vmatpush1.msra.mxu0 %v184
    %3521 = vmatprep.subr.mxu0 0.0
    %3522 = vmatpush1.msra.mxu0 %v185
    %3523 = vmatprep.subr.mxu0 0.0
    %3524 = vmatpush1.msra.mxu0 %v186
    %3525 = vmatprep.subr.mxu0 0.0
    %3526 = vmatpush1.msra.mxu0 %v187
    %3527 = vmatprep.subr.mxu0 0.0
    %3528 = vmatpush1.msra.mxu0 %v188
    %3529 = vmatprep.subr.mxu0 0.0
    %3530 = vmatpush1.msra.mxu0 %v189
    %3531 = vmatprep.subr.mxu0 0.0
    %3532 = vmatpush1.msra.mxu0 %v190
    %3533 = vmatprep.subr.mxu0 0.0
    %3534 = vmatpush1.msra.mxu0 %v191
    %3535 = vmatprep.subr.mxu0 0.0
    %3536 = vmatpush1.msra.mxu0 %v192
    %3537 = vmatprep.subr.mxu0 0.0
    %3538 = vmatpush1.msra.mxu0 %v193
    %3539 = vmatprep.subr.mxu0 0.0
    %3540 = vmatpush1.msra.mxu0 %v194
    %3541 = vmatprep.subr.mxu0 0.0
    %3542 = vmatpush1.msra.mxu0 %v195
    %3543 = vmatprep.subr.mxu0 0.0
    %3544 = vmatpush1.msra.mxu0 %v196
    %3545 = vmatprep.subr.mxu0 0.0
    %3546 = vmatpush1.msra.mxu0 %v197
    %3547 = vmatprep.subr.mxu0 0.0
    %3548 = vmatpush1.msra.mxu0 0.0
    %3549 = vmatprep.subr.mxu0 0.0
    %3550 = vmatpush1.msra.mxu0 0.0
    %3551 = vmatprep.subr.mxu0 0.0
    %3552 = vmatpush1.msra.mxu0 0.0
    %3553 = vmatprep.subr.mxu0 0.0
    %3554 = vmatpush1.msra.mxu0 0.0
    %3555 = vmatprep.subr.mxu0 0.0
    %3556 = vmatpush1.msra.mxu0 0.0
    %3557 = vmatprep.subr.mxu0 0.0
    %3558 = vmatpush1.msra.mxu0 0.0
    %3559 = vmatprep.subr.mxu0 0.0
    %3560 = vmatpush1.msra.mxu0 0.0
    %3561 = vmatprep.subr.mxu0 0.0
    %3562 = vmatpush1.msra.mxu0 0.0
    %3563 = vmatprep.subr.mxu0 0.0
    %3564 = vmatpush1.msra.mxu0 0.0
    %3565 = vmatprep.subr.mxu0 0.0
    %3566 = vmatpush1.msra.mxu0 0.0
    %3567 = vmatprep.subr.mxu0 0.0
    %3568 = vmatpush1.msra.mxu0 0.0
    %3569 = vmatprep.subr.mxu0 0.0
    %3570 = vmatpush1.msra.mxu0 0.0
    %3571 = vmatprep.subr.mxu0 0.0
    %3572 = vmatpush1.msra.mxu0 0.0
    %3573 = vmatprep.subr.mxu0 0.0
    %3574 = vmatpush1.msra.mxu0 0.0
    %3575 = vmatprep.subr.mxu0 0.0
    %3576 = vmatpush1.msra.mxu0 0.0
    %3577 = vmatprep.subr.mxu0 0.0
    %3578 = vmatpush1.msra.mxu0 0.0
    %3579 = vmatprep.mubr.f32.mxu0 0.0
    %3580 = vmatmul.mubr.f32.gmra.mrb[0].mxu0 %v3436
    %v3581 = vpop.f32.mrb[0].mxu0
    %v3582 = vadd.f32 0.0, %v3581
    %v3583 = vpop.f32.mrb[0].mxu0
    %3584 = vdwg.mxu0
    %v3585 = vadd.f32 %v3514, %v3582
    %3586 = vmatprep.subr.mxu0 0.0
    %3587 = vmatpush1.msra.mxu0 %v166
    %3588 = vmatprep.subr.mxu0 0.0
    %3589 = vmatpush1.msra.mxu0 %v167
    %3590 = vmatprep.subr.mxu0 0.0
    %3591 = vmatpush1.msra.mxu0 %v168
    %3592 = vmatprep.subr.mxu0 0.0
    %3593 = vmatpush1.msra.mxu0 %v169
    %3594 = vmatprep.subr.mxu0 0.0
    %3595 = vmatpush1.msra.mxu0 %v170
    %3596 = vmatprep.subr.mxu0 0.0
    %3597 = vmatpush1.msra.mxu0 %v171
    %3598 = vmatprep.subr.mxu0 0.0
    %3599 = vmatpush1.msra.mxu0 %v172
    %3600 = vmatprep.subr.mxu0 0.0
    %3601 = vmatpush1.msra.mxu0 %v173
    %3602 = vmatprep.subr.mxu0 0.0
    %3603 = vmatpush1.msra.mxu0 %v174
    %3604 = vmatprep.subr.mxu0 0.0
    %3605 = vmatpush1.msra.mxu0 %v175
    %3606 = vmatprep.subr.mxu0 0.0
    %3607 = vmatpush1.msra.mxu0 %v176
    %3608 = vmatprep.subr.mxu0 0.0
    %3609 = vmatpush1.msra.mxu0 %v177
    %3610 = vmatprep.subr.mxu0 0.0
    %3611 = vmatpush1.msra.mxu0 %v178
    %3612 = vmatprep.subr.mxu0 0.0
    %3613 = vmatpush1.msra.mxu0 %v179
    %3614 = vmatprep.subr.mxu0 0.0
    %3615 = vmatpush1.msra.mxu0 %v180
    %3616 = vmatprep.subr.mxu0 0.0
    %3617 = vmatpush1.msra.mxu0 %v181
    %3618 = vmatprep.subr.mxu0 0.0
    %3619 = vmatpush1.msra.mxu0 0.0
    %3620 = vmatprep.subr.mxu0 0.0
    %3621 = vmatpush1.msra.mxu0 0.0
    %3622 = vmatprep.subr.mxu0 0.0
    %3623 = vmatpush1.msra.mxu0 0.0
    %3624 = vmatprep.subr.mxu0 0.0
    %3625 = vmatpush1.msra.mxu0 0.0
    %3626 = vmatprep.subr.mxu0 0.0
    %3627 = vmatpush1.msra.mxu0 0.0
    %3628 = vmatprep.subr.mxu0 0.0
    %3629 = vmatpush1.msra.mxu0 0.0
    %3630 = vmatprep.subr.mxu0 0.0
    %3631 = vmatpush1.msra.mxu0 0.0
    %3632 = vmatprep.subr.mxu0 0.0
    %3633 = vmatpush1.msra.mxu0 0.0
    %3634 = vmatprep.subr.mxu0 0.0
    %3635 = vmatpush1.msra.mxu0 0.0
    %3636 = vmatprep.subr.mxu0 0.0
    %3637 = vmatpush1.msra.mxu0 0.0
    %3638 = vmatprep.subr.mxu0 0.0
    %3639 = vmatpush1.msra.mxu0 0.0
    %3640 = vmatprep.subr.mxu0 0.0
    %3641 = vmatpush1.msra.mxu0 0.0
    %3642 = vmatprep.subr.mxu0 0.0
    %3643 = vmatpush1.msra.mxu0 0.0
    %3644 = vmatprep.subr.mxu0 0.0
    %3645 = vmatpush1.msra.mxu0 0.0
    %3646 = vmatprep.subr.mxu0 0.0
    %3647 = vmatpush1.msra.mxu0 0.0
    %3648 = vmatprep.subr.mxu0 0.0
    %3649 = vmatpush1.msra.mxu0 0.0
    %3650 = vmatprep.mubr.f32.mxu0 0.0
    %3651 = vmatmul.mubr.f32.gmra.mrb[0].mxu0 %v3585
    %v3652 = vpop.f32.mrb[0].mxu0
    %v3653 = vadd.f32 0.0, %v3652
    %v3654 = vpop.f32.mrb[0].mxu0
    %3655 = vdwg.mxu0
    %v3656 = vadd.f32 %v3513, %v3653
    %v3657 = vadd.f32 %v3656, %v3506
    %v3658 = vmul.f32 %v3657, 0.1
    %v3659 = vsub.f32 %v3434, %v3658
    %v3660 = vmul.f32 %v3585, 0.1
    %v3661 = vsub.f32 %v3436, %v3660
    %3662 = vmatprep.subr.mxu0 %v135
    %3663 = vmatpush1.msra.mxu0 %v134
    %3664 = vmatprep.subr.mxu0 %v137
    %3665 = vmatpush1.msra.mxu0 %v136
    %3666 = vmatprep.subr.mxu0 %v139
    %3667 = vmatpush1.msra.mxu0 %v138
    %3668 = vmatprep.subr.mxu0 %v141
    %3669 = vmatpush1.msra.mxu0 %v140
    %3670 = vmatprep.subr.mxu0 %v143
    %3671 = vmatpush1.msra.mxu0 %v142
    %3672 = vmatprep.subr.mxu0 %v145
    %3673 = vmatpush1.msra.mxu0 %v144
    %3674 = vmatprep.subr.mxu0 %v147
    %3675 = vmatpush1.msra.mxu0 %v146
    %3676 = vmatprep.subr.mxu0 %v149
    %3677 = vmatpush1.msra.mxu0 %v148
    %3678 = vmatprep.subr.mxu0 %v151
    %3679 = vmatpush1.msra.mxu0 %v150
    %3680 = vmatprep.subr.mxu0 %v153
    %3681 = vmatpush1.msra.mxu0 %v152
    %3682 = vmatprep.subr.mxu0 %v155
    %3683 = vmatpush1.msra.mxu0 %v154
    %3684 = vmatprep.subr.mxu0 %v157
    %3685 = vmatpush1.msra.mxu0 %v156
    %3686 = vmatprep.subr.mxu0 %v159
    %3687 = vmatpush1.msra.mxu0 %v158
    %3688 = vmatprep.subr.mxu0 %v161
    %3689 = vmatpush1.msra.mxu0 %v160
    %3690 = vmatprep.subr.mxu0 %v163
    %3691 = vmatpush1.msra.mxu0 %v162
    %3692 = vmatprep.subr.mxu0 %v165
    %3693 = vmatpush1.msra.mxu0 %v164
    %3694 = vmatprep.subr.mxu0 0.0
    %3695 = vmatpush1.msra.mxu0 0.0
    %3696 = vmatprep.subr.mxu0 0.0
    %3697 = vmatpush1.msra.mxu0 0.0
    %3698 = vmatprep.subr.mxu0 0.0
    %3699 = vmatpush1.msra.mxu0 0.0
    %3700 = vmatprep.subr.mxu0 0.0
    %3701 = vmatpush1.msra.mxu0 0.0
    %3702 = vmatprep.subr.mxu0 0.0
    %3703 = vmatpush1.msra.mxu0 0.0
    %3704 = vmatprep.subr.mxu0 0.0
    %3705 = vmatpush1.msra.mxu0 0.0
    %3706 = vmatprep.subr.mxu0 0.0
    %3707 = vmatpush1.msra.mxu0 0.0
    %3708 = vmatprep.subr.mxu0 0.0
    %3709 = vmatpush1.msra.mxu0 0.0
    %3710 = vmatprep.subr.mxu0 0.0
    %3711 = vmatpush1.msra.mxu0 0.0
    %3712 = vmatprep.subr.mxu0 0.0
    %3713 = vmatpush1.msra.mxu0 0.0
    %3714 = vmatprep.subr.mxu0 0.0
    %3715 = vmatpush1.msra.mxu0 0.0
    %3716 = vmatprep.subr.mxu0 0.0
    %3717 = vmatpush1.msra.mxu0 0.0
    %3718 = vmatprep.subr.mxu0 0.0
    %3719 = vmatpush1.msra.mxu0 0.0
    %3720 = vmatprep.subr.mxu0 0.0
    %3721 = vmatpush1.msra.mxu0 0.0
    %3722 = vmatprep.subr.mxu0 0.0
    %3723 = vmatpush1.msra.mxu0 0.0
    %3724 = vmatprep.subr.mxu0 0.0
    %3725 = vmatpush1.msra.mxu0 0.0
    %3726 = vmatprep.mubr.f32.mxu0 0.0
    %3727 = vmatmul.mubr.f32.gmra.mrb[0].mxu0 %v3659
    %v3728 = vpop.f32.mrb[0].mxu0
    %v3729 = vadd.f32 0.0, %v3728
    %v3730 = vpop.f32.mrb[0].mxu0
    %v3731 = vadd.f32 0.0, %v3730
    %3732 = vdwg.mxu0
    %v3733 = vadd.f32 %v3729, %v283
    %v3734 = vmul.f32 %v3733, 0.5
    %v3735 = vtanh.pop %v3734
    %v3736 = vmul.f32 %v3735, 0.5
    %v3737 = vadd.f32 %v3736, 0.5
    %v3738 = vsub.f32 %v3659, %v277
    %v3739 = vsub.f32 %v3661, %v3737
    %3740 = vmatprep.subr.mxu0 0.0
    %3741 = vmatpush1.msra.mxu0 %v182
    %3742 = vmatprep.subr.mxu0 0.0
    %3743 = vmatpush1.msra.mxu0 %v183
    %3744 = vmatprep.subr.mxu0 0.0
    %3745 = vmatpush1.msra.mxu0 %v184
    %3746 = vmatprep.subr.mxu0 0.0
    %3747 = vmatpush1.msra.mxu0 %v185
    %3748 = vmatprep.subr.mxu0 0.0
    %3749 = vmatpush1.msra.mxu0 %v186
    %3750 = vmatprep.subr.mxu0 0.0
    %3751 = vmatpush1.msra.mxu0 %v187
    %3752 = vmatprep.subr.mxu0 0.0
    %3753 = vmatpush1.msra.mxu0 %v188
    %3754 = vmatprep.subr.mxu0 0.0
    %3755 = vmatpush1.msra.mxu0 %v189
    %3756 = vmatprep.subr.mxu0 0.0
    %3757 = vmatpush1.msra.mxu0 %v190
    %3758 = vmatprep.subr.mxu0 0.0
    %3759 = vmatpush1.msra.mxu0 %v191
    %3760 = vmatprep.subr.mxu0 0.0
    %3761 = vmatpush1.msra.mxu0 %v192
    %3762 = vmatprep.subr.mxu0 0.0
    %3763 = vmatpush1.msra.mxu0 %v193
    %3764 = vmatprep.subr.mxu0 0.0
    %3765 = vmatpush1.msra.mxu0 %v194
    %3766 = vmatprep.subr.mxu0 0.0
    %3767 = vmatpush1.msra.mxu0 %v195
    %3768 = vmatprep.subr.mxu0 0.0
    %3769 = vmatpush1.msra.mxu0 %v196
    %3770 = vmatprep.subr.mxu0 0.0
    %3771 = vmatpush1.msra.mxu0 %v197
    %3772 = vmatprep.subr.mxu0 0.0
    %3773 = vmatpush1.msra.mxu0 0.0
    %3774 = vmatprep.subr.mxu0 0.0
    %3775 = vmatpush1.msra.mxu0 0.0
    %3776 = vmatprep.subr.mxu0 0.0
    %3777 = vmatpush1.msra.mxu0 0.0
    %3778 = vmatprep.subr.mxu0 0.0
    %3779 = vmatpush1.msra.mxu0 0.0
    %3780 = vmatprep.subr.mxu0 0.0
    %3781 = vmatpush1.msra.mxu0 0.0
    %3782 = vmatprep.subr.mxu0 0.0
    %3783 = vmatpush1.msra.mxu0 0.0
    %3784 = vmatprep.subr.mxu0 0.0
    %3785 = vmatpush1.msra.mxu0 0.0
    %3786 = vmatprep.subr.mxu0 0.0
    %3787 = vmatpush1.msra.mxu0 0.0
    %3788 = vmatprep.subr.mxu0 0.0
    %3789 = vmatpush1.msra.mxu0 0.0
    %3790 = vmatprep.subr.mxu0 0.0
    %3791 = vmatpush1.msra.mxu0 0.0
    %3792 = vmatprep.subr.mxu0 0.0
    %3793 = vmatpush1.msra.mxu0 0.0
    %3794 = vmatprep.subr.mxu0 0.0
    %3795 = vmatpush1.msra.mxu0 0.0
    %3796 = vmatprep.subr.mxu0 0.0
    %3797 = vmatpush1.msra.mxu0 0.0
    %3798 = vmatprep.subr.mxu0 0.0
    %3799 = vmatpush1.msra.mxu0 0.0
    %3800 = vmatprep.subr.mxu0 0.0
    %3801 = vmatpush1.msra.mxu0 0.0
    %3802 = vmatprep.subr.mxu0 0.0
    %3803 = vmatpush1.msra.mxu0 0.0
    %3804 = vmatprep.mubr.f32.mxu0 0.0
    %3805 = vmatmul.mubr.f32.gmra.mrb[0].mxu0 %v3661
    %v3806 = vpop.f32.mrb[0].mxu0
    %v3807 = vadd.f32 0.0, %v3806
    %v3808 = vpop.f32.mrb[0].mxu0
    %3809 = vdwg.mxu0
    %v3810 = vadd.f32 %v3739, %v3807
    %3811 = vmatprep.subr.mxu0 0.0
    %3812 = vmatpush1.msra.mxu0 %v166
    %3813 = vmatprep.subr.mxu0 0.0
    %3814 = vmatpush1.msra.mxu0 %v167
    %3815 = vmatprep.subr.mxu0 0.0
    %3816 = vmatpush1.msra.mxu0 %v168
    %3817 = vmatprep.subr.mxu0 0.0
    %3818 = vmatpush1.msra.mxu0 %v169
    %3819 = vmatprep.subr.mxu0 0.0
    %3820 = vmatpush1.msra.mxu0 %v170
    %3821 = vmatprep.subr.mxu0 0.0
    %3822 = vmatpush1.msra.mxu0 %v171
    %3823 = vmatprep.subr.mxu0 0.0
    %3824 = vmatpush1.msra.mxu0 %v172
    %3825 = vmatprep.subr.mxu0 0.0
    %3826 = vmatpush1.msra.mxu0 %v173
    %3827 = vmatprep.subr.mxu0 0.0
    %3828 = vmatpush1.msra.mxu0 %v174
    %3829 = vmatprep.subr.mxu0 0.0
    %3830 = vmatpush1.msra.mxu0 %v175
    %3831 = vmatprep.subr.mxu0 0.0
    %3832 = vmatpush1.msra.mxu0 %v176
    %3833 = vmatprep.subr.mxu0 0.0
    %3834 = vmatpush1.msra.mxu0 %v177
    %3835 = vmatprep.subr.mxu0 0.0
    %3836 = vmatpush1.msra.mxu0 %v178
    %3837 = vmatprep.subr.mxu0 0.0
    %3838 = vmatpush1.msra.mxu0 %v179
    %3839 = vmatprep.subr.mxu0 0.0
    %3840 = vmatpush1.msra.mxu0 %v180
    %3841 = vmatprep.subr.mxu0 0.0
    %3842 = vmatpush1.msra.mxu0 %v181
    %3843 = vmatprep.subr.mxu0 0.0
    %3844 = vmatpush1.msra.mxu0 0.0
    %3845 = vmatprep.subr.mxu0 0.0
    %3846 = vmatpush1.msra.mxu0 0.0
    %3847 = vmatprep.subr.mxu0 0.0
    %3848 = vmatpush1.msra.mxu0 0.0
    %3849 = vmatprep.subr.mxu0 0.0
    %3850 = vmatpush1.msra.mxu0 0.0
    %3851 = vmatprep.subr.mxu0 0.0
    %3852 = vmatpush1.msra.mxu0 0.0
    %3853 = vmatprep.subr.mxu0 0.0
    %3854 = vmatpush1.msra.mxu0 0.0
    %3855 = vmatprep.subr.mxu0 0.0
    %3856 = vmatpush1.msra.mxu0 0.0
    %3857 = vmatprep.subr.mxu0 0.0
    %3858 = vmatpush1.msra.mxu0 0.0
    %3859 = vmatprep.subr.mxu0 0.0
    %3860 = vmatpush1.msra.mxu0 0.0
    %3861 = vmatprep.subr.mxu0 0.0
    %3862 = vmatpush1.msra.mxu0 0.0
    %3863 = vmatprep.subr.mxu0 0.0
    %3864 = vmatpush1.msra.mxu0 0.0
    %3865 = vmatprep.subr.mxu0 0.0
    %3866 = vmatpush1.msra.mxu0 0.0
    %3867 = vmatprep.subr.mxu0 0.0
    %3868 = vmatpush1.msra.mxu0 0.0
    %3869 = vmatprep.subr.mxu0 0.0
    %3870 = vmatpush1.msra.mxu0 0.0
    %3871 = vmatprep.subr.mxu0 0.0
    %3872 = vmatpush1.msra.mxu0 0.0
    %3873 = vmatprep.subr.mxu0 0.0
    %3874 = vmatpush1.msra.mxu0 0.0
    %3875 = vmatprep.mubr.f32.mxu0 0.0
    %3876 = vmatmul.mubr.f32.gmra.mrb[0].mxu0 %v3810
    %v3877 = vpop.f32.mrb[0].mxu0
    %v3878 = vadd.f32 0.0, %v3877
    %v3879 = vpop.f32.mrb[0].mxu0
    %3880 = vdwg.mxu0
    %v3881 = vadd.f32 %v3738, %v3878
    %v3882 = vadd.f32 %v3881, %v3731
    %v3883 = vmul.f32 %v3882, 0.1
    %v3884 = vsub.f32 %v3659, %v3883
    %v3885 = vmul.f32 %v3810, 0.1
    %v3886 = vsub.f32 %v3661, %v3885
    %3887 = vmatprep.subr.mxu0 %v135
    %3888 = vmatpush1.msra.mxu0 %v134
    %3889 = vmatprep.subr.mxu0 %v137
    %3890 = vmatpush1.msra.mxu0 %v136
    %3891 = vmatprep.subr.mxu0 %v139
    %3892 = vmatpush1.msra.mxu0 %v138
    %3893 = vmatprep.subr.mxu0 %v141
    %3894 = vmatpush1.msra.mxu0 %v140
    %3895 = vmatprep.subr.mxu0 %v143
    %3896 = vmatpush1.msra.mxu0 %v142
    %3897 = vmatprep.subr.mxu0 %v145
    %3898 = vmatpush1.msra.mxu0 %v144
    %3899 = vmatprep.subr.mxu0 %v147
    %3900 = vmatpush1.msra.mxu0 %v146
    %3901 = vmatprep.subr.mxu0 %v149
    %3902 = vmatpush1.msra.mxu0 %v148
    %3903 = vmatprep.subr.mxu0 %v151
    %3904 = vmatpush1.msra.mxu0 %v150
    %3905 = vmatprep.subr.mxu0 %v153
    %3906 = vmatpush1.msra.mxu0 %v152
    %3907 = vmatprep.subr.mxu0 %v155
    %3908 = vmatpush1.msra.mxu0 %v154
    %3909 = vmatprep.subr.mxu0 %v157
    %3910 = vmatpush1.msra.mxu0 %v156
    %3911 = vmatprep.subr.mxu0 %v159
    %3912 = vmatpush1.msra.mxu0 %v158
    %3913 = vmatprep.subr.mxu0 %v161
    %3914 = vmatpush1.msra.mxu0 %v160
    %3915 = vmatprep.subr.mxu0 %v163
    %3916 = vmatpush1.msra.mxu0 %v162
    %3917 = vmatprep.subr.mxu0 %v165
    %3918 = vmatpush1.msra.mxu0 %v164
    %3919 = vmatprep.subr.mxu0 0.0
    %3920 = vmatpush1.msra.mxu0 0.0
    %3921 = vmatprep.subr.mxu0 0.0
    %3922 = vmatpush1.msra.mxu0 0.0
    %3923 = vmatprep.subr.mxu0 0.0
    %3924 = vmatpush1.msra.mxu0 0.0
    %3925 = vmatprep.subr.mxu0 0.0
    %3926 = vmatpush1.msra.mxu0 0.0
    %3927 = vmatprep.subr.mxu0 0.0
    %3928 = vmatpush1.msra.mxu0 0.0
    %3929 = vmatprep.subr.mxu0 0.0
    %3930 = vmatpush1.msra.mxu0 0.0
    %3931 = vmatprep.subr.mxu0 0.0
    %3932 = vmatpush1.msra.mxu0 0.0
    %3933 = vmatprep.subr.mxu0 0.0
    %3934 = vmatpush1.msra.mxu0 0.0
    %3935 = vmatprep.subr.mxu0 0.0
    %3936 = vmatpush1.msra.mxu0 0.0
    %3937 = vmatprep.subr.mxu0 0.0
    %3938 = vmatpush1.msra.mxu0 0.0
    %3939 = vmatprep.subr.mxu0 0.0
    %3940 = vmatpush1.msra.mxu0 0.0
    %3941 = vmatprep.subr.mxu0 0.0
    %3942 = vmatpush1.msra.mxu0 0.0
    %3943 = vmatprep.subr.mxu0 0.0
    %3944 = vmatpush1.msra.mxu0 0.0
    %3945 = vmatprep.subr.mxu0 0.0
    %3946 = vmatpush1.msra.mxu0 0.0
    %3947 = vmatprep.subr.mxu0 0.0
    %3948 = vmatpush1.msra.mxu0 0.0
    %3949 = vmatprep.subr.mxu0 0.0
    %3950 = vmatpush1.msra.mxu0 0.0
    %3951 = vmatprep.mubr.f32.mxu0 0.0
    %3952 = vmatmul.mubr.f32.gmra.mrb[0].mxu0 %v3884
    %v3953 = vpop.f32.mrb[0].mxu0
    %v3954 = vadd.f32 0.0, %v3953
    %v3955 = vpop.f32.mrb[0].mxu0
    %v3956 = vadd.f32 0.0, %v3955
    %3957 = vdwg.mxu0
    %v3958 = vadd.f32 %v3954, %v283
    %v3959 = vmul.f32 %v3958, 0.5
    %v3960 = vtanh.pop %v3959
    %v3961 = vmul.f32 %v3960, 0.5
    %v3962 = vadd.f32 %v3961, 0.5
    %v3963 = vsub.f32 %v3884, %v277
    %v3964 = vsub.f32 %v3886, %v3962
    %3965 = vmatprep.subr.mxu0 0.0
    %3966 = vmatpush1.msra.mxu0 %v182
    %3967 = vmatprep.subr.mxu0 0.0
    %3968 = vmatpush1.msra.mxu0 %v183
    %3969 = vmatprep.subr.mxu0 0.0
    %3970 = vmatpush1.msra.mxu0 %v184
    %3971 = vmatprep.subr.mxu0 0.0
    %3972 = vmatpush1.msra.mxu0 %v185
    %3973 = vmatprep.subr.mxu0 0.0
    %3974 = vmatpush1.msra.mxu0 %v186
    %3975 = vmatprep.subr.mxu0 0.0
    %3976 = vmatpush1.msra.mxu0 %v187
    %3977 = vmatprep.subr.mxu0 0.0
    %3978 = vmatpush1.msra.mxu0 %v188
    %3979 = vmatprep.subr.mxu0 0.0
    %3980 = vmatpush1.msra.mxu0 %v189
    %3981 = vmatprep.subr.mxu0 0.0
    %3982 = vmatpush1.msra.mxu0 %v190
    %3983 = vmatprep.subr.mxu0 0.0
    %3984 = vmatpush1.msra.mxu0 %v191
    %3985 = vmatprep.subr.mxu0 0.0
    %3986 = vmatpush1.msra.mxu0 %v192
    %3987 = vmatprep.subr.mxu0 0.0
    %3988 = vmatpush1.msra.mxu0 %v193
    %3989 = vmatprep.subr.mxu0 0.0
    %3990 = vmatpush1.msra.mxu0 %v194
    %3991 = vmatprep.subr.mxu0 0.0
    %3992 = vmatpush1.msra.mxu0 %v195
    %3993 = vmatprep.subr.mxu0 0.0
    %3994 = vmatpush1.msra.mxu0 %v196
    %3995 = vmatprep.subr.mxu0 0.0
    %3996 = vmatpush1.msra.mxu0 %v197
    %3997 = vmatprep.subr.mxu0 0.0
    %3998 = vmatpush1.msra.mxu0 0.0
    %3999 = vmatprep.subr.mxu0 0.0
    %4000 = vmatpush1.msra.mxu0 0.0
    %4001 = vmatprep.subr.mxu0 0.0
    %4002 = vmatpush1.msra.mxu0 0.0
    %4003 = vmatprep.subr.mxu0 0.0
    %4004 = vmatpush1.msra.mxu0 0.0
    %4005 = vmatprep.subr.mxu0 0.0
    %4006 = vmatpush1.msra.mxu0 0.0
    %4007 = vmatprep.subr.mxu0 0.0
    %4008 = vmatpush1.msra.mxu0 0.0
    %4009 = vmatprep.subr.mxu0 0.0
    %4010 = vmatpush1.msra.mxu0 0.0
    %4011 = vmatprep.subr.mxu0 0.0
    %4012 = vmatpush1.msra.mxu0 0.0
    %4013 = vmatprep.subr.mxu0 0.0
    %4014 = vmatpush1.msra.mxu0 0.0
    %4015 = vmatprep.subr.mxu0 0.0
    %4016 = vmatpush1.msra.mxu0 0.0
    %4017 = vmatprep.subr.mxu0 0.0
    %4018 = vmatpush1.msra.mxu0 0.0
    %4019 = vmatprep.subr.mxu0 0.0
    %4020 = vmatpush1.msra.mxu0 0.0
    %4021 = vmatprep.subr.mxu0 0.0
    %4022 = vmatpush1.msra.mxu0 0.0
    %4023 = vmatprep.subr.mxu0 0.0
    %4024 = vmatpush1.msra.mxu0 0.0
    %4025 = vmatprep.subr.mxu0 0.0
    %4026 = vmatpush1.msra.mxu0 0.0
    %4027 = vmatprep.subr.mxu0 0.0
    %4028 = vmatpush1.msra.mxu0 0.0
    %4029 = vmatprep.mubr.f32.mxu0 0.0
    %4030 = vmatmul.mubr.f32.gmra.mrb[0].mxu0 %v3886
    %v4031 = vpop.f32.mrb[0].mxu0
    %v4032 = vadd.f32 0.0, %v4031
    %v4033 = vpop.f32.mrb[0].mxu0
    %4034 = vdwg.mxu0
    %v4035 = vadd.f32 %v3964, %v4032
    %4036 = vmatprep.subr.mxu0 0.0
    %4037 = vmatpush1.msra.mxu0 %v166
    %4038 = vmatprep.subr.mxu0 0.0
    %4039 = vmatpush1.msra.mxu0 %v167
    %4040 = vmatprep.subr.mxu0 0.0
    %4041 = vmatpush1.msra.mxu0 %v168
    %4042 = vmatprep.subr.mxu0 0.0
    %4043 = vmatpush1.msra.mxu0 %v169
    %4044 = vmatprep.subr.mxu0 0.0
    %4045 = vmatpush1.msra.mxu0 %v170
    %4046 = vmatprep.subr.mxu0 0.0
    %4047 = vmatpush1.msra.mxu0 %v171
    %4048 = vmatprep.subr.mxu0 0.0
    %4049 = vmatpush1.msra.mxu0 %v172
    %4050 = vmatprep.subr.mxu0 0.0
    %4051 = vmatpush1.msra.mxu0 %v173
    %4052 = vmatprep.subr.mxu0 0.0
    %4053 = vmatpush1.msra.mxu0 %v174
    %4054 = vmatprep.subr.mxu0 0.0
    %4055 = vmatpush1.msra.mxu0 %v175
    %4056 = vmatprep.subr.mxu0 0.0
    %4057 = vmatpush1.msra.mxu0 %v176
    %4058 = vmatprep.subr.mxu0 0.0
    %4059 = vmatpush1.msra.mxu0 %v177
    %4060 = vmatprep.subr.mxu0 0.0
    %4061 = vmatpush1.msra.mxu0 %v178
    %4062 = vmatprep.subr.mxu0 0.0
    %4063 = vmatpush1.msra.mxu0 %v179
    %4064 = vmatprep.subr.mxu0 0.0
    %4065 = vmatpush1.msra.mxu0 %v180
    %4066 = vmatprep.subr.mxu0 0.0
    %4067 = vmatpush1.msra.mxu0 %v181
    %4068 = vmatprep.subr.mxu0 0.0
    %4069 = vmatpush1.msra.mxu0 0.0
    %4070 = vmatprep.subr.mxu0 0.0
    %4071 = vmatpush1.msra.mxu0 0.0
    %4072 = vmatprep.subr.mxu0 0.0
    %4073 = vmatpush1.msra.mxu0 0.0
    %4074 = vmatprep.subr.mxu0 0.0
    %4075 = vmatpush1.msra.mxu0 0.0
    %4076 = vmatprep.subr.mxu0 0.0
    %4077 = vmatpush1.msra.mxu0 0.0
    %4078 = vmatprep.subr.mxu0 0.0
    %4079 = vmatpush1.msra.mxu0 0.0
    %4080 = vmatprep.subr.mxu0 0.0
    %4081 = vmatpush1.msra.mxu0 0.0
    %4082 = vmatprep.subr.mxu0 0.0
    %4083 = vmatpush1.msra.mxu0 0.0
    %4084 = vmatprep.subr.mxu0 0.0
    %4085 = vmatpush1.msra.mxu0 0.0
    %4086 = vmatprep.subr.mxu0 0.0
    %4087 = vmatpush1.msra.mxu0 0.0
    %4088 = vmatprep.subr.mxu0 0.0
    %4089 = vmatpush1.msra.mxu0 0.0
    %4090 = vmatprep.subr.mxu0 0.0
    %4091 = vmatpush1.msra.mxu0 0.0
    %4092 = vmatprep.subr.mxu0 0.0
    %4093 = vmatpush1.msra.mxu0 0.0
    %4094 = vmatprep.subr.mxu0 0.0
    %4095 = vmatpush1.msra.mxu0 0.0
    %4096 = vmatprep.subr.mxu0 0.0
    %4097 = vmatpush1.msra.mxu0 0.0
    %4098 = vmatprep.subr.mxu0 0.0
    %4099 = vmatpush1.msra.mxu0 0.0
    %4100 = vmatprep.mubr.f32.mxu0 0.0
    %4101 = vmatmul.mubr.f32.gmra.mrb[0].mxu0 %v4035
    %v4102 = vpop.f32.mrb[0].mxu0
    %v4103 = vadd.f32 0.0, %v4102
    %v4104 = vpop.f32.mrb[0].mxu0
    %4105 = vdwg.mxu0
    %v4106 = vadd.f32 %v3963, %v4103
    %v4107 = vadd.f32 %v4106, %v3956
    %v4108 = vmul.f32 %v4107, 0.1
    %v4109 = vsub.f32 %v3884, %v4108
    %v4110 = vmul.f32 %v4035, 0.1
    %v4111 = vsub.f32 %v3886, %v4110
    %4112 = vmatprep.subr.mxu0 %v135
    %4113 = vmatpush1.msra.mxu0 %v134
    %4114 = vmatprep.subr.mxu0 %v137
    %4115 = vmatpush1.msra.mxu0 %v136
    %4116 = vmatprep.subr.mxu0 %v139
    %4117 = vmatpush1.msra.mxu0 %v138
    %4118 = vmatprep.subr.mxu0 %v141
    %4119 = vmatpush1.msra.mxu0 %v140
    %4120 = vmatprep.subr.mxu0 %v143
    %4121 = vmatpush1.msra.mxu0 %v142
    %4122 = vmatprep.subr.mxu0 %v145
    %4123 = vmatpush1.msra.mxu0 %v144
    %4124 = vmatprep.subr.mxu0 %v147
    %4125 = vmatpush1.msra.mxu0 %v146
    %4126 = vmatprep.subr.mxu0 %v149
    %4127 = vmatpush1.msra.mxu0 %v148
    %4128 = vmatprep.subr.mxu0 %v151
    %4129 = vmatpush1.msra.mxu0 %v150
    %4130 = vmatprep.subr.mxu0 %v153
    %4131 = vmatpush1.msra.mxu0 %v152
    %4132 = vmatprep.subr.mxu0 %v155
    %4133 = vmatpush1.msra.mxu0 %v154
    %4134 = vmatprep.subr.mxu0 %v157
    %4135 = vmatpush1.msra.mxu0 %v156
    %4136 = vmatprep.subr.mxu0 %v159
    %4137 = vmatpush1.msra.mxu0 %v158
    %4138 = vmatprep.subr.mxu0 %v161
    %4139 = vmatpush1.msra.mxu0 %v160
    %4140 = vmatprep.subr.mxu0 %v163
    %4141 = vmatpush1.msra.mxu0 %v162
    %4142 = vmatprep.subr.mxu0 %v165
    %4143 = vmatpush1.msra.mxu0 %v164
    %4144 = vmatprep.subr.mxu0 0.0
    %4145 = vmatpush1.msra.mxu0 0.0
    %4146 = vmatprep.subr.mxu0 0.0
    %4147 = vmatpush1.msra.mxu0 0.0
    %4148 = vmatprep.subr.mxu0 0.0
    %4149 = vmatpush1.msra.mxu0 0.0
    %4150 = vmatprep.subr.mxu0 0.0
    %4151 = vmatpush1.msra.mxu0 0.0
    %4152 = vmatprep.subr.mxu0 0.0
    %4153 = vmatpush1.msra.mxu0 0.0
    %4154 = vmatprep.subr.mxu0 0.0
    %4155 = vmatpush1.msra.mxu0 0.0
    %4156 = vmatprep.subr.mxu0 0.0
    %4157 = vmatpush1.msra.mxu0 0.0
    %4158 = vmatprep.subr.mxu0 0.0
    %4159 = vmatpush1.msra.mxu0 0.0
    %4160 = vmatprep.subr.mxu0 0.0
    %4161 = vmatpush1.msra.mxu0 0.0
    %4162 = vmatprep.subr.mxu0 0.0
    %4163 = vmatpush1.msra.mxu0 0.0
    %4164 = vmatprep.subr.mxu0 0.0
    %4165 = vmatpush1.msra.mxu0 0.0
    %4166 = vmatprep.subr.mxu0 0.0
    %4167 = vmatpush1.msra.mxu0 0.0
    %4168 = vmatprep.subr.mxu0 0.0
    %4169 = vmatpush1.msra.mxu0 0.0
    %4170 = vmatprep.subr.mxu0 0.0
    %4171 = vmatpush1.msra.mxu0 0.0
    %4172 = vmatprep.subr.mxu0 0.0
    %4173 = vmatpush1.msra.mxu0 0.0
    %4174 = vmatprep.subr.mxu0 0.0
    %4175 = vmatpush1.msra.mxu0 0.0
    %4176 = vmatprep.mubr.f32.mxu0 0.0
    %4177 = vmatmul.mubr.f32.gmra.mrb[0].mxu0 %v4109
    %v4178 = vpop.f32.mrb[0].mxu0
    %v4179 = vadd.f32 0.0, %v4178
    %v4180 = vpop.f32.mrb[0].mxu0
    %v4181 = vadd.f32 0.0, %v4180
    %4182 = vdwg.mxu0
    %v4183 = vadd.f32 %v4179, %v283
    %v4184 = vmul.f32 %v4183, 0.5
    %v4185 = vtanh.pop %v4184
    %v4186 = vmul.f32 %v4185, 0.5
    %v4187 = vadd.f32 %v4186, 0.5
    %v4188 = vsub.f32 %v4109, %v277
    %v4189 = vsub.f32 %v4111, %v4187
    %4190 = vmatprep.subr.mxu0 0.0
    %4191 = vmatpush1.msra.mxu0 %v182
    %4192 = vmatprep.subr.mxu0 0.0
    %4193 = vmatpush1.msra.mxu0 %v183
    %4194 = vmatprep.subr.mxu0 0.0
    %4195 = vmatpush1.msra.mxu0 %v184
    %4196 = vmatprep.subr.mxu0 0.0
    %4197 = vmatpush1.msra.mxu0 %v185
    %4198 = vmatprep.subr.mxu0 0.0
    %4199 = vmatpush1.msra.mxu0 %v186
    %4200 = vmatprep.subr.mxu0 0.0
    %4201 = vmatpush1.msra.mxu0 %v187
    %4202 = vmatprep.subr.mxu0 0.0
    %4203 = vmatpush1.msra.mxu0 %v188
    %4204 = vmatprep.subr.mxu0 0.0
    %4205 = vmatpush1.msra.mxu0 %v189
    %4206 = vmatprep.subr.mxu0 0.0
    %4207 = vmatpush1.msra.mxu0 %v190
    %4208 = vmatprep.subr.mxu0 0.0
    %4209 = vmatpush1.msra.mxu0 %v191
    %4210 = vmatprep.subr.mxu0 0.0
    %4211 = vmatpush1.msra.mxu0 %v192
    %4212 = vmatprep.subr.mxu0 0.0
    %4213 = vmatpush1.msra.mxu0 %v193
    %4214 = vmatprep.subr.mxu0 0.0
    %4215 = vmatpush1.msra.mxu0 %v194
    %4216 = vmatprep.subr.mxu0 0.0
    %4217 = vmatpush1.msra.mxu0 %v195
    %4218 = vmatprep.subr.mxu0 0.0
    %4219 = vmatpush1.msra.mxu0 %v196
    %4220 = vmatprep.subr.mxu0 0.0
    %4221 = vmatpush1.msra.mxu0 %v197
    %4222 = vmatprep.subr.mxu0 0.0
    %4223 = vmatpush1.msra.mxu0 0.0
    %4224 = vmatprep.subr.mxu0 0.0
    %4225 = vmatpush1.msra.mxu0 0.0
    %4226 = vmatprep.subr.mxu0 0.0
    %4227 = vmatpush1.msra.mxu0 0.0
    %4228 = vmatprep.subr.mxu0 0.0
    %4229 = vmatpush1.msra.mxu0 0.0
    %4230 = vmatprep.subr.mxu0 0.0
    %4231 = vmatpush1.msra.mxu0 0.0
    %4232 = vmatprep.subr.mxu0 0.0
    %4233 = vmatpush1.msra.mxu0 0.0
    %4234 = vmatprep.subr.mxu0 0.0
    %4235 = vmatpush1.msra.mxu0 0.0
    %4236 = vmatprep.subr.mxu0 0.0
    %4237 = vmatpush1.msra.mxu0 0.0
    %4238 = vmatprep.subr.mxu0 0.0
    %4239 = vmatpush1.msra.mxu0 0.0
    %4240 = vmatprep.subr.mxu0 0.0
    %4241 = vmatpush1.msra.mxu0 0.0
    %4242 = vmatprep.subr.mxu0 0.0
    %4243 = vmatpush1.msra.mxu0 0.0
    %4244 = vmatprep.subr.mxu0 0.0
    %4245 = vmatpush1.msra.mxu0 0.0
    %4246 = vmatprep.subr.mxu0 0.0
    %4247 = vmatpush1.msra.mxu0 0.0
    %4248 = vmatprep.subr.mxu0 0.0
    %4249 = vmatpush1.msra.mxu0 0.0
    %4250 = vmatprep.subr.mxu0 0.0
    %4251 = vmatpush1.msra.mxu0 0.0
    %4252 = vmatprep.subr.mxu0 0.0
    %4253 = vmatpush1.msra.mxu0 0.0
    %4254 = vmatprep.mubr.f32.mxu0 0.0
    %4255 = vmatmul.mubr.f32.gmra.mrb[0].mxu0 %v4111
    %v4256 = vpop.f32.mrb[0].mxu0
    %v4257 = vadd.f32 0.0, %v4256
    %v4258 = vpop.f32.mrb[0].mxu0
    %4259 = vdwg.mxu0
    %v4260 = vadd.f32 %v4189, %v4257
    %4261 = vmatprep.subr.mxu0 0.0
    %4262 = vmatpush1.msra.mxu0 %v166
    %4263 = vmatprep.subr.mxu0 0.0
    %4264 = vmatpush1.msra.mxu0 %v167
    %4265 = vmatprep.subr.mxu0 0.0
    %4266 = vmatpush1.msra.mxu0 %v168
    %4267 = vmatprep.subr.mxu0 0.0
    %4268 = vmatpush1.msra.mxu0 %v169
    %4269 = vmatprep.subr.mxu0 0.0
    %4270 = vmatpush1.msra.mxu0 %v170
    %4271 = vmatprep.subr.mxu0 0.0
    %4272 = vmatpush1.msra.mxu0 %v171
    %4273 = vmatprep.subr.mxu0 0.0
    %4274 = vmatpush1.msra.mxu0 %v172
    %4275 = vmatprep.subr.mxu0 0.0
    %4276 = vmatpush1.msra.mxu0 %v173
    %4277 = vmatprep.subr.mxu0 0.0
    %4278 = vmatpush1.msra.mxu0 %v174
    %4279 = vmatprep.subr.mxu0 0.0
    %4280 = vmatpush1.msra.mxu0 %v175
    %4281 = vmatprep.subr.mxu0 0.0
    %4282 = vmatpush1.msra.mxu0 %v176
    %4283 = vmatprep.subr.mxu0 0.0
    %4284 = vmatpush1.msra.mxu0 %v177
    %4285 = vmatprep.subr.mxu0 0.0
    %4286 = vmatpush1.msra.mxu0 %v178
    %4287 = vmatprep.subr.mxu0 0.0
    %4288 = vmatpush1.msra.mxu0 %v179
    %4289 = vmatprep.subr.mxu0 0.0
    %4290 = vmatpush1.msra.mxu0 %v180
    %4291 = vmatprep.subr.mxu0 0.0
    %4292 = vmatpush1.msra.mxu0 %v181
    %4293 = vmatprep.subr.mxu0 0.0
    %4294 = vmatpush1.msra.mxu0 0.0
    %4295 = vmatprep.subr.mxu0 0.0
    %4296 = vmatpush1.msra.mxu0 0.0
    %4297 = vmatprep.subr.mxu0 0.0
    %4298 = vmatpush1.msra.mxu0 0.0
    %4299 = vmatprep.subr.mxu0 0.0
    %4300 = vmatpush1.msra.mxu0 0.0
    %4301 = vmatprep.subr.mxu0 0.0
    %4302 = vmatpush1.msra.mxu0 0.0
    %4303 = vmatprep.subr.mxu0 0.0
    %4304 = vmatpush1.msra.mxu0 0.0
    %4305 = vmatprep.subr.mxu0 0.0
    %4306 = vmatpush1.msra.mxu0 0.0
    %4307 = vmatprep.subr.mxu0 0.0
    %4308 = vmatpush1.msra.mxu0 0.0
    %4309 = vmatprep.subr.mxu0 0.0
    %4310 = vmatpush1.msra.mxu0 0.0
    %4311 = vmatprep.subr.mxu0 0.0
    %4312 = vmatpush1.msra.mxu0 0.0
    %4313 = vmatprep.subr.mxu0 0.0
    %4314 = vmatpush1.msra.mxu0 0.0
    %4315 = vmatprep.subr.mxu0 0.0
    %4316 = vmatpush1.msra.mxu0 0.0
    %4317 = vmatprep.subr.mxu0 0.0
    %4318 = vmatpush1.msra.mxu0 0.0
    %4319 = vmatprep.subr.mxu0 0.0
    %4320 = vmatpush1.msra.mxu0 0.0
    %4321 = vmatprep.subr.mxu0 0.0
    %4322 = vmatpush1.msra.mxu0 0.0
    %4323 = vmatprep.subr.mxu0 0.0
    %4324 = vmatpush1.msra.mxu0 0.0
    %4325 = vmatprep.mubr.f32.mxu0 0.0
    %4326 = vmatmul.mubr.f32.gmra.mrb[0].mxu0 %v4260
    %v4327 = vpop.f32.mrb[0].mxu0
    %v4328 = vadd.f32 0.0, %v4327
    %v4329 = vpop.f32.mrb[0].mxu0
    %4330 = vdwg.mxu0
    %v4331 = vadd.f32 %v4188, %v4328
    %v4332 = vadd.f32 %v4331, %v4181
    %v4333 = vmul.f32 %v4332, 0.1
    %v4334 = vsub.f32 %v4109, %v4333
    %v4335 = vmul.f32 %v4260, 0.1
    %v4336 = vsub.f32 %v4111, %v4335
    %4337 = vmatprep.subr.mxu0 %v135
    %4338 = vmatpush1.msra.mxu0 %v134
    %4339 = vmatprep.subr.mxu0 %v137
    %4340 = vmatpush1.msra.mxu0 %v136
    %4341 = vmatprep.subr.mxu0 %v139
    %4342 = vmatpush1.msra.mxu0 %v138
    %4343 = vmatprep.subr.mxu0 %v141
    %4344 = vmatpush1.msra.mxu0 %v140
    %4345 = vmatprep.subr.mxu0 %v143
    %4346 = vmatpush1.msra.mxu0 %v142
    %4347 = vmatprep.subr.mxu0 %v145
    %4348 = vmatpush1.msra.mxu0 %v144
    %4349 = vmatprep.subr.mxu0 %v147
    %4350 = vmatpush1.msra.mxu0 %v146
    %4351 = vmatprep.subr.mxu0 %v149
    %4352 = vmatpush1.msra.mxu0 %v148
    %4353 = vmatprep.subr.mxu0 %v151
    %4354 = vmatpush1.msra.mxu0 %v150
    %4355 = vmatprep.subr.mxu0 %v153
    %4356 = vmatpush1.msra.mxu0 %v152
    %4357 = vmatprep.subr.mxu0 %v155
    %4358 = vmatpush1.msra.mxu0 %v154
    %4359 = vmatprep.subr.mxu0 %v157
    %4360 = vmatpush1.msra.mxu0 %v156
    %4361 = vmatprep.subr.mxu0 %v159
    %4362 = vmatpush1.msra.mxu0 %v158
    %4363 = vmatprep.subr.mxu0 %v161
    %4364 = vmatpush1.msra.mxu0 %v160
    %4365 = vmatprep.subr.mxu0 %v163
    %4366 = vmatpush1.msra.mxu0 %v162
    %4367 = vmatprep.subr.mxu0 %v165
    %4368 = vmatpush1.msra.mxu0 %v164
    %4369 = vmatprep.subr.mxu0 0.0
    %4370 = vmatpush1.msra.mxu0 0.0
    %4371 = vmatprep.subr.mxu0 0.0
    %4372 = vmatpush1.msra.mxu0 0.0
    %4373 = vmatprep.subr.mxu0 0.0
    %4374 = vmatpush1.msra.mxu0 0.0
    %4375 = vmatprep.subr.mxu0 0.0
    %4376 = vmatpush1.msra.mxu0 0.0
    %4377 = vmatprep.subr.mxu0 0.0
    %4378 = vmatpush1.msra.mxu0 0.0
    %4379 = vmatprep.subr.mxu0 0.0
    %4380 = vmatpush1.msra.mxu0 0.0
    %4381 = vmatprep.subr.mxu0 0.0
    %4382 = vmatpush1.msra.mxu0 0.0
    %4383 = vmatprep.subr.mxu0 0.0
    %4384 = vmatpush1.msra.mxu0 0.0
    %4385 = vmatprep.subr.mxu0 0.0
    %4386 = vmatpush1.msra.mxu0 0.0
    %4387 = vmatprep.subr.mxu0 0.0
    %4388 = vmatpush1.msra.mxu0 0.0
    %4389 = vmatprep.subr.mxu0 0.0
    %4390 = vmatpush1.msra.mxu0 0.0
    %4391 = vmatprep.subr.mxu0 0.0
    %4392 = vmatpush1.msra.mxu0 0.0
    %4393 = vmatprep.subr.mxu0 0.0
    %4394 = vmatpush1.msra.mxu0 0.0
    %4395 = vmatprep.subr.mxu0 0.0
    %4396 = vmatpush1.msra.mxu0 0.0
    %4397 = vmatprep.subr.mxu0 0.0
    %4398 = vmatpush1.msra.mxu0 0.0
    %4399 = vmatprep.subr.mxu0 0.0
    %4400 = vmatpush1.msra.mxu0 0.0
    %4401 = vmatprep.mubr.f32.mxu0 0.0
    %4402 = vmatmul.mubr.f32.gmra.mrb[0].mxu0 %v4334
    %v4403 = vpop.f32.mrb[0].mxu0
    %v4404 = vadd.f32 0.0, %v4403
    %v4405 = vpop.f32.mrb[0].mxu0
    %v4406 = vadd.f32 0.0, %v4405
    %4407 = vdwg.mxu0
    %v4408 = vadd.f32 %v4404, %v283
    %v4409 = vmul.f32 %v4408, 0.5
    %v4410 = vtanh.pop %v4409
    %v4411 = vmul.f32 %v4410, 0.5
    %v4412 = vadd.f32 %v4411, 0.5
    %v4413 = vsub.f32 %v4334, %v277
    %v4414 = vsub.f32 %v4336, %v4412
    %4415 = vmatprep.subr.mxu0 0.0
    %4416 = vmatpush1.msra.mxu0 %v182
    %4417 = vmatprep.subr.mxu0 0.0
    %4418 = vmatpush1.msra.mxu0 %v183
    %4419 = vmatprep.subr.mxu0 0.0
    %4420 = vmatpush1.msra.mxu0 %v184
    %4421 = vmatprep.subr.mxu0 0.0
    %4422 = vmatpush1.msra.mxu0 %v185
    %4423 = vmatprep.subr.mxu0 0.0
    %4424 = vmatpush1.msra.mxu0 %v186
    %4425 = vmatprep.subr.mxu0 0.0
    %4426 = vmatpush1.msra.mxu0 %v187
    %4427 = vmatprep.subr.mxu0 0.0
    %4428 = vmatpush1.msra.mxu0 %v188
    %4429 = vmatprep.subr.mxu0 0.0
    %4430 = vmatpush1.msra.mxu0 %v189
    %4431 = vmatprep.subr.mxu0 0.0
    %4432 = vmatpush1.msra.mxu0 %v190
    %4433 = vmatprep.subr.mxu0 0.0
    %4434 = vmatpush1.msra.mxu0 %v191
    %4435 = vmatprep.subr.mxu0 0.0
    %4436 = vmatpush1.msra.mxu0 %v192
    %4437 = vmatprep.subr.mxu0 0.0
    %4438 = vmatpush1.msra.mxu0 %v193
    %4439 = vmatprep.subr.mxu0 0.0
    %4440 = vmatpush1.msra.mxu0 %v194
    %4441 = vmatprep.subr.mxu0 0.0
    %4442 = vmatpush1.msra.mxu0 %v195
    %4443 = vmatprep.subr.mxu0 0.0
    %4444 = vmatpush1.msra.mxu0 %v196
    %4445 = vmatprep.subr.mxu0 0.0
    %4446 = vmatpush1.msra.mxu0 %v197
    %4447 = vmatprep.subr.mxu0 0.0
    %4448 = vmatpush1.msra.mxu0 0.0
    %4449 = vmatprep.subr.mxu0 0.0
    %4450 = vmatpush1.msra.mxu0 0.0
    %4451 = vmatprep.subr.mxu0 0.0
    %4452 = vmatpush1.msra.mxu0 0.0
    %4453 = vmatprep.subr.mxu0 0.0
    %4454 = vmatpush1.msra.mxu0 0.0
    %4455 = vmatprep.subr.mxu0 0.0
    %4456 = vmatpush1.msra.mxu0 0.0
    %4457 = vmatprep.subr.mxu0 0.0
    %4458 = vmatpush1.msra.mxu0 0.0
    %4459 = vmatprep.subr.mxu0 0.0
    %4460 = vmatpush1.msra.mxu0 0.0
    %4461 = vmatprep.subr.mxu0 0.0
    %4462 = vmatpush1.msra.mxu0 0.0
    %4463 = vmatprep.subr.mxu0 0.0
    %4464 = vmatpush1.msra.mxu0 0.0
    %4465 = vmatprep.subr.mxu0 0.0
    %4466 = vmatpush1.msra.mxu0 0.0
    %4467 = vmatprep.subr.mxu0 0.0
    %4468 = vmatpush1.msra.mxu0 0.0
    %4469 = vmatprep.subr.mxu0 0.0
    %4470 = vmatpush1.msra.mxu0 0.0
    %4471 = vmatprep.subr.mxu0 0.0
    %4472 = vmatpush1.msra.mxu0 0.0
    %4473 = vmatprep.subr.mxu0 0.0
    %4474 = vmatpush1.msra.mxu0 0.0
    %4475 = vmatprep.subr.mxu0 0.0
    %4476 = vmatpush1.msra.mxu0 0.0
    %4477 = vmatprep.subr.mxu0 0.0
    %4478 = vmatpush1.msra.mxu0 0.0
    %4479 = vmatprep.mubr.f32.mxu0 0.0
    %4480 = vmatmul.mubr.f32.gmra.mrb[0].mxu0 %v4336
    %v4481 = vpop.f32.mrb[0].mxu0
    %v4482 = vadd.f32 0.0, %v4481
    %v4483 = vpop.f32.mrb[0].mxu0
    %4484 = vdwg.mxu0
    %v4485 = vadd.f32 %v4414, %v4482
    %4486 = vmatprep.subr.mxu0 0.0
    %4487 = vmatpush1.msra.mxu0 %v166
    %4488 = vmatprep.subr.mxu0 0.0
    %4489 = vmatpush1.msra.mxu0 %v167
    %4490 = vmatprep.subr.mxu0 0.0
    %4491 = vmatpush1.msra.mxu0 %v168
    %4492 = vmatprep.subr.mxu0 0.0
    %4493 = vmatpush1.msra.mxu0 %v169
    %4494 = vmatprep.subr.mxu0 0.0
    %4495 = vmatpush1.msra.mxu0 %v170
    %4496 = vmatprep.subr.mxu0 0.0
    %4497 = vmatpush1.msra.mxu0 %v171
    %4498 = vmatprep.subr.mxu0 0.0
    %4499 = vmatpush1.msra.mxu0 %v172
    %4500 = vmatprep.subr.mxu0 0.0
    %4501 = vmatpush1.msra.mxu0 %v173
    %4502 = vmatprep.subr.mxu0 0.0
    %4503 = vmatpush1.msra.mxu0 %v174
    %4504 = vmatprep.subr.mxu0 0.0
    %4505 = vmatpush1.msra.mxu0 %v175
    %4506 = vmatprep.subr.mxu0 0.0
    %4507 = vmatpush1.msra.mxu0 %v176
    %4508 = vmatprep.subr.mxu0 0.0
    %4509 = vmatpush1.msra.mxu0 %v177
    %4510 = vmatprep.subr.mxu0 0.0
    %4511 = vmatpush1.msra.mxu0 %v178
    %4512 = vmatprep.subr.mxu0 0.0
    %4513 = vmatpush1.msra.mxu0 %v179
    %4514 = vmatprep.subr.mxu0 0.0
    %4515 = vmatpush1.msra.mxu0 %v180
    %4516 = vmatprep.subr.mxu0 0.0
    %4517 = vmatpush1.msra.mxu0 %v181
    %4518 = vmatprep.subr.mxu0 0.0
    %4519 = vmatpush1.msra.mxu0 0.0
    %4520 = vmatprep.subr.mxu0 0.0
    %4521 = vmatpush1.msra.mxu0 0.0
    %4522 = vmatprep.subr.mxu0 0.0
    %4523 = vmatpush1.msra.mxu0 0.0
    %4524 = vmatprep.subr.mxu0 0.0
    %4525 = vmatpush1.msra.mxu0 0.0
    %4526 = vmatprep.subr.mxu0 0.0
    %4527 = vmatpush1.msra.mxu0 0.0
    %4528 = vmatprep.subr.mxu0 0.0
    %4529 = vmatpush1.msra.mxu0 0.0
    %4530 = vmatprep.subr.mxu0 0.0
    %4531 = vmatpush1.msra.mxu0 0.0
    %4532 = vmatprep.subr.mxu0 0.0
    %4533 = vmatpush1.msra.mxu0 0.0
    %4534 = vmatprep.subr.mxu0 0.0
    %4535 = vmatpush1.msra.mxu0 0.0
    %4536 = vmatprep.subr.mxu0 0.0
    %4537 = vmatpush1.msra.mxu0 0.0
    %4538 = vmatprep.subr.mxu0 0.0
    %4539 = vmatpush1.msra.mxu0 0.0
    %4540 = vmatprep.subr.mxu0 0.0
    %4541 = vmatpush1.msra.mxu0 0.0
    %4542 = vmatprep.subr.mxu0 0.0
    %4543 = vmatpush1.msra.mxu0 0.0
    %4544 = vmatprep.subr.mxu0 0.0
    %4545 = vmatpush1.msra.mxu0 0.0
    %4546 = vmatprep.subr.mxu0 0.0
    %4547 = vmatpush1.msra.mxu0 0.0
    %4548 = vmatprep.subr.mxu0 0.0
    %4549 = vmatpush1.msra.mxu0 0.0
    %4550 = vmatprep.mubr.f32.mxu0 0.0
    %4551 = vmatmul.mubr.f32.gmra.mrb[0].mxu0 %v4485
    %v4552 = vpop.f32.mrb[0].mxu0
    %v4553 = vadd.f32 0.0, %v4552
    %v4554 = vpop.f32.mrb[0].mxu0
    %4555 = vdwg.mxu0
    %v4556 = vadd.f32 %v4413, %v4553
    %v4557 = vadd.f32 %v4556, %v4406
    %v4558 = vmul.f32 %v4557, 0.1
    %v4559 = vsub.f32 %v4334, %v4558
    %v4560 = vmul.f32 %v4485, 0.1
    %v4561 = vsub.f32 %v4336, %v4560
    %4562 = vmatprep.subr.mxu0 %v135
    %4563 = vmatpush1.msra.mxu0 %v134
    %4564 = vmatprep.subr.mxu0 %v137
    %4565 = vmatpush1.msra.mxu0 %v136
    %4566 = vmatprep.subr.mxu0 %v139
    %4567 = vmatpush1.msra.mxu0 %v138
    %4568 = vmatprep.subr.mxu0 %v141
    %4569 = vmatpush1.msra.mxu0 %v140
    %4570 = vmatprep.subr.mxu0 %v143
    %4571 = vmatpush1.msra.mxu0 %v142
    %4572 = vmatprep.subr.mxu0 %v145
    %4573 = vmatpush1.msra.mxu0 %v144
    %4574 = vmatprep.subr.mxu0 %v147
    %4575 = vmatpush1.msra.mxu0 %v146
    %4576 = vmatprep.subr.mxu0 %v149
    %4577 = vmatpush1.msra.mxu0 %v148
    %4578 = vmatprep.subr.mxu0 %v151
    %4579 = vmatpush1.msra.mxu0 %v150
    %4580 = vmatprep.subr.mxu0 %v153
    %4581 = vmatpush1.msra.mxu0 %v152
    %4582 = vmatprep.subr.mxu0 %v155
    %4583 = vmatpush1.msra.mxu0 %v154
    %4584 = vmatprep.subr.mxu0 %v157
    %4585 = vmatpush1.msra.mxu0 %v156
    %4586 = vmatprep.subr.mxu0 %v159
    %4587 = vmatpush1.msra.mxu0 %v158
    %4588 = vmatprep.subr.mxu0 %v161
    %4589 = vmatpush1.msra.mxu0 %v160
    %4590 = vmatprep.subr.mxu0 %v163
    %4591 = vmatpush1.msra.mxu0 %v162
    %4592 = vmatprep.subr.mxu0 %v165
    %4593 = vmatpush1.msra.mxu0 %v164
    %4594 = vmatprep.subr.mxu0 0.0
    %4595 = vmatpush1.msra.mxu0 0.0
    %4596 = vmatprep.subr.mxu0 0.0
    %4597 = vmatpush1.msra.mxu0 0.0
    %4598 = vmatprep.subr.mxu0 0.0
    %4599 = vmatpush1.msra.mxu0 0.0
    %4600 = vmatprep.subr.mxu0 0.0
    %4601 = vmatpush1.msra.mxu0 0.0
    %4602 = vmatprep.subr.mxu0 0.0
    %4603 = vmatpush1.msra.mxu0 0.0
    %4604 = vmatprep.subr.mxu0 0.0
    %4605 = vmatpush1.msra.mxu0 0.0
    %4606 = vmatprep.subr.mxu0 0.0
    %4607 = vmatpush1.msra.mxu0 0.0
    %4608 = vmatprep.subr.mxu0 0.0
    %4609 = vmatpush1.msra.mxu0 0.0
    %4610 = vmatprep.subr.mxu0 0.0
    %4611 = vmatpush1.msra.mxu0 0.0
    %4612 = vmatprep.subr.mxu0 0.0
    %4613 = vmatpush1.msra.mxu0 0.0
    %4614 = vmatprep.subr.mxu0 0.0
    %4615 = vmatpush1.msra.mxu0 0.0
    %4616 = vmatprep.subr.mxu0 0.0
    %4617 = vmatpush1.msra.mxu0 0.0
    %4618 = vmatprep.subr.mxu0 0.0
    %4619 = vmatpush1.msra.mxu0 0.0
    %4620 = vmatprep.subr.mxu0 0.0
    %4621 = vmatpush1.msra.mxu0 0.0
    %4622 = vmatprep.subr.mxu0 0.0
    %4623 = vmatpush1.msra.mxu0 0.0
    %4624 = vmatprep.subr.mxu0 0.0
    %4625 = vmatpush1.msra.mxu0 0.0
    %4626 = vmatprep.mubr.f32.mxu0 0.0
    %4627 = vmatmul.mubr.f32.gmra.mrb[0].mxu0 %v4559
    %v4628 = vpop.f32.mrb[0].mxu0
    %v4629 = vadd.f32 0.0, %v4628
    %v4630 = vpop.f32.mrb[0].mxu0
    %4631 = vdwg.mxu0
    %v4632 = vadd.f32 %v4629, %v283
    %v4633 = vmul.f32 %v4632, 0.5
    %v4634 = vtanh.pop %v4633
    %v4635 = vmul.f32 %v4634, 0.5
    %v4636 = vadd.f32 %v4635, 0.5
    %v4637 = vsub.f32 %v4561, %v4636
    %4638 = vmatprep.subr.mxu0 0.0
    %4639 = vmatpush1.msra.mxu0 %v182
    %4640 = vmatprep.subr.mxu0 0.0
    %4641 = vmatpush1.msra.mxu0 %v183
    %4642 = vmatprep.subr.mxu0 0.0
    %4643 = vmatpush1.msra.mxu0 %v184
    %4644 = vmatprep.subr.mxu0 0.0
    %4645 = vmatpush1.msra.mxu0 %v185
    %4646 = vmatprep.subr.mxu0 0.0
    %4647 = vmatpush1.msra.mxu0 %v186
    %4648 = vmatprep.subr.mxu0 0.0
    %4649 = vmatpush1.msra.mxu0 %v187
    %4650 = vmatprep.subr.mxu0 0.0
    %4651 = vmatpush1.msra.mxu0 %v188
    %4652 = vmatprep.subr.mxu0 0.0
    %4653 = vmatpush1.msra.mxu0 %v189
    %4654 = vmatprep.subr.mxu0 0.0
    %4655 = vmatpush1.msra.mxu0 %v190
    %4656 = vmatprep.subr.mxu0 0.0
    %4657 = vmatpush1.msra.mxu0 %v191
    %4658 = vmatprep.subr.mxu0 0.0
    %4659 = vmatpush1.msra.mxu0 %v192
    %4660 = vmatprep.subr.mxu0 0.0
    %4661 = vmatpush1.msra.mxu0 %v193
    %4662 = vmatprep.subr.mxu0 0.0
    %4663 = vmatpush1.msra.mxu0 %v194
    %4664 = vmatprep.subr.mxu0 0.0
    %4665 = vmatpush1.msra.mxu0 %v195
    %4666 = vmatprep.subr.mxu0 0.0
    %4667 = vmatpush1.msra.mxu0 %v196
    %4668 = vmatprep.subr.mxu0 0.0
    %4669 = vmatpush1.msra.mxu0 %v197
    %4670 = vmatprep.subr.mxu0 0.0
    %4671 = vmatpush1.msra.mxu0 0.0
    %4672 = vmatprep.subr.mxu0 0.0
    %4673 = vmatpush1.msra.mxu0 0.0
    %4674 = vmatprep.subr.mxu0 0.0
    %4675 = vmatpush1.msra.mxu0 0.0
    %4676 = vmatprep.subr.mxu0 0.0
    %4677 = vmatpush1.msra.mxu0 0.0
    %4678 = vmatprep.subr.mxu0 0.0
    %4679 = vmatpush1.msra.mxu0 0.0
    %4680 = vmatprep.subr.mxu0 0.0
    %4681 = vmatpush1.msra.mxu0 0.0
    %4682 = vmatprep.subr.mxu0 0.0
    %4683 = vmatpush1.msra.mxu0 0.0
    %4684 = vmatprep.subr.mxu0 0.0
    %4685 = vmatpush1.msra.mxu0 0.0
    %4686 = vmatprep.subr.mxu0 0.0
    %4687 = vmatpush1.msra.mxu0 0.0
    %4688 = vmatprep.subr.mxu0 0.0
    %4689 = vmatpush1.msra.mxu0 0.0
    %4690 = vmatprep.subr.mxu0 0.0
    %4691 = vmatpush1.msra.mxu0 0.0
    %4692 = vmatprep.subr.mxu0 0.0
    %4693 = vmatpush1.msra.mxu0 0.0
    %4694 = vmatprep.subr.mxu0 0.0
    %4695 = vmatpush1.msra.mxu0 0.0
    %4696 = vmatprep.subr.mxu0 0.0
    %4697 = vmatpush1.msra.mxu0 0.0
    %4698 = vmatprep.subr.mxu0 0.0
    %4699 = vmatpush1.msra.mxu0 0.0
    %4700 = vmatprep.subr.mxu0 0.0
    %4701 = vmatpush1.msra.mxu0 0.0
    %4702 = vmatprep.mubr.f32.mxu0 0.0
    %4703 = vmatmul.mubr.f32.gmra.mrb[0].mxu0 %v4561
    %v4704 = vpop.f32.mrb[0].mxu0
    %v4705 = vadd.f32 0.0, %v4704
    %v4706 = vpop.f32.mrb[0].mxu0
    %4707 = vdwg.mxu0
    %v4708 = vadd.f32 %v4637, %v4705
    %v4709 = vmul.f32 %v4708, 0.1
    %v4710 = vsub.f32 %v4561, %v4709
    %4711 = vst [vmem:[#allocation11] sm:$0xff] %v4710
    // Predicated region
    $region58: #{forward.1} parent=1 // pred_check
      _
    $region59: #{forward.1} parent=1 // pred_check_branch
      %4713 = sbr.rel (0) target = $region61
    $region60: #{forward.1} parent=1 // pred_region
      %s4715 = ssub.s32 128, 128
      %4716 = vsyncadd [#allocation4], %s4715
      %s4718 = sshll.u32 [#allocation11], 4
      %s4719 = int_to_ptr.vmem [resolvable:$true] %s4718
      %4721 = dma.vmem_to_hbm [thread:$0]  %s4719, 128, %s9, [#allocation4]
    $region61: #{forward.1} parent=1 // pred_fallthru
      _
    // Predicated region
    $region62: #{forward.1} parent=1 // pred_check
      _
    $region63: #{forward.1} parent=1 // pred_check_branch
      %4723 = sbr.rel (0) target = $region65
    $region64: #{forward.1} parent=1 // pred_region
      %4724 = dma.done [#allocation4], 128
    $region65: #{forward.1} parent=1 // pred_fallthru
      _
    %4725 = vsyncpa [#allocation3], 1
    %4726 = vsyncpa [#allocation6], 1
    %4727 = vsyncpa [#allocation9], 1
    %4728 = vsyncpa [#allocation4], 1

</llo_original>
